<compile_context>
chip_gen: v7x
topology: tpu7x:2x2x1
jax: 0.10.0
libtpu: 0.0.40
codegen_flags: <defaults>
</compile_context>

<pallas_src>
import jax
import jax.numpy as jnp
from jax import lax
from jax.experimental import pallas as pl
from jax.experimental.pallas import tpu as pltpu


# ------------------------------ in-kernel ops ------------------------------ #

def _concat_elu(x):
    """concat_elu(x) = elu([x, -x]) sharing a single exp(-|x|) per element."""
    e = jnp.exp(-jnp.abs(x)) - 1.0
    pos = jnp.where(x > 0, x, e)        # elu(x)
    neg = jnp.where(x > 0, e, -x)       # elu(-x)
    return jnp.concatenate([pos, neg], axis=-1)


def _sigmoid(v):
    # single (exact) EUP tanh instead of exp + approximate reciprocal
    return 0.5 * (jnp.tanh(0.5 * v) + 1.0)


def _conv_ce(x, w, b, kh, kw, pad_top, pad_left, pad_right):
    """conv(concat_elu(x)) for a causal 'shifted' conv as ONE big-K MXU matmul.

    x: (Bt, H, W, F) f32 pre-activation.
    w: (kh*kw*2F, cout) bf16 im2col-reshaped weight.
    b: (1, cout) f32 bias.
    concat_elu(0) == 0, so zero padding commutes with the nonlinearity.
    """
    Bt, H, W, F = x.shape
    ce = _concat_elu(x)                                   # (Bt, H, W, 2F)
    C = 2 * F
    # causal zero padding (top / left / right), matching nn.ZeroPad2d
    if pad_top:
        ce = jnp.concatenate(
            [jnp.zeros((Bt, pad_top, W, C), ce.dtype), ce], axis=1)
    if pad_left or pad_right:
        parts = []
        if pad_left:
            parts.append(jnp.zeros((Bt, H + pad_top, pad_left, C), ce.dtype))
        parts.append(ce)
        if pad_right:
            parts.append(jnp.zeros((Bt, H + pad_top, pad_right, C), ce.dtype))
        ce = jnp.concatenate(parts, axis=2)
    # im2col: one (Bt*H*W, kh*kw*2F) slab -> a single K = kh*kw*2F matmul
    taps = [ce[:, ky:ky + H, kx:kx + W, :]
            for ky in range(kh) for kx in range(kw)]
    slab = jnp.concatenate(taps, axis=-1).reshape(Bt * H * W, kh * kw * C)
    acc = jnp.dot(slab.astype(jnp.bfloat16), w,
                  preferred_element_type=jnp.float32)
    return (acc + b).reshape(Bt, H, W, -1)


def _nin_ce(a, w, b=None):
    """1x1 conv of concat_elu(a): (Bt*H*W, 2F) @ (2F, cout) in bf16, f32 acc."""
    Bt, H, W, F = a.shape
    ce = _concat_elu(a).reshape(Bt * H * W, 2 * F)
    out = jnp.dot(ce.astype(jnp.bfloat16), w,
                  preferred_element_type=jnp.float32)
    if b is not None:
        out = out + b
    return out.reshape(Bt, H, W, -1)


# ------------------------------ fused kernel ------------------------------- #

def _layer_down_kernel(u0_ref, ul0_ref, ua_ref, uls_ref,
                       wu_in, bu_in, wu_nin, bu_nin, wu_out, bu_out,
                       wl_in, bl_in, wl_nin_u, wl_nin_s, bl_nin,
                       wl_out, bl_out,
                       u_ref, ul_ref):
    step = pl.program_id(1)

    @pl.when(step == 0)
    def _init():
        # carried streams live in the VMEM-resident output blocks
        u_ref[...] = u0_ref[...]
        ul_ref[...] = ul0_ref[...]

    F = u_ref.shape[-1]
    u = u_ref[...]
    ul = ul_ref[...]

    # -------- u-stream gated_resnet: down_shifted_conv2d 2x3, pad T/L/R=1 ----
    x = _conv_ce(u, wu_in[step], bu_in[step], 2, 3, 1, 1, 1)
    x = x + _nin_ce(ua_ref[...], wu_nin[step], bu_nin[step])  # a = u_list.pop()
    y = _conv_ce(x, wu_out[step], bu_out[step], 2, 3, 1, 1, 1)
    u_new = u + y[..., :F] * _sigmoid(y[..., F:])

    # ---- ul-stream gated_resnet: down_right_shifted_conv2d 2x2, pad T/L=1 ---
    # a = cat(u_new, ul_skip) is never materialized: the 4F-row nin weight was
    # pre-split on the host into the u-half and skip-half of concat_elu.
    x = _conv_ce(ul, wl_in[step], bl_in[step], 2, 2, 1, 1, 0)
    sk = (_nin_ce(u_new, wl_nin_u[step])
          + _nin_ce(uls_ref[...], wl_nin_s[step], bl_nin[step]))
    x = x + sk
    y = _conv_ce(x, wl_out[step], bl_out[step], 2, 2, 1, 1, 0)
    ul_new = ul + y[..., :F] * _sigmoid(y[..., F:])

    u_ref[...] = u_new
    ul_ref[...] = ul_new


# ---------------------------- host-side wrapper ----------------------------- #

def pixelcnn_layer_down(u, ul, u_list, ul_list, u_params, ul_params, *, bt=None):
    """Mirrors PixelCNNLayer_down.forward (conditional=False, hs=None)."""
    B, H, W, F = u.shape
    nr = len(u_params)
    bf16 = jnp.bfloat16

    # batch blocking: largest Bt that still leaves >= 2 batch blocks (megacore)
    if bt is None:
        bt = 1
        for cand in range(max(B // 2, 1), 0, -1):
            if B % cand == 0:
                bt = cand
                break
    assert B % bt == 0

    # pop() order: step i uses element nr-1-i of each list (handled in index_map)
    u_stk = jnp.stack(list(u_list))        # (nr, B, H, W, F)
    ul_stk = jnp.stack(list(ul_list))

    # --- host-side weight restructuring: im2col reshape + bf16 + nin split ---
    def conv_w(w):                          # (kh, kw, 2F, cout) -> (kh*kw*2F, cout)
        kh, kw, cin, cout = w.shape
        return w.reshape(kh * kw * cin, cout).astype(bf16)

    u_steps, ul_steps = [], []
    for (w_in, b_in, w_nin, b_nin, w_out, b_out) in u_params:
        u_steps.append((conv_w(w_in), b_in, w_nin.astype(bf16), b_nin,
                        conv_w(w_out), b_out))
    for (w_in, b_in, w_nin, b_nin, w_out, b_out) in ul_params:
        # nin rows map to concat_elu(cat(u, skip)) = [u, skip, -u, -skip]
        w_nin_u = jnp.concatenate([w_nin[:F], w_nin[2 * F:3 * F]], 0).astype(bf16)
        w_nin_s = jnp.concatenate([w_nin[F:2 * F], w_nin[3 * F:]], 0).astype(bf16)
        ul_steps.append((conv_w(w_in), b_in, w_nin_u, w_nin_s, b_nin,
                         conv_w(w_out), b_out))
    u_w = [jnp.stack([s[j] for s in u_steps]) for j in range(6)]
    ul_w = [jnp.stack([s[j] for s in ul_steps]) for j in range(7)]

    # ------------------------------- BlockSpecs ------------------------------
    act_spec = pl.BlockSpec((bt, H, W, F), lambda b, i: (b, 0, 0, 0))
    stk_spec = pl.BlockSpec((None, bt, H, W, F),
                            lambda b, i: (nr - 1 - i, b, 0, 0, 0))
    out_spec = pl.BlockSpec((bt, H, W, F), lambda b, i: (b, 0, 0, 0))

    def resident_spec(arr):
        # full-array block + constant index_map: DMA'd once, stays in VMEM,
        # indexed by `step` inside the kernel.
        n = arr.ndim
        return pl.BlockSpec(arr.shape, lambda b, i, n=n: (0,) * n)

    grid_spec = pltpu.PrefetchScalarGridSpec(
        num_scalar_prefetch=0,
        grid=(B // bt, nr),                          # (parallel, arbitrary)
        in_specs=[act_spec, act_spec, stk_spec, stk_spec]
                 + [resident_spec(w) for w in u_w]
                 + [resident_spec(w) for w in ul_w],
        out_specs=(out_spec, out_spec),
    )
    u_out, ul_out = pl.pallas_call(
        _layer_down_kernel,
        out_shape=(jax.ShapeDtypeStruct((B, H, W, F), jnp.float32),
                   jax.ShapeDtypeStruct((B, H, W, F), jnp.float32)),
        grid_spec=grid_spec,
        compiler_params=pltpu.CompilerParams(
            dimension_semantics=("parallel", "arbitrary"),
            vmem_limit_bytes=64 * 1024 * 1024),
    )(u, ul, u_stk, ul_stk, *u_w, *ul_w)
    return u_out, ul_out


# ------------------------- deterministic parameters ------------------------- #

def _init_block_params(key, nr_filters, kh, kw, skip):
    f = nr_filters
    ks = jax.random.split(key, 6)
    s = 0.05
    w_in = s * jax.random.normal(ks[0], (kh, kw, 2 * f, f), jnp.float32)
    b_in = s * jax.random.normal(ks[1], (1, f), jnp.float32)
    w_nin = s * jax.random.normal(ks[2], (2 * skip * f, f), jnp.float32)
    b_nin = s * jax.random.normal(ks[3], (1, f), jnp.float32)
    w_out = s * jax.random.normal(ks[4], (kh, kw, 2 * f, 2 * f), jnp.float32)
    b_out = s * jax.random.normal(ks[5], (1, 2 * f), jnp.float32)
    return (w_in, b_in, w_nin, b_nin, w_out, b_out)


# ------------------------------ pure-JAX ref -------------------------------- #

def _concat_elu_ref(x):
    return jax.nn.elu(jnp.concatenate([x, -x], axis=-1))


def _shifted_conv_ref(x, w, b, pads):
    pt, plft, prt = pads
    xp = jnp.pad(x, ((0, 0), (pt, 0), (plft, prt), (0, 0)))
    y = lax.conv_general_dilated(xp, w, (1, 1), 'VALID',
                                 dimension_numbers=('NHWC', 'HWIO', 'NHWC'),
                                 precision=lax.Precision.HIGHEST)
    return y + b.reshape(1, 1, 1, -1)


def _gated_resnet_ref(og_x, a, params, pads):
    w_in, b_in, w_nin, b_nin, w_out, b_out = params
    f = og_x.shape[-1]
    x = _shifted_conv_ref(_concat_elu_ref(og_x), w_in, b_in, pads)
    x = x + jnp.einsum('bhwc,cd->bhwd', _concat_elu_ref(a), w_nin,
                       precision=lax.Precision.HIGHEST) + b_nin.reshape(1, 1, 1, -1)
    x = _shifted_conv_ref(_concat_elu_ref(x), w_out, b_out, pads)
    ag, bg = x[..., :f], x[..., f:]
    return og_x + ag * jax.nn.sigmoid(bg)


def pixelcnn_layer_down_ref(u, ul, u_list, ul_list, u_params, ul_params):
    u_list = list(u_list)
    ul_list = list(ul_list)
    for i in range(len(u_params)):
        u = _gated_resnet_ref(u, u_list.pop(), u_params[i], (1, 1, 1))
        a = jnp.concatenate([u, ul_list.pop()], axis=-1)
        ul = _gated_resnet_ref(ul, a, ul_params[i], (1, 1, 0))
    return u, ul


# ----------------------------------- main ------------------------------------ #

if __name__ == "__main__":
    nr_resnet = 2
    nr_filters = 32
    B, H, W = 4, 8, 8

    key = jax.random.PRNGKey(0)
    k_u, k_ul, k_up, k_ulp, k_lists = jax.random.split(key, 5)

    u = 0.1 * jax.random.normal(k_u, (B, H, W, nr_filters), jnp.float32)
    ul = 0.1 * jax.random.normal(k_ul, (B, H, W, nr_filters), jnp.float32)
    u_list = [0.1 * jax.random.normal(jax.random.fold_in(k_lists, i),
                                      (B, H, W, nr_filters), jnp.float32)
              for i in range(nr_resnet)]
    ul_list = [0.1 * jax.random.normal(jax.random.fold_in(k_lists, 100 + i),
                                       (B, H, W, nr_filters), jnp.float32)
               for i in range(nr_resnet)]

    u_params = [_init_block_params(jax.random.fold_in(k_up, i),
                                   nr_filters, 2, 3, skip=1)
                for i in range(nr_resnet)]
    ul_params = [_init_block_params(jax.random.fold_in(k_ulp, i),
                                    nr_filters, 2, 2, skip=2)
                 for i in range(nr_resnet)]

    u_out, ul_out = pixelcnn_layer_down(u, ul, u_list, ul_list,
                                        u_params, ul_params)
    jax.block_until_ready((u_out, ul_out))

    u_ref, ul_ref = pixelcnn_layer_down_ref(u, ul, u_list, ul_list,
                                            u_params, ul_params)
    assert u_out.shape == (B, H, W, nr_filters)
    assert ul_out.shape == (B, H, W, nr_filters)
    assert jnp.allclose(u_out, u_ref, atol=2e-2, rtol=2e-2)
    assert jnp.allclose(ul_out, ul_ref, atol=2e-2, rtol=2e-2)
    print("KERNEL_OK")
</pallas_src>

<mosaic_0001>
module attributes {stable_mosaic.version = 11 : i64} {
  func.func @_layer_down_kernel(%arg0: i32, %arg1: i32, %arg2: memref<2x8x8x32xf32, #tpu.memory_space<vmem>>, %arg3: memref<2x8x8x32xf32, #tpu.memory_space<vmem>>, %arg4: memref<1x2x8x8x32xf32, #tpu.memory_space<vmem>>, %arg5: memref<1x2x8x8x32xf32, #tpu.memory_space<vmem>>, %arg6: memref<2x384x32xbf16, #tpu.memory_space<vmem>>, %arg7: memref<2x1x32xf32, #tpu.memory_space<vmem>>, %arg8: memref<2x64x32xbf16, #tpu.memory_space<vmem>>, %arg9: memref<2x1x32xf32, #tpu.memory_space<vmem>>, %arg10: memref<2x384x64xbf16, #tpu.memory_space<vmem>>, %arg11: memref<2x1x64xf32, #tpu.memory_space<vmem>>, %arg12: memref<2x256x32xbf16, #tpu.memory_space<vmem>>, %arg13: memref<2x1x32xf32, #tpu.memory_space<vmem>>, %arg14: memref<2x64x32xbf16, #tpu.memory_space<vmem>>, %arg15: memref<2x64x32xbf16, #tpu.memory_space<vmem>>, %arg16: memref<2x1x32xf32, #tpu.memory_space<vmem>>, %arg17: memref<2x256x64xbf16, #tpu.memory_space<vmem>>, %arg18: memref<2x1x64xf32, #tpu.memory_space<vmem>>, %arg19: memref<2x8x8x32xf32, #tpu.memory_space<vmem>>, %arg20: memref<2x8x8x32xf32, #tpu.memory_space<vmem>>) attributes {dimension_semantics = [#tpu.dimension_semantics<parallel>, #tpu.dimension_semantics<arbitrary>], iteration_bounds = array<i64: 2, 2>, scalar_prefetch = 0 : i64, scratch_operands = 0 : i64, tpu.core_type = #tpu.core_type<tc>, window_params = [{transform_indices = @transform_0, window_bounds = array<i64: 2, 8, 8, 32>}, {transform_indices = @transform_1, window_bounds = array<i64: 2, 8, 8, 32>}, {transform_indices = @transform_2, window_bounds = array<i64: 1, 2, 8, 8, 32>}, {transform_indices = @transform_3, window_bounds = array<i64: 1, 2, 8, 8, 32>}, {pipeline_mode = #tpu.pipeline_mode<synchronous>, transform_indices = @transform_4, window_bounds = array<i64: 2, 384, 32>}, {pipeline_mode = #tpu.pipeline_mode<synchronous>, transform_indices = @transform_5, window_bounds = array<i64: 2, 1, 32>}, {pipeline_mode = #tpu.pipeline_mode<synchronous>, transform_indices = @transform_6, window_bounds = array<i64: 2, 64, 32>}, {pipeline_mode = #tpu.pipeline_mode<synchronous>, transform_indices = @transform_7, window_bounds = array<i64: 2, 1, 32>}, {pipeline_mode = #tpu.pipeline_mode<synchronous>, transform_indices = @transform_8, window_bounds = array<i64: 2, 384, 64>}, {pipeline_mode = #tpu.pipeline_mode<synchronous>, transform_indices = @transform_9, window_bounds = array<i64: 2, 1, 64>}, {pipeline_mode = #tpu.pipeline_mode<synchronous>, transform_indices = @transform_10, window_bounds = array<i64: 2, 256, 32>}, {pipeline_mode = #tpu.pipeline_mode<synchronous>, transform_indices = @transform_11, window_bounds = array<i64: 2, 1, 32>}, {pipeline_mode = #tpu.pipeline_mode<synchronous>, transform_indices = @transform_12, window_bounds = array<i64: 2, 64, 32>}, {pipeline_mode = #tpu.pipeline_mode<synchronous>, transform_indices = @transform_13, window_bounds = array<i64: 2, 64, 32>}, {pipeline_mode = #tpu.pipeline_mode<synchronous>, transform_indices = @transform_14, window_bounds = array<i64: 2, 1, 32>}, {pipeline_mode = #tpu.pipeline_mode<synchronous>, transform_indices = @transform_15, window_bounds = array<i64: 2, 256, 64>}, {pipeline_mode = #tpu.pipeline_mode<synchronous>, transform_indices = @transform_16, window_bounds = array<i64: 2, 1, 64>}, {transform_indices = @transform_17, window_bounds = array<i64: 2, 8, 8, 32>}, {transform_indices = @transform_18, window_bounds = array<i64: 2, 8, 8, 32>}]} {
    %c0_i32 = arith.constant 0 : i32
    %0 = arith.cmpi eq, %arg1, %c0_i32 : i32
    %1 = arith.extui %0 : i1 to i32
    %c0_i32_0 = arith.constant 0 : i32
    %2 = arith.cmpi ne, %1, %c0_i32_0 : i32
    scf.if %2 {
      %c0_109 = arith.constant 0 : index
      %c0_110 = arith.constant 0 : index
      %c0_111 = arith.constant 0 : index
      %c0_112 = arith.constant 0 : index
      %262 = vector.load %arg2[%c0_109, %c0_110, %c0_111, %c0_112] : memref<2x8x8x32xf32, #tpu.memory_space<vmem>>, vector<2x8x8x32xf32>
      %c0_113 = arith.constant 0 : index
      %c0_114 = arith.constant 0 : index
      %c0_115 = arith.constant 0 : index
      %c0_116 = arith.constant 0 : index
      %263 = vector.load %arg19[%c0_113, %c0_114, %c0_115, %c0_116] : memref<2x8x8x32xf32, #tpu.memory_space<vmem>>, vector<2x8x8x32xf32>
      tpu.vector_store %arg19[%c0_113, %c0_114, %c0_115, %c0_116], %262 {strides = array<i32>} : memref<2x8x8x32xf32, #tpu.memory_space<vmem>>, vector<2x8x8x32xf32>,
      %c0_117 = arith.constant 0 : index
      %c0_118 = arith.constant 0 : index
      %c0_119 = arith.constant 0 : index
      %c0_120 = arith.constant 0 : index
      %264 = vector.load %arg3[%c0_117, %c0_118, %c0_119, %c0_120] : memref<2x8x8x32xf32, #tpu.memory_space<vmem>>, vector<2x8x8x32xf32>
      %c0_121 = arith.constant 0 : index
      %c0_122 = arith.constant 0 : index
      %c0_123 = arith.constant 0 : index
      %c0_124 = arith.constant 0 : index
      %265 = vector.load %arg20[%c0_121, %c0_122, %c0_123, %c0_124] : memref<2x8x8x32xf32, #tpu.memory_space<vmem>>, vector<2x8x8x32xf32>
      tpu.vector_store %arg20[%c0_121, %c0_122, %c0_123, %c0_124], %264 {strides = array<i32>} : memref<2x8x8x32xf32, #tpu.memory_space<vmem>>, vector<2x8x8x32xf32>,
    } else {
    }
    %c0 = arith.constant 0 : index
    %c0_1 = arith.constant 0 : index
    %c0_2 = arith.constant 0 : index
    %c0_3 = arith.constant 0 : index
    %3 = vector.load %arg19[%c0, %c0_1, %c0_2, %c0_3] : memref<2x8x8x32xf32, #tpu.memory_space<vmem>>, vector<2x8x8x32xf32>
    %c0_4 = arith.constant 0 : index
    %c0_5 = arith.constant 0 : index
    %c0_6 = arith.constant 0 : index
    %c0_7 = arith.constant 0 : index
    %4 = vector.load %arg20[%c0_4, %c0_5, %c0_6, %c0_7] : memref<2x8x8x32xf32, #tpu.memory_space<vmem>>, vector<2x8x8x32xf32>
    %5 = arith.index_cast %arg1 : i32 to index
    %c0_8 = arith.constant 0 : index
    %c0_9 = arith.constant 0 : index
    %6 = vector.load %arg6[%5, %c0_8, %c0_9] : memref<2x384x32xbf16, #tpu.memory_space<vmem>>, vector<1x384x32xbf16>
    %7 = vector.shape_cast %6 : vector<1x384x32xbf16> to vector<384x32xbf16>
    %8 = arith.index_cast %arg1 : i32 to index
    %c0_10 = arith.constant 0 : index
    %c0_11 = arith.constant 0 : index
    %9 = vector.load %arg7[%8, %c0_10, %c0_11] : memref<2x1x32xf32, #tpu.memory_space<vmem>>, vector<1x1x32xf32>
    %10 = vector.shape_cast %9 : vector<1x1x32xf32> to vector<1x32xf32>
    %11 = math.absf %3 : vector<2x8x8x32xf32>
    %cst = arith.constant 0.000000e+00 : f32
    %12 = vector.broadcast %cst : f32 to vector<2x8x8x32xf32>
    %13 = arith.subf %12, %11 : vector<2x8x8x32xf32>
    %14 = math.exp %13 : vector<2x8x8x32xf32>
    %cst_12 = arith.constant 1.000000e+00 : f32
    %15 = vector.broadcast %cst_12 : f32 to vector<2x8x8x32xf32>
    %16 = arith.subf %14, %15 : vector<2x8x8x32xf32>
    %cst_13 = arith.constant 0.000000e+00 : f32
    %17 = vector.broadcast %cst_13 : f32 to vector<2x8x8x32xf32>
    %18 = arith.cmpf ogt, %3, %17 : vector<2x8x8x32xf32>
    %19 = arith.select %18, %3, %16 : vector<2x8x8x32xi1>, vector<2x8x8x32xf32>
    %cst_14 = arith.constant 0.000000e+00 : f32
    %20 = vector.broadcast %cst_14 : f32 to vector<2x8x8x32xf32>
    %21 = arith.cmpf ogt, %3, %20 : vector<2x8x8x32xf32>
    %cst_15 = arith.constant 0.000000e+00 : f32
    %22 = vector.broadcast %cst_15 : f32 to vector<2x8x8x32xf32>
    %23 = arith.subf %22, %3 : vector<2x8x8x32xf32>
    %24 = arith.select %21, %16, %23 : vector<2x8x8x32xi1>, vector<2x8x8x32xf32>
    %25 = tpu.concatenate %19, %24 in 3 : vector<2x8x8x32xf32>, vector<2x8x8x32xf32> -> vector<2x8x8x64xf32>
    %cst_16 = arith.constant 0.000000e+00 : f32
    %26 = vector.broadcast %cst_16 : f32 to vector<2x1x8x64xf32>
    %27 = tpu.concatenate %26, %25 in 1 : vector<2x1x8x64xf32>, vector<2x8x8x64xf32> -> vector<2x9x8x64xf32>
    %cst_17 = arith.constant 0.000000e+00 : f32
    %28 = vector.broadcast %cst_17 : f32 to vector<2x9x1x64xf32>
    %cst_18 = arith.constant 0.000000e+00 : f32
    %29 = vector.broadcast %cst_18 : f32 to vector<2x9x1x64xf32>
    %30 = tpu.concatenate %28, %27, %29 in 2 : vector<2x9x1x64xf32>, vector<2x9x8x64xf32>, vector<2x9x1x64xf32> -> vector<2x9x10x64xf32>
    %31 = vector.extract_strided_slice %30 {offsets = [0, 0, 0, 0], sizes = [2, 8, 8, 64], strides = [1, 1, 1, 1]} : vector<2x9x10x64xf32> to vector<2x8x8x64xf32>
    %32 = vector.extract_strided_slice %30 {offsets = [0, 0, 1, 0], sizes = [2, 8, 8, 64], strides = [1, 1, 1, 1]} : vector<2x9x10x64xf32> to vector<2x8x8x64xf32>
    %33 = vector.extract_strided_slice %30 {offsets = [0, 0, 2, 0], sizes = [2, 8, 8, 64], strides = [1, 1, 1, 1]} : vector<2x9x10x64xf32> to vector<2x8x8x64xf32>
    %34 = vector.extract_strided_slice %30 {offsets = [0, 1, 0, 0], sizes = [2, 8, 8, 64], strides = [1, 1, 1, 1]} : vector<2x9x10x64xf32> to vector<2x8x8x64xf32>
    %35 = vector.extract_strided_slice %30 {offsets = [0, 1, 1, 0], sizes = [2, 8, 8, 64], strides = [1, 1, 1, 1]} : vector<2x9x10x64xf32> to vector<2x8x8x64xf32>
    %36 = vector.extract_strided_slice %30 {offsets = [0, 1, 2, 0], sizes = [2, 8, 8, 64], strides = [1, 1, 1, 1]} : vector<2x9x10x64xf32> to vector<2x8x8x64xf32>
    %37 = tpu.concatenate %31, %32, %33, %34, %35, %36 in 3 : vector<2x8x8x64xf32>, vector<2x8x8x64xf32>, vector<2x8x8x64xf32>, vector<2x8x8x64xf32>, vector<2x8x8x64xf32>, vector<2x8x8x64xf32> -> vector<2x8x8x384xf32>
    %38 = vector.shape_cast %37 : vector<2x8x8x384xf32> to vector<128x384xf32>
    %39 = arith.truncf %38 : vector<128x384xf32> to vector<128x384xbf16>
    %cst_19 = arith.constant dense<0.000000e+00> : vector<128x32xf32>
    %40 = tpu.matmul %39, %7, %cst_19 {dimension_numbers = #tpu.dot_dimension_numbers<[1], [0], [0], [1], [0, 0, 1, 1], [], []>} : vector<128x384xbf16>, vector<384x32xbf16>, vector<128x32xf32> -> vector<128x32xf32>
    %41 = vector.broadcast %10 : vector<1x32xf32> to vector<128x32xf32>
    %42 = arith.addf %40, %41 : vector<128x32xf32>
    %43 = vector.shape_cast %42 : vector<128x32xf32> to vector<2x8x8x32xf32>
    %c0_20 = arith.constant 0 : index
    %c0_21 = arith.constant 0 : index
    %c0_22 = arith.constant 0 : index
    %c0_23 = arith.constant 0 : index
    %c0_24 = arith.constant 0 : index
    %44 = vector.load %arg4[%c0_20, %c0_21, %c0_22, %c0_23, %c0_24] : memref<1x2x8x8x32xf32, #tpu.memory_space<vmem>>, vector<1x2x8x8x32xf32>
    %45 = vector.shape_cast %44 : vector<1x2x8x8x32xf32> to vector<2x8x8x32xf32>
    %46 = arith.index_cast %arg1 : i32 to index
    %c0_25 = arith.constant 0 : index
    %c0_26 = arith.constant 0 : index
    %47 = vector.load %arg8[%46, %c0_25, %c0_26] : memref<2x64x32xbf16, #tpu.memory_space<vmem>>, vector<1x64x32xbf16>
    %48 = vector.shape_cast %47 : vector<1x64x32xbf16> to vector<64x32xbf16>
    %49 = arith.index_cast %arg1 : i32 to index
    %c0_27 = arith.constant 0 : index
    %c0_28 = arith.constant 0 : index
    %50 = vector.load %arg9[%49, %c0_27, %c0_28] : memref<2x1x32xf32, #tpu.memory_space<vmem>>, vector<1x1x32xf32>
    %51 = vector.shape_cast %50 : vector<1x1x32xf32> to vector<1x32xf32>
    %52 = math.absf %45 : vector<2x8x8x32xf32>
    %cst_29 = arith.constant 0.000000e+00 : f32
    %53 = vector.broadcast %cst_29 : f32 to vector<2x8x8x32xf32>
    %54 = arith.subf %53, %52 : vector<2x8x8x32xf32>
    %55 = math.exp %54 : vector<2x8x8x32xf32>
    %cst_30 = arith.constant 1.000000e+00 : f32
    %56 = vector.broadcast %cst_30 : f32 to vector<2x8x8x32xf32>
    %57 = arith.subf %55, %56 : vector<2x8x8x32xf32>
    %cst_31 = arith.constant 0.000000e+00 : f32
    %58 = vector.broadcast %cst_31 : f32 to vector<2x8x8x32xf32>
    %59 = arith.cmpf ogt, %45, %58 : vector<2x8x8x32xf32>
    %60 = arith.select %59, %45, %57 : vector<2x8x8x32xi1>, vector<2x8x8x32xf32>
    %cst_32 = arith.constant 0.000000e+00 : f32
    %61 = vector.broadcast %cst_32 : f32 to vector<2x8x8x32xf32>
    %62 = arith.cmpf ogt, %45, %61 : vector<2x8x8x32xf32>
    %cst_33 = arith.constant 0.000000e+00 : f32
    %63 = vector.broadcast %cst_33 : f32 to vector<2x8x8x32xf32>
    %64 = arith.subf %63, %45 : vector<2x8x8x32xf32>
    %65 = arith.select %62, %57, %64 : vector<2x8x8x32xi1>, vector<2x8x8x32xf32>
    %66 = tpu.concatenate %60, %65 in 3 : vector<2x8x8x32xf32>, vector<2x8x8x32xf32> -> vector<2x8x8x64xf32>
    %67 = vector.shape_cast %66 : vector<2x8x8x64xf32> to vector<128x64xf32>
    %68 = arith.truncf %67 : vector<128x64xf32> to vector<128x64xbf16>
    %cst_34 = arith.constant dense<0.000000e+00> : vector<128x32xf32>
    %69 = tpu.matmul %68, %48, %cst_34 {dimension_numbers = #tpu.dot_dimension_numbers<[1], [0], [0], [1], [0, 0, 1, 1], [], []>} : vector<128x64xbf16>, vector<64x32xbf16>, vector<128x32xf32> -> vector<128x32xf32>
    %70 = vector.broadcast %51 : vector<1x32xf32> to vector<128x32xf32>
    %71 = arith.addf %69, %70 : vector<128x32xf32>
    %72 = vector.shape_cast %71 : vector<128x32xf32> to vector<2x8x8x32xf32>
    %73 = arith.addf %43, %72 : vector<2x8x8x32xf32>
    %74 = arith.index_cast %arg1 : i32 to index
    %c0_35 = arith.constant 0 : index
    %c0_36 = arith.constant 0 : index
    %75 = vector.load %arg10[%74, %c0_35, %c0_36] : memref<2x384x64xbf16, #tpu.memory_space<vmem>>, vector<1x384x64xbf16>
    %76 = vector.shape_cast %75 : vector<1x384x64xbf16> to vector<384x64xbf16>
    %77 = arith.index_cast %arg1 : i32 to index
    %c0_37 = arith.constant 0 : index
    %c0_38 = arith.constant 0 : index
    %78 = vector.load %arg11[%77, %c0_37, %c0_38] : memref<2x1x64xf32, #tpu.memory_space<vmem>>, vector<1x1x64xf32>
    %79 = vector.shape_cast %78 : vector<1x1x64xf32> to vector<1x64xf32>
    %80 = math.absf %73 : vector<2x8x8x32xf32>
    %cst_39 = arith.constant 0.000000e+00 : f32
    %81 = vector.broadcast %cst_39 : f32 to vector<2x8x8x32xf32>
    %82 = arith.subf %81, %80 : vector<2x8x8x32xf32>
    %83 = math.exp %82 : vector<2x8x8x32xf32>
    %cst_40 = arith.constant 1.000000e+00 : f32
    %84 = vector.broadcast %cst_40 : f32 to vector<2x8x8x32xf32>
    %85 = arith.subf %83, %84 : vector<2x8x8x32xf32>
    %cst_41 = arith.constant 0.000000e+00 : f32
    %86 = vector.broadcast %cst_41 : f32 to vector<2x8x8x32xf32>
    %87 = arith.cmpf ogt, %73, %86 : vector<2x8x8x32xf32>
    %88 = arith.select %87, %73, %85 : vector<2x8x8x32xi1>, vector<2x8x8x32xf32>
    %cst_42 = arith.constant 0.000000e+00 : f32
    %89 = vector.broadcast %cst_42 : f32 to vector<2x8x8x32xf32>
    %90 = arith.cmpf ogt, %73, %89 : vector<2x8x8x32xf32>
    %cst_43 = arith.constant 0.000000e+00 : f32
    %91 = vector.broadcast %cst_43 : f32 to vector<2x8x8x32xf32>
    %92 = arith.subf %91, %73 : vector<2x8x8x32xf32>
    %93 = arith.select %90, %85, %92 : vector<2x8x8x32xi1>, vector<2x8x8x32xf32>
    %94 = tpu.concatenate %88, %93 in 3 : vector<2x8x8x32xf32>, vector<2x8x8x32xf32> -> vector<2x8x8x64xf32>
    %cst_44 = arith.constant 0.000000e+00 : f32
    %95 = vector.broadcast %cst_44 : f32 to vector<2x1x8x64xf32>
    %96 = tpu.concatenate %95, %94 in 1 : vector<2x1x8x64xf32>, vector<2x8x8x64xf32> -> vector<2x9x8x64xf32>
    %cst_45 = arith.constant 0.000000e+00 : f32
    %97 = vector.broadcast %cst_45 : f32 to vector<2x9x1x64xf32>
    %cst_46 = arith.constant 0.000000e+00 : f32
    %98 = vector.broadcast %cst_46 : f32 to vector<2x9x1x64xf32>
    %99 = tpu.concatenate %97, %96, %98 in 2 : vector<2x9x1x64xf32>, vector<2x9x8x64xf32>, vector<2x9x1x64xf32> -> vector<2x9x10x64xf32>
    %100 = vector.extract_strided_slice %99 {offsets = [0, 0, 0, 0], sizes = [2, 8, 8, 64], strides = [1, 1, 1, 1]} : vector<2x9x10x64xf32> to vector<2x8x8x64xf32>
    %101 = vector.extract_strided_slice %99 {offsets = [0, 0, 1, 0], sizes = [2, 8, 8, 64], strides = [1, 1, 1, 1]} : vector<2x9x10x64xf32> to vector<2x8x8x64xf32>
    %102 = vector.extract_strided_slice %99 {offsets = [0, 0, 2, 0], sizes = [2, 8, 8, 64], strides = [1, 1, 1, 1]} : vector<2x9x10x64xf32> to vector<2x8x8x64xf32>
    %103 = vector.extract_strided_slice %99 {offsets = [0, 1, 0, 0], sizes = [2, 8, 8, 64], strides = [1, 1, 1, 1]} : vector<2x9x10x64xf32> to vector<2x8x8x64xf32>
    %104 = vector.extract_strided_slice %99 {offsets = [0, 1, 1, 0], sizes = [2, 8, 8, 64], strides = [1, 1, 1, 1]} : vector<2x9x10x64xf32> to vector<2x8x8x64xf32>
    %105 = vector.extract_strided_slice %99 {offsets = [0, 1, 2, 0], sizes = [2, 8, 8, 64], strides = [1, 1, 1, 1]} : vector<2x9x10x64xf32> to vector<2x8x8x64xf32>
    %106 = tpu.concatenate %100, %101, %102, %103, %104, %105 in 3 : vector<2x8x8x64xf32>, vector<2x8x8x64xf32>, vector<2x8x8x64xf32>, vector<2x8x8x64xf32>, vector<2x8x8x64xf32>, vector<2x8x8x64xf32> -> vector<2x8x8x384xf32>
    %107 = vector.shape_cast %106 : vector<2x8x8x384xf32> to vector<128x384xf32>
    %108 = arith.truncf %107 : vector<128x384xf32> to vector<128x384xbf16>
    %cst_47 = arith.constant dense<0.000000e+00> : vector<128x64xf32>
    %109 = tpu.matmul %108, %76, %cst_47 {dimension_numbers = #tpu.dot_dimension_numbers<[1], [0], [0], [1], [0, 0, 1, 1], [], []>} : vector<128x384xbf16>, vector<384x64xbf16>, vector<128x64xf32> -> vector<128x64xf32>
    %110 = vector.broadcast %79 : vector<1x64xf32> to vector<128x64xf32>
    %111 = arith.addf %109, %110 : vector<128x64xf32>
    %112 = vector.shape_cast %111 : vector<128x64xf32> to vector<2x8x8x64xf32>
    %113 = vector.extract_strided_slice %112 {offsets = [0, 0, 0, 0], sizes = [2, 8, 8, 32], strides = [1, 1, 1, 1]} : vector<2x8x8x64xf32> to vector<2x8x8x32xf32>
    %114 = vector.extract_strided_slice %112 {offsets = [0, 0, 0, 32], sizes = [2, 8, 8, 32], strides = [1, 1, 1, 1]} : vector<2x8x8x64xf32> to vector<2x8x8x32xf32>
    %cst_48 = arith.constant 5.000000e-01 : f32
    %115 = vector.broadcast %cst_48 : f32 to vector<2x8x8x32xf32>
    %116 = arith.mulf %115, %114 : vector<2x8x8x32xf32>
    %117 = math.tanh %116 : vector<2x8x8x32xf32>
    %cst_49 = arith.constant 1.000000e+00 : f32
    %118 = vector.broadcast %cst_49 : f32 to vector<2x8x8x32xf32>
    %119 = arith.addf %117, %118 : vector<2x8x8x32xf32>
    %cst_50 = arith.constant 5.000000e-01 : f32
    %120 = vector.broadcast %cst_50 : f32 to vector<2x8x8x32xf32>
    %121 = arith.mulf %120, %119 : vector<2x8x8x32xf32>
    %122 = arith.mulf %113, %121 : vector<2x8x8x32xf32>
    %123 = arith.addf %3, %122 : vector<2x8x8x32xf32>
    %124 = arith.index_cast %arg1 : i32 to index
    %c0_51 = arith.constant 0 : index
    %c0_52 = arith.constant 0 : index
    %125 = vector.load %arg12[%124, %c0_51, %c0_52] : memref<2x256x32xbf16, #tpu.memory_space<vmem>>, vector<1x256x32xbf16>
    %126 = vector.shape_cast %125 : vector<1x256x32xbf16> to vector<256x32xbf16>
    %127 = arith.index_cast %arg1 : i32 to index
    %c0_53 = arith.constant 0 : index
    %c0_54 = arith.constant 0 : index
    %128 = vector.load %arg13[%127, %c0_53, %c0_54] : memref<2x1x32xf32, #tpu.memory_space<vmem>>, vector<1x1x32xf32>
    %129 = vector.shape_cast %128 : vector<1x1x32xf32> to vector<1x32xf32>
    %130 = math.absf %4 : vector<2x8x8x32xf32>
    %cst_55 = arith.constant 0.000000e+00 : f32
    %131 = vector.broadcast %cst_55 : f32 to vector<2x8x8x32xf32>
    %132 = arith.subf %131, %130 : vector<2x8x8x32xf32>
    %133 = math.exp %132 : vector<2x8x8x32xf32>
    %cst_56 = arith.constant 1.000000e+00 : f32
    %134 = vector.broadcast %cst_56 : f32 to vector<2x8x8x32xf32>
    %135 = arith.subf %133, %134 : vector<2x8x8x32xf32>
    %cst_57 = arith.constant 0.000000e+00 : f32
    %136 = vector.broadcast %cst_57 : f32 to vector<2x8x8x32xf32>
    %137 = arith.cmpf ogt, %4, %136 : vector<2x8x8x32xf32>
    %138 = arith.select %137, %4, %135 : vector<2x8x8x32xi1>, vector<2x8x8x32xf32>
    %cst_58 = arith.constant 0.000000e+00 : f32
    %139 = vector.broadcast %cst_58 : f32 to vector<2x8x8x32xf32>
    %140 = arith.cmpf ogt, %4, %139 : vector<2x8x8x32xf32>
    %cst_59 = arith.constant 0.000000e+00 : f32
    %141 = vector.broadcast %cst_59 : f32 to vector<2x8x8x32xf32>
    %142 = arith.subf %141, %4 : vector<2x8x8x32xf32>
    %143 = arith.select %140, %135, %142 : vector<2x8x8x32xi1>, vector<2x8x8x32xf32>
    %144 = tpu.concatenate %138, %143 in 3 : vector<2x8x8x32xf32>, vector<2x8x8x32xf32> -> vector<2x8x8x64xf32>
    %cst_60 = arith.constant 0.000000e+00 : f32
    %145 = vector.broadcast %cst_60 : f32 to vector<2x1x8x64xf32>
    %146 = tpu.concatenate %145, %144 in 1 : vector<2x1x8x64xf32>, vector<2x8x8x64xf32> -> vector<2x9x8x64xf32>
    %cst_61 = arith.constant 0.000000e+00 : f32
    %147 = vector.broadcast %cst_61 : f32 to vector<2x9x1x64xf32>
    %148 = tpu.concatenate %147, %146 in 2 : vector<2x9x1x64xf32>, vector<2x9x8x64xf32> -> vector<2x9x9x64xf32>
    %149 = vector.extract_strided_slice %148 {offsets = [0, 0, 0, 0], sizes = [2, 8, 8, 64], strides = [1, 1, 1, 1]} : vector<2x9x9x64xf32> to vector<2x8x8x64xf32>
    %150 = vector.extract_strided_slice %148 {offsets = [0, 0, 1, 0], sizes = [2, 8, 8, 64], strides = [1, 1, 1, 1]} : vector<2x9x9x64xf32> to vector<2x8x8x64xf32>
    %151 = vector.extract_strided_slice %148 {offsets = [0, 1, 0, 0], sizes = [2, 8, 8, 64], strides = [1, 1, 1, 1]} : vector<2x9x9x64xf32> to vector<2x8x8x64xf32>
    %152 = vector.extract_strided_slice %148 {offsets = [0, 1, 1, 0], sizes = [2, 8, 8, 64], strides = [1, 1, 1, 1]} : vector<2x9x9x64xf32> to vector<2x8x8x64xf32>
    %153 = tpu.concatenate %149, %150, %151, %152 in 3 : vector<2x8x8x64xf32>, vector<2x8x8x64xf32>, vector<2x8x8x64xf32>, vector<2x8x8x64xf32> -> vector<2x8x8x256xf32>
    %154 = vector.shape_cast %153 : vector<2x8x8x256xf32> to vector<128x256xf32>
    %155 = arith.truncf %154 : vector<128x256xf32> to vector<128x256xbf16>
    %cst_62 = arith.constant dense<0.000000e+00> : vector<128x32xf32>
    %156 = tpu.matmul %155, %126, %cst_62 {dimension_numbers = #tpu.dot_dimension_numbers<[1], [0], [0], [1], [0, 0, 1, 1], [], []>} : vector<128x256xbf16>, vector<256x32xbf16>, vector<128x32xf32> -> vector<128x32xf32>
    %157 = vector.broadcast %129 : vector<1x32xf32> to vector<128x32xf32>
    %158 = arith.addf %156, %157 : vector<128x32xf32>
    %159 = vector.shape_cast %158 : vector<128x32xf32> to vector<2x8x8x32xf32>
    %160 = arith.index_cast %arg1 : i32 to index
    %c0_63 = arith.constant 0 : index
    %c0_64 = arith.constant 0 : index
    %161 = vector.load %arg14[%160, %c0_63, %c0_64] : memref<2x64x32xbf16, #tpu.memory_space<vmem>>, vector<1x64x32xbf16>
    %162 = vector.shape_cast %161 : vector<1x64x32xbf16> to vector<64x32xbf16>
    %163 = math.absf %123 : vector<2x8x8x32xf32>
    %cst_65 = arith.constant 0.000000e+00 : f32
    %164 = vector.broadcast %cst_65 : f32 to vector<2x8x8x32xf32>
    %165 = arith.subf %164, %163 : vector<2x8x8x32xf32>
    %166 = math.exp %165 : vector<2x8x8x32xf32>
    %cst_66 = arith.constant 1.000000e+00 : f32
    %167 = vector.broadcast %cst_66 : f32 to vector<2x8x8x32xf32>
    %168 = arith.subf %166, %167 : vector<2x8x8x32xf32>
    %cst_67 = arith.constant 0.000000e+00 : f32
    %169 = vector.broadcast %cst_67 : f32 to vector<2x8x8x32xf32>
    %170 = arith.cmpf ogt, %123, %169 : vector<2x8x8x32xf32>
    %171 = arith.select %170, %123, %168 : vector<2x8x8x32xi1>, vector<2x8x8x32xf32>
    %cst_68 = arith.constant 0.000000e+00 : f32
    %172 = vector.broadcast %cst_68 : f32 to vector<2x8x8x32xf32>
    %173 = arith.cmpf ogt, %123, %172 : vector<2x8x8x32xf32>
    %cst_69 = arith.constant 0.000000e+00 : f32
    %174 = vector.broadcast %cst_69 : f32 to vector<2x8x8x32xf32>
    %175 = arith.subf %174, %123 : vector<2x8x8x32xf32>
    %176 = arith.select %173, %168, %175 : vector<2x8x8x32xi1>, vector<2x8x8x32xf32>
    %177 = tpu.concatenate %171, %176 in 3 : vector<2x8x8x32xf32>, vector<2x8x8x32xf32> -> vector<2x8x8x64xf32>
    %178 = vector.shape_cast %177 : vector<2x8x8x64xf32> to vector<128x64xf32>
    %179 = arith.truncf %178 : vector<128x64xf32> to vector<128x64xbf16>
    %cst_70 = arith.constant dense<0.000000e+00> : vector<128x32xf32>
    %180 = tpu.matmul %179, %162, %cst_70 {dimension_numbers = #tpu.dot_dimension_numbers<[1], [0], [0], [1], [0, 0, 1, 1], [], []>} : vector<128x64xbf16>, vector<64x32xbf16>, vector<128x32xf32> -> vector<128x32xf32>
    %181 = vector.shape_cast %180 : vector<128x32xf32> to vector<2x8x8x32xf32>
    %c0_71 = arith.constant 0 : index
    %c0_72 = arith.constant 0 : index
    %c0_73 = arith.constant 0 : index
    %c0_74 = arith.constant 0 : index
    %c0_75 = arith.constant 0 : index
    %182 = vector.load %arg5[%c0_71, %c0_72, %c0_73, %c0_74, %c0_75] : memref<1x2x8x8x32xf32, #tpu.memory_space<vmem>>, vector<1x2x8x8x32xf32>
    %183 = vector.shape_cast %182 : vector<1x2x8x8x32xf32> to vector<2x8x8x32xf32>
    %184 = arith.index_cast %arg1 : i32 to index
    %c0_76 = arith.constant 0 : index
    %c0_77 = arith.constant 0 : index
    %185 = vector.load %arg15[%184, %c0_76, %c0_77] : memref<2x64x32xbf16, #tpu.memory_space<vmem>>, vector<1x64x32xbf16>
    %186 = vector.shape_cast %185 : vector<1x64x32xbf16> to vector<64x32xbf16>
    %187 = arith.index_cast %arg1 : i32 to index
    %c0_78 = arith.constant 0 : index
    %c0_79 = arith.constant 0 : index
    %188 = vector.load %arg16[%187, %c0_78, %c0_79] : memref<2x1x32xf32, #tpu.memory_space<vmem>>, vector<1x1x32xf32>
    %189 = vector.shape_cast %188 : vector<1x1x32xf32> to vector<1x32xf32>
    %190 = math.absf %183 : vector<2x8x8x32xf32>
    %cst_80 = arith.constant 0.000000e+00 : f32
    %191 = vector.broadcast %cst_80 : f32 to vector<2x8x8x32xf32>
    %192 = arith.subf %191, %190 : vector<2x8x8x32xf32>
    %193 = math.exp %192 : vector<2x8x8x32xf32>
    %cst_81 = arith.constant 1.000000e+00 : f32
    %194 = vector.broadcast %cst_81 : f32 to vector<2x8x8x32xf32>
    %195 = arith.subf %193, %194 : vector<2x8x8x32xf32>
    %cst_82 = arith.constant 0.000000e+00 : f32
    %196 = vector.broadcast %cst_82 : f32 to vector<2x8x8x32xf32>
    %197 = arith.cmpf ogt, %183, %196 : vector<2x8x8x32xf32>
    %198 = arith.select %197, %183, %195 : vector<2x8x8x32xi1>, vector<2x8x8x32xf32>
    %cst_83 = arith.constant 0.000000e+00 : f32
    %199 = vector.broadcast %cst_83 : f32 to vector<2x8x8x32xf32>
    %200 = arith.cmpf ogt, %183, %199 : vector<2x8x8x32xf32>
    %cst_84 = arith.constant 0.000000e+00 : f32
    %201 = vector.broadcast %cst_84 : f32 to vector<2x8x8x32xf32>
    %202 = arith.subf %201, %183 : vector<2x8x8x32xf32>
    %203 = arith.select %200, %195, %202 : vector<2x8x8x32xi1>, vector<2x8x8x32xf32>
    %204 = tpu.concatenate %198, %203 in 3 : vector<2x8x8x32xf32>, vector<2x8x8x32xf32> -> vector<2x8x8x64xf32>
    %205 = vector.shape_cast %204 : vector<2x8x8x64xf32> to vector<128x64xf32>
    %206 = arith.truncf %205 : vector<128x64xf32> to vector<128x64xbf16>
    %cst_85 = arith.constant dense<0.000000e+00> : vector<128x32xf32>
    %207 = tpu.matmul %206, %186, %cst_85 {dimension_numbers = #tpu.dot_dimension_numbers<[1], [0], [0], [1], [0, 0, 1, 1], [], []>} : vector<128x64xbf16>, vector<64x32xbf16>, vector<128x32xf32> -> vector<128x32xf32>
    %208 = vector.broadcast %189 : vector<1x32xf32> to vector<128x32xf32>
    %209 = arith.addf %207, %208 : vector<128x32xf32>
    %210 = vector.shape_cast %209 : vector<128x32xf32> to vector<2x8x8x32xf32>
    %211 = arith.addf %181, %210 : vector<2x8x8x32xf32>
    %212 = arith.addf %159, %211 : vector<2x8x8x32xf32>
    %213 = arith.index_cast %arg1 : i32 to index
    %c0_86 = arith.constant 0 : index
    %c0_87 = arith.constant 0 : index
    %214 = vector.load %arg17[%213, %c0_86, %c0_87] : memref<2x256x64xbf16, #tpu.memory_space<vmem>>, vector<1x256x64xbf16>
    %215 = vector.shape_cast %214 : vector<1x256x64xbf16> to vector<256x64xbf16>
    %216 = arith.index_cast %arg1 : i32 to index
    %c0_88 = arith.constant 0 : index
    %c0_89 = arith.constant 0 : index
    %217 = vector.load %arg18[%216, %c0_88, %c0_89] : memref<2x1x64xf32, #tpu.memory_space<vmem>>, vector<1x1x64xf32>
    %218 = vector.shape_cast %217 : vector<1x1x64xf32> to vector<1x64xf32>
    %219 = math.absf %212 : vector<2x8x8x32xf32>
    %cst_90 = arith.constant 0.000000e+00 : f32
    %220 = vector.broadcast %cst_90 : f32 to vector<2x8x8x32xf32>
    %221 = arith.subf %220, %219 : vector<2x8x8x32xf32>
    %222 = math.exp %221 : vector<2x8x8x32xf32>
    %cst_91 = arith.constant 1.000000e+00 : f32
    %223 = vector.broadcast %cst_91 : f32 to vector<2x8x8x32xf32>
    %224 = arith.subf %222, %223 : vector<2x8x8x32xf32>
    %cst_92 = arith.constant 0.000000e+00 : f32
    %225 = vector.broadcast %cst_92 : f32 to vector<2x8x8x32xf32>
    %226 = arith.cmpf ogt, %212, %225 : vector<2x8x8x32xf32>
    %227 = arith.select %226, %212, %224 : vector<2x8x8x32xi1>, vector<2x8x8x32xf32>
    %cst_93 = arith.constant 0.000000e+00 : f32
    %228 = vector.broadcast %cst_93 : f32 to vector<2x8x8x32xf32>
    %229 = arith.cmpf ogt, %212, %228 : vector<2x8x8x32xf32>
    %cst_94 = arith.constant 0.000000e+00 : f32
    %230 = vector.broadcast %cst_94 : f32 to vector<2x8x8x32xf32>
    %231 = arith.subf %230, %212 : vector<2x8x8x32xf32>
    %232 = arith.select %229, %224, %231 : vector<2x8x8x32xi1>, vector<2x8x8x32xf32>
    %233 = tpu.concatenate %227, %232 in 3 : vector<2x8x8x32xf32>, vector<2x8x8x32xf32> -> vector<2x8x8x64xf32>
    %cst_95 = arith.constant 0.000000e+00 : f32
    %234 = vector.broadcast %cst_95 : f32 to vector<2x1x8x64xf32>
    %235 = tpu.concatenate %234, %233 in 1 : vector<2x1x8x64xf32>, vector<2x8x8x64xf32> -> vector<2x9x8x64xf32>
    %cst_96 = arith.constant 0.000000e+00 : f32
    %236 = vector.broadcast %cst_96 : f32 to vector<2x9x1x64xf32>
    %237 = tpu.concatenate %236, %235 in 2 : vector<2x9x1x64xf32>, vector<2x9x8x64xf32> -> vector<2x9x9x64xf32>
    %238 = vector.extract_strided_slice %237 {offsets = [0, 0, 0, 0], sizes = [2, 8, 8, 64], strides = [1, 1, 1, 1]} : vector<2x9x9x64xf32> to vector<2x8x8x64xf32>
    %239 = vector.extract_strided_slice %237 {offsets = [0, 0, 1, 0], sizes = [2, 8, 8, 64], strides = [1, 1, 1, 1]} : vector<2x9x9x64xf32> to vector<2x8x8x64xf32>
    %240 = vector.extract_strided_slice %237 {offsets = [0, 1, 0, 0], sizes = [2, 8, 8, 64], strides = [1, 1, 1, 1]} : vector<2x9x9x64xf32> to vector<2x8x8x64xf32>
    %241 = vector.extract_strided_slice %237 {offsets = [0, 1, 1, 0], sizes = [2, 8, 8, 64], strides = [1, 1, 1, 1]} : vector<2x9x9x64xf32> to vector<2x8x8x64xf32>
    %242 = tpu.concatenate %238, %239, %240, %241 in 3 : vector<2x8x8x64xf32>, vector<2x8x8x64xf32>, vector<2x8x8x64xf32>, vector<2x8x8x64xf32> -> vector<2x8x8x256xf32>
    %243 = vector.shape_cast %242 : vector<2x8x8x256xf32> to vector<128x256xf32>
    %244 = arith.truncf %243 : vector<128x256xf32> to vector<128x256xbf16>
    %cst_97 = arith.constant dense<0.000000e+00> : vector<128x64xf32>
    %245 = tpu.matmul %244, %215, %cst_97 {dimension_numbers = #tpu.dot_dimension_numbers<[1], [0], [0], [1], [0, 0, 1, 1], [], []>} : vector<128x256xbf16>, vector<256x64xbf16>, vector<128x64xf32> -> vector<128x64xf32>
    %246 = vector.broadcast %218 : vector<1x64xf32> to vector<128x64xf32>
    %247 = arith.addf %245, %246 : vector<128x64xf32>
    %248 = vector.shape_cast %247 : vector<128x64xf32> to vector<2x8x8x64xf32>
    %249 = vector.extract_strided_slice %248 {offsets = [0, 0, 0, 0], sizes = [2, 8, 8, 32], strides = [1, 1, 1, 1]} : vector<2x8x8x64xf32> to vector<2x8x8x32xf32>
    %250 = vector.extract_strided_slice %248 {offsets = [0, 0, 0, 32], sizes = [2, 8, 8, 32], strides = [1, 1, 1, 1]} : vector<2x8x8x64xf32> to vector<2x8x8x32xf32>
    %cst_98 = arith.constant 5.000000e-01 : f32
    %251 = vector.broadcast %cst_98 : f32 to vector<2x8x8x32xf32>
    %252 = arith.mulf %251, %250 : vector<2x8x8x32xf32>
    %253 = math.tanh %252 : vector<2x8x8x32xf32>
    %cst_99 = arith.constant 1.000000e+00 : f32
    %254 = vector.broadcast %cst_99 : f32 to vector<2x8x8x32xf32>
    %255 = arith.addf %253, %254 : vector<2x8x8x32xf32>
    %cst_100 = arith.constant 5.000000e-01 : f32
    %256 = vector.broadcast %cst_100 : f32 to vector<2x8x8x32xf32>
    %257 = arith.mulf %256, %255 : vector<2x8x8x32xf32>
    %258 = arith.mulf %249, %257 : vector<2x8x8x32xf32>
    %259 = arith.addf %4, %258 : vector<2x8x8x32xf32>
    %c0_101 = arith.constant 0 : index
    %c0_102 = arith.constant 0 : index
    %c0_103 = arith.constant 0 : index
    %c0_104 = arith.constant 0 : index
    %260 = vector.load %arg19[%c0_101, %c0_102, %c0_103, %c0_104] : memref<2x8x8x32xf32, #tpu.memory_space<vmem>>, vector<2x8x8x32xf32>
    tpu.vector_store %arg19[%c0_101, %c0_102, %c0_103, %c0_104], %123 {strides = array<i32>} : memref<2x8x8x32xf32, #tpu.memory_space<vmem>>, vector<2x8x8x32xf32>,
    %c0_105 = arith.constant 0 : index
    %c0_106 = arith.constant 0 : index
    %c0_107 = arith.constant 0 : index
    %c0_108 = arith.constant 0 : index
    %261 = vector.load %arg20[%c0_105, %c0_106, %c0_107, %c0_108] : memref<2x8x8x32xf32, #tpu.memory_space<vmem>>, vector<2x8x8x32xf32>
    tpu.vector_store %arg20[%c0_105, %c0_106, %c0_107, %c0_108], %259 {strides = array<i32>} : memref<2x8x8x32xf32, #tpu.memory_space<vmem>>, vector<2x8x8x32xf32>,
    return
  }
  func.func @transform_0(%arg0: i32, %arg1: i32) -> (i32, i32, i32, i32) {
    %c0_i32 = arith.constant 0 : i32
    %c0_i32_0 = arith.constant 0 : i32
    %c0_i32_1 = arith.constant 0 : i32
    %c0_i32_2 = arith.constant 0 : i32
    return %arg0, %c0_i32, %c0_i32_0, %c0_i32_1 : i32, i32, i32, i32
  }
  func.func @transform_1(%arg0: i32, %arg1: i32) -> (i32, i32, i32, i32) {
    %c0_i32 = arith.constant 0 : i32
    %c0_i32_0 = arith.constant 0 : i32
    %c0_i32_1 = arith.constant 0 : i32
    %c0_i32_2 = arith.constant 0 : i32
    return %arg0, %c0_i32, %c0_i32_0, %c0_i32_1 : i32, i32, i32, i32
  }
  func.func @transform_2(%arg0: i32, %arg1: i32) -> (i32, i32, i32, i32, i32) {
    %c1_i32 = arith.constant 1 : i32
    %0 = arith.subi %c1_i32, %arg1 : i32
    %c0_i32 = arith.constant 0 : i32
    %c0_i32_0 = arith.constant 0 : i32
    %c0_i32_1 = arith.constant 0 : i32
    %c0_i32_2 = arith.constant 0 : i32
    return %0, %arg0, %c0_i32, %c0_i32_0, %c0_i32_1 : i32, i32, i32, i32, i32
  }
  func.func @transform_3(%arg0: i32, %arg1: i32) -> (i32, i32, i32, i32, i32) {
    %c1_i32 = arith.constant 1 : i32
    %0 = arith.subi %c1_i32, %arg1 : i32
    %c0_i32 = arith.constant 0 : i32
    %c0_i32_0 = arith.constant 0 : i32
    %c0_i32_1 = arith.constant 0 : i32
    %c0_i32_2 = arith.constant 0 : i32
    return %0, %arg0, %c0_i32, %c0_i32_0, %c0_i32_1 : i32, i32, i32, i32, i32
  }
  func.func @transform_4(%arg0: i32, %arg1: i32) -> (i32, i32, i32) {
    %c0_i32 = arith.constant 0 : i32
    %c0_i32_0 = arith.constant 0 : i32
    %c0_i32_1 = arith.constant 0 : i32
    %c0_i32_2 = arith.constant 0 : i32
    return %c0_i32, %c0_i32_0, %c0_i32_1 : i32, i32, i32
  }
  func.func @transform_5(%arg0: i32, %arg1: i32) -> (i32, i32, i32) {
    %c0_i32 = arith.constant 0 : i32
    %c0_i32_0 = arith.constant 0 : i32
    %c0_i32_1 = arith.constant 0 : i32
    %c0_i32_2 = arith.constant 0 : i32
    return %c0_i32, %c0_i32_0, %c0_i32_1 : i32, i32, i32
  }
  func.func @transform_6(%arg0: i32, %arg1: i32) -> (i32, i32, i32) {
    %c0_i32 = arith.constant 0 : i32
    %c0_i32_0 = arith.constant 0 : i32
    %c0_i32_1 = arith.constant 0 : i32
    %c0_i32_2 = arith.constant 0 : i32
    return %c0_i32, %c0_i32_0, %c0_i32_1 : i32, i32, i32
  }
  func.func @transform_7(%arg0: i32, %arg1: i32) -> (i32, i32, i32) {
    %c0_i32 = arith.constant 0 : i32
    %c0_i32_0 = arith.constant 0 : i32
    %c0_i32_1 = arith.constant 0 : i32
    %c0_i32_2 = arith.constant 0 : i32
    return %c0_i32, %c0_i32_0, %c0_i32_1 : i32, i32, i32
  }
  func.func @transform_8(%arg0: i32, %arg1: i32) -> (i32, i32, i32) {
    %c0_i32 = arith.constant 0 : i32
    %c0_i32_0 = arith.constant 0 : i32
    %c0_i32_1 = arith.constant 0 : i32
    %c0_i32_2 = arith.constant 0 : i32
    return %c0_i32, %c0_i32_0, %c0_i32_1 : i32, i32, i32
  }
  func.func @transform_9(%arg0: i32, %arg1: i32) -> (i32, i32, i32) {
    %c0_i32 = arith.constant 0 : i32
    %c0_i32_0 = arith.constant 0 : i32
    %c0_i32_1 = arith.constant 0 : i32
    %c0_i32_2 = arith.constant 0 : i32
    return %c0_i32, %c0_i32_0, %c0_i32_1 : i32, i32, i32
  }
  func.func @transform_10(%arg0: i32, %arg1: i32) -> (i32, i32, i32) {
    %c0_i32 = arith.constant 0 : i32
    %c0_i32_0 = arith.constant 0 : i32
    %c0_i32_1 = arith.constant 0 : i32
    %c0_i32_2 = arith.constant 0 : i32
    return %c0_i32, %c0_i32_0, %c0_i32_1 : i32, i32, i32
  }
  func.func @transform_11(%arg0: i32, %arg1: i32) -> (i32, i32, i32) {
    %c0_i32 = arith.constant 0 : i32
    %c0_i32_0 = arith.constant 0 : i32
    %c0_i32_1 = arith.constant 0 : i32
    %c0_i32_2 = arith.constant 0 : i32
    return %c0_i32, %c0_i32_0, %c0_i32_1 : i32, i32, i32
  }
  func.func @transform_12(%arg0: i32, %arg1: i32) -> (i32, i32, i32) {
    %c0_i32 = arith.constant 0 : i32
    %c0_i32_0 = arith.constant 0 : i32
    %c0_i32_1 = arith.constant 0 : i32
    %c0_i32_2 = arith.constant 0 : i32
    return %c0_i32, %c0_i32_0, %c0_i32_1 : i32, i32, i32
  }
  func.func @transform_13(%arg0: i32, %arg1: i32) -> (i32, i32, i32) {
    %c0_i32 = arith.constant 0 : i32
    %c0_i32_0 = arith.constant 0 : i32
    %c0_i32_1 = arith.constant 0 : i32
    %c0_i32_2 = arith.constant 0 : i32
    return %c0_i32, %c0_i32_0, %c0_i32_1 : i32, i32, i32
  }
  func.func @transform_14(%arg0: i32, %arg1: i32) -> (i32, i32, i32) {
    %c0_i32 = arith.constant 0 : i32
    %c0_i32_0 = arith.constant 0 : i32
    %c0_i32_1 = arith.constant 0 : i32
    %c0_i32_2 = arith.constant 0 : i32
    return %c0_i32, %c0_i32_0, %c0_i32_1 : i32, i32, i32
  }
  func.func @transform_15(%arg0: i32, %arg1: i32) -> (i32, i32, i32) {
    %c0_i32 = arith.constant 0 : i32
    %c0_i32_0 = arith.constant 0 : i32
    %c0_i32_1 = arith.constant 0 : i32
    %c0_i32_2 = arith.constant 0 : i32
    return %c0_i32, %c0_i32_0, %c0_i32_1 : i32, i32, i32
  }
  func.func @transform_16(%arg0: i32, %arg1: i32) -> (i32, i32, i32) {
    %c0_i32 = arith.constant 0 : i32
    %c0_i32_0 = arith.constant 0 : i32
    %c0_i32_1 = arith.constant 0 : i32
    %c0_i32_2 = arith.constant 0 : i32
    return %c0_i32, %c0_i32_0, %c0_i32_1 : i32, i32, i32
  }
  func.func @transform_17(%arg0: i32, %arg1: i32) -> (i32, i32, i32, i32) {
    %c0_i32 = arith.constant 0 : i32
    %c0_i32_0 = arith.constant 0 : i32
    %c0_i32_1 = arith.constant 0 : i32
    %c0_i32_2 = arith.constant 0 : i32
    return %arg0, %c0_i32, %c0_i32_0, %c0_i32_1 : i32, i32, i32, i32
  }
  func.func @transform_18(%arg0: i32, %arg1: i32) -> (i32, i32, i32, i32) {
    %c0_i32 = arith.constant 0 : i32
    %c0_i32_0 = arith.constant 0 : i32
    %c0_i32_1 = arith.constant 0 : i32
    %c0_i32_2 = arith.constant 0 : i32
    return %arg0, %c0_i32, %c0_i32_0, %c0_i32_1 : i32, i32, i32, i32
  }
}

</mosaic_0001>

<llo_original>
// kernel: tpu_custom_call.1
$region0: #{tpu_custom_call.1}
  #allocation0 [shape = 'u32[]', space=smem, size = 0x4, offset = 0x4, fixed_abs, tag = 'smem constant byte address 0x4 - core index']
  #allocation1 [shape = 'u32[144,128]{1,0:T(1,128)}', space=vmem, size = 0x12000, scoped, tag = 'internal scratch']
  %s0 = inlined_call_operand.hbm [shape: f32[4,8,8,32], index: 0, kind: input, shape index: {}]
  %s1 = inlined_call_operand.hbm [shape: f32[4,8,8,32], index: 1, kind: input, shape index: {}]
  %s2 = inlined_call_operand.hbm [shape: f32[2,4,8,8,32], index: 2, kind: input, shape index: {}]
  %s3 = inlined_call_operand.hbm [shape: f32[2,4,8,8,32], index: 3, kind: input, shape index: {}]
  %s4 = inlined_call_operand.hbm [shape: bf16[2,384,32], index: 4, kind: input, shape index: {}]
  %s5 = inlined_call_operand.hbm [shape: f32[2,1,32], index: 5, kind: input, shape index: {}]
  %s6 = inlined_call_operand.hbm [shape: bf16[2,64,32], index: 6, kind: input, shape index: {}]
  %s7 = inlined_call_operand.hbm [shape: f32[2,1,32], index: 7, kind: input, shape index: {}]
  %s8 = inlined_call_operand.hbm [shape: bf16[2,384,64], index: 8, kind: input, shape index: {}]
  %s9 = inlined_call_operand.hbm [shape: f32[2,1,64], index: 9, kind: input, shape index: {}]
  %s10 = inlined_call_operand.hbm [shape: bf16[2,256,32], index: 10, kind: input, shape index: {}]
  %s11 = inlined_call_operand.hbm [shape: f32[2,1,32], index: 11, kind: input, shape index: {}]
  %s12 = inlined_call_operand.hbm [shape: bf16[2,64,32], index: 12, kind: input, shape index: {}]
  %s13 = inlined_call_operand.hbm [shape: bf16[2,64,32], index: 13, kind: input, shape index: {}]
  %s14 = inlined_call_operand.hbm [shape: f32[2,1,32], index: 14, kind: input, shape index: {}]
  %s15 = inlined_call_operand.hbm [shape: bf16[2,256,64], index: 15, kind: input, shape index: {}]
  %s16 = inlined_call_operand.hbm [shape: f32[2,1,64], index: 16, kind: input, shape index: {}]
  %s17 = inlined_call_operand.hbm [shape: f32[4,8,8,32], index: 17, kind: output, shape index: {0}]
  %s18 = inlined_call_operand.hbm [shape: f32[4,8,8,32], index: 18, kind: output, shape index: {1}]
  %19 = xla_tuple %s17, %s18
  %s20 = sld [smem:[#allocation0]]
  $region181: #{tpu_custom_call.1} parent=0
    _
  %s22 = ssub.s32 1, %s20
  %s23 = scalar_select 0, %s22, %s20
  $region1: #{tpu_custom_call.1} parent=0
    #allocation2 [shape = 'u8[131072]{0}', space=vmem, size = 0x20000, scoped, tag = 'input window, operand 0']
    #allocation3 [shape = 's32[2]{0}', space=sflag, size = 0x8, scoped, tag = 'scoped memory for tpu_custom_call.1']
    #allocation4 [shape = 's32[2]{0}', space=sflag, size = 0x8, scoped, tag = 'scoped memory for tpu_custom_call.1']
    #allocation5 [shape = 'u8[131072]{0}', space=vmem, size = 0x20000, scoped, tag = 'input window, operand 1']
    #allocation6 [shape = 's32[2]{0}', space=sflag, size = 0x8, scoped, tag = 'scoped memory for tpu_custom_call.1']
    #allocation7 [shape = 'u8[131072]{0}', space=vmem, size = 0x20000, scoped, tag = 'input window, operand 2']
    #allocation8 [shape = 'u8[131072]{0}', space=vmem, size = 0x20000, scoped, tag = 'input window, operand 3']
    #allocation9 [shape = 's32[2]{0}', space=sflag, size = 0x8, scoped, tag = 'scoped memory for tpu_custom_call.1']
    #allocation10 [shape = 'u8[196608]{0}', space=vmem, size = 0x30000, scoped, tag = 'input window, operand 4, single buffered']
    #allocation11 [shape = 'u8[1024]{0}', space=vmem, size = 0x400, scoped, tag = 'input window, operand 5, single buffered']
    #allocation12 [shape = 's32[1]{0}', space=sflag, size = 0x4, scoped, tag = 'scoped memory for tpu_custom_call.1']
    #allocation13 [shape = 'u8[32768]{0}', space=vmem, size = 0x8000, scoped, tag = 'input window, operand 6, single buffered']
    #allocation14 [shape = 'u8[1024]{0}', space=vmem, size = 0x400, scoped, tag = 'input window, operand 7, single buffered']
    #allocation15 [shape = 's32[1]{0}', space=sflag, size = 0x4, scoped, tag = 'scoped memory for tpu_custom_call.1']
    #allocation16 [shape = 'u8[196608]{0}', space=vmem, size = 0x30000, scoped, tag = 'input window, operand 8, single buffered']
    #allocation17 [shape = 'u8[1024]{0}', space=vmem, size = 0x400, scoped, tag = 'input window, operand 9, single buffered']
    #allocation18 [shape = 's32[1]{0}', space=sflag, size = 0x4, scoped, tag = 'scoped memory for tpu_custom_call.1']
    #allocation19 [shape = 'u8[131072]{0}', space=vmem, size = 0x20000, scoped, tag = 'input window, operand 10, single buffered']
    #allocation20 [shape = 'u8[1024]{0}', space=vmem, size = 0x400, scoped, tag = 'input window, operand 11, single buffered']
    #allocation21 [shape = 's32[1]{0}', space=sflag, size = 0x4, scoped, tag = 'scoped memory for tpu_custom_call.1']
    #allocation22 [shape = 'u8[32768]{0}', space=vmem, size = 0x8000, scoped, tag = 'input window, operand 12, single buffered']
    #allocation23 [shape = 'u8[32768]{0}', space=vmem, size = 0x8000, scoped, tag = 'input window, operand 13, single buffered']
    #allocation24 [shape = 's32[1]{0}', space=sflag, size = 0x4, scoped, tag = 'scoped memory for tpu_custom_call.1']
    #allocation25 [shape = 'u8[1024]{0}', space=vmem, size = 0x400, scoped, tag = 'input window, operand 14, single buffered']
    #allocation26 [shape = 'u8[131072]{0}', space=vmem, size = 0x20000, scoped, tag = 'input window, operand 15, single buffered']
    #allocation27 [shape = 's32[1]{0}', space=sflag, size = 0x4, scoped, tag = 'scoped memory for tpu_custom_call.1']
    #allocation28 [shape = 'u8[1024]{0}', space=vmem, size = 0x400, scoped, tag = 'input window, operand 16, single buffered']
    #allocation29 [shape = 'u8[131072]{0}', space=vmem, size = 0x20000, scoped, tag = 'output window, operand 0']
    #allocation30 [shape = 'u8[131072]{0}', space=vmem, size = 0x20000, scoped, tag = 'output window, operand 1']
    #allocation31 [shape = 's32[2]{0}', space=sflag, size = 0x8, scoped, tag = 'scoped memory for tpu_custom_call.1']
    %24 = vsyncpa [#allocation3], 0
    %s25 = scalar_lea.sflag [#allocation3], 1
    %26 = vsyncpa %s25, 0
    %27 = vsyncpa [#allocation6], 0
    %s28 = scalar_lea.sflag [#allocation6], 1
    %29 = vsyncpa %s28, 0
    %30 = vsyncpa [#allocation9], 0
    %s31 = scalar_lea.sflag [#allocation9], 1
    %32 = vsyncpa %s31, 0
    %33 = vsyncpa [#allocation12], 0
    %34 = vsyncpa [#allocation15], 0
    %35 = vsyncpa [#allocation18], 0
    %36 = vsyncpa [#allocation21], 0
    %37 = vsyncpa [#allocation24], 0
    %38 = vsyncpa [#allocation27], 0
    %39 = vsyncpa [#allocation4], 0
    %s40 = scalar_lea.sflag [#allocation4], 1
    %41 = vsyncpa %s40, 0
    %42 = vsyncpa [#allocation31], 0
    %s43 = scalar_lea.sflag [#allocation31], 1
    %44 = vsyncpa %s43, 0
    loop: start=0, step=1, limit=6
    $region2: #{tpu_custom_call.1} parent=1 // loop_pre_header
      _
    $region3: #{tpu_custom_call.1} parent=1 // loop_header
      %s46 = sphi 0, %s50
      %p47 = scmp.ge.s32.totalorder %s46, 6
      %s53 = sphi 0, %s65
      %s54 = sphi 0, %s61
      %s55 = sphi 0, %s53
      %s56 = sphi 0, %s54
      %s57 = sphi 0, %s55
      %s58 = sphi 0, %s56
      %s68 = sphi 0, %s70
      %s71 = sphi 0, %s68
      %s72 = sphi 0, %s71
      %s88 = sphi 0, %s72
      %s94 = sphi 0, %s96
      %s97 = sphi 0, %s94
      %s98 = sphi 0, %s97
      %s114 = sphi 0, %s98
      %s124 = sphi 0, %s126
      %s127 = sphi 0, %s124
      %s128 = sphi 0, %s127
      %s144 = sphi 0, %s128
      %s154 = sphi 0, %s156
      %s157 = sphi 0, %s154
      %s158 = sphi 0, %s157
      %s174 = sphi 0, %s158
      %s178 = sphi 0, %s178
      %s180 = sphi 0, %s178
      %s181 = sphi 0, %s180
      %s195 = sphi 0, %s181
      %s199 = sphi 0, %s199
      %s201 = sphi 0, %s199
      %s202 = sphi 0, %s201
      %s216 = sphi 0, %s202
      %s220 = sphi 0, %s220
      %s222 = sphi 0, %s220
      %s223 = sphi 0, %s222
      %s237 = sphi 0, %s223
      %s241 = sphi 0, %s241
      %s243 = sphi 0, %s241
      %s244 = sphi 0, %s243
      %s258 = sphi 0, %s244
      %s262 = sphi 0, %s262
      %s264 = sphi 0, %s262
      %s265 = sphi 0, %s264
      %s279 = sphi 0, %s265
      %s283 = sphi 0, %s283
      %s285 = sphi 0, %s283
      %s286 = sphi 0, %s285
      %s300 = sphi 0, %s286
      %s304 = sphi 0, %s304
      %s306 = sphi 0, %s304
      %s307 = sphi 0, %s306
      %s321 = sphi 0, %s307
      %s325 = sphi 0, %s325
      %s327 = sphi 0, %s325
      %s328 = sphi 0, %s327
      %s342 = sphi 0, %s328
      %s346 = sphi 0, %s346
      %s348 = sphi 0, %s346
      %s349 = sphi 0, %s348
      %s363 = sphi 0, %s349
      %s367 = sphi 0, %s367
      %s369 = sphi 0, %s367
      %s370 = sphi 0, %s369
      %s384 = sphi 0, %s370
      %s388 = sphi 0, %s388
      %s390 = sphi 0, %s388
      %s391 = sphi 0, %s390
      %s405 = sphi 0, %s391
      %s409 = sphi 0, %s409
      %s411 = sphi 0, %s409
      %s412 = sphi 0, %s411
      %s426 = sphi 0, %s412
      %s430 = sphi 0, %s430
      %s432 = sphi 0, %s430
      %s433 = sphi 0, %s432
      %s447 = sphi 0, %s433
      %s453 = sphi 0, %s455
      %s456 = sphi 0, %s453
      %s457 = sphi 0, %s456
      %s473 = sphi 0, %s457
      %s479 = sphi 0, %s481
      %s482 = sphi 0, %s479
      %s483 = sphi 0, %s482
      %s499 = sphi 0, %s483
    $region4: #{tpu_custom_call.1} parent=1 // loop_header_branch
      %49 = sbr.rel (%p47) target = $region8
    $region5: #{tpu_custom_call.1} parent=1 // loop_body
      %s51 = ssub.s32 %s46, 1
      %s52 = ssub.s32 %s46, 2
      %s59 = sadd.s32 1, %s54
      %p60 = scmp.ge.s32.totalorder %s59, 2
      %s61 = scalar_select %p60, 0, %s59
      %s62 = sadd.s32 1, %s53
      %s63 = scalar_select %p60, %s62, %s53
      %p64 = scmp.ge.s32.totalorder %s63, 2
      %s65 = scalar_select %p64, 0, %s63
      %s66 = ssub.s32 %s53, %s65
      %p67 = scmp.eq.s32.totalorder %s66, 0
      %s69 = sadd.s32 %s68, 1
      %s70 = scalar_select %p67, %s68, %s69
      %p73 = pneg %p67
      %p74 = scmp.eq.s32.totalorder %s46, 3
      %p75 = por %p73, %p74
      %p76 = scmp.ne.s32.totalorder %s68, %s71
      %p77 = scmp.eq.s32.totalorder %s46, 0
      %p78 = por %p76, %p77
      %p79 = scmp.ne.s32.totalorder %s68, %s71
      %p80 = scmp.eq.s32.totalorder %s51, 3
      %p81 = por %p79, %p80
      %p82 = scmp.ne.s32.totalorder %s71, %s72
      %p83 = scmp.eq.s32.totalorder %s51, 0
      %p84 = por %p82, %p83
      %p85 = scmp.ne.s32.totalorder %s71, %s72
      %p86 = scmp.eq.s32.totalorder %s52, 3
      %p87 = por %p85, %p86
      %p89 = scmp.ne.s32.totalorder %s72, %s88
      %p90 = scmp.eq.s32.totalorder %s52, 0
      %p91 = por %p89, %p90
      %s92 = ssub.s32 %s53, %s65
      %p93 = scmp.eq.s32.totalorder %s92, 0
      %s95 = sadd.s32 %s94, 1
      %s96 = scalar_select %p93, %s94, %s95
      %p99 = pneg %p93
      %p100 = scmp.eq.s32.totalorder %s46, 3
      %p101 = por %p99, %p100
      %p102 = scmp.ne.s32.totalorder %s94, %s97
      %p103 = scmp.eq.s32.totalorder %s46, 0
      %p104 = por %p102, %p103
      %p105 = scmp.ne.s32.totalorder %s94, %s97
      %p106 = scmp.eq.s32.totalorder %s51, 3
      %p107 = por %p105, %p106
      %p108 = scmp.ne.s32.totalorder %s97, %s98
      %p109 = scmp.eq.s32.totalorder %s51, 0
      %p110 = por %p108, %p109
      %p111 = scmp.ne.s32.totalorder %s97, %s98
      %p112 = scmp.eq.s32.totalorder %s52, 3
      %p113 = por %p111, %p112
      %p115 = scmp.ne.s32.totalorder %s98, %s114
      %p116 = scmp.eq.s32.totalorder %s52, 0
      %p117 = por %p115, %p116
      %s118 = ssub.s32 1, %s54
      %s119 = ssub.s32 1, %s61
      %s120 = ssub.s32 %s118, %s119
      %s121 = ssub.s32 %s53, %s65
      %s122 = sor.u32 %s120, %s121
      %p123 = scmp.eq.s32.totalorder %s122, 0
      %s125 = sadd.s32 %s124, 1
      %s126 = scalar_select %p123, %s124, %s125
      %p129 = pneg %p123
      %p130 = scmp.eq.s32.totalorder %s46, 3
      %p131 = por %p129, %p130
      %p132 = scmp.ne.s32.totalorder %s124, %s127
      %p133 = scmp.eq.s32.totalorder %s46, 0
      %p134 = por %p132, %p133
      %p135 = scmp.ne.s32.totalorder %s124, %s127
      %p136 = scmp.eq.s32.totalorder %s51, 3
      %p137 = por %p135, %p136
      %p138 = scmp.ne.s32.totalorder %s127, %s128
      %p139 = scmp.eq.s32.totalorder %s51, 0
      %p140 = por %p138, %p139
      %p141 = scmp.ne.s32.totalorder %s127, %s128
      %p142 = scmp.eq.s32.totalorder %s52, 3
      %p143 = por %p141, %p142
      %p145 = scmp.ne.s32.totalorder %s128, %s144
      %p146 = scmp.eq.s32.totalorder %s52, 0
      %p147 = por %p145, %p146
      %s148 = ssub.s32 1, %s54
      %s149 = ssub.s32 1, %s61
      %s150 = ssub.s32 %s148, %s149
      %s151 = ssub.s32 %s53, %s65
      %s152 = sor.u32 %s150, %s151
      %p153 = scmp.eq.s32.totalorder %s152, 0
      %s155 = sadd.s32 %s154, 1
      %s156 = scalar_select %p153, %s154, %s155
      %p159 = pneg %p153
      %p160 = scmp.eq.s32.totalorder %s46, 3
      %p161 = por %p159, %p160
      %p162 = scmp.ne.s32.totalorder %s154, %s157
      %p163 = scmp.eq.s32.totalorder %s46, 0
      %p164 = por %p162, %p163
      %p165 = scmp.ne.s32.totalorder %s154, %s157
      %p166 = scmp.eq.s32.totalorder %s51, 3
      %p167 = por %p165, %p166
      %p168 = scmp.ne.s32.totalorder %s157, %s158
      %p169 = scmp.eq.s32.totalorder %s51, 0
      %p170 = por %p168, %p169
      %p171 = scmp.ne.s32.totalorder %s157, %s158
      %p172 = scmp.eq.s32.totalorder %s52, 3
      %p173 = por %p171, %p172
      %p175 = scmp.ne.s32.totalorder %s158, %s174
      %p176 = scmp.eq.s32.totalorder %s52, 0
      %p177 = por %p175, %p176
      %s179 = sadd.s32 %s178, 1
      %p182 = scmp.eq.s32.totalorder %s46, 3
      %p183 = scmp.ne.s32.totalorder %s178, %s180
      %p184 = scmp.eq.s32.totalorder %s46, 0
      %p185 = por %p183, %p184
      %p186 = scmp.ne.s32.totalorder %s178, %s180
      %p187 = scmp.eq.s32.totalorder %s51, 3
      %p188 = por %p186, %p187
      %p189 = scmp.ne.s32.totalorder %s180, %s181
      %p190 = scmp.eq.s32.totalorder %s51, 0
      %p191 = por %p189, %p190
      %p192 = scmp.ne.s32.totalorder %s180, %s181
      %p193 = scmp.eq.s32.totalorder %s52, 3
      %p194 = por %p192, %p193
      %p196 = scmp.ne.s32.totalorder %s181, %s195
      %p197 = scmp.eq.s32.totalorder %s52, 0
      %p198 = por %p196, %p197
      %s200 = sadd.s32 %s199, 1
      %p203 = scmp.eq.s32.totalorder %s46, 3
      %p204 = scmp.ne.s32.totalorder %s199, %s201
      %p205 = scmp.eq.s32.totalorder %s46, 0
      %p206 = por %p204, %p205
      %p207 = scmp.ne.s32.totalorder %s199, %s201
      %p208 = scmp.eq.s32.totalorder %s51, 3
      %p209 = por %p207, %p208
      %p210 = scmp.ne.s32.totalorder %s201, %s202
      %p211 = scmp.eq.s32.totalorder %s51, 0
      %p212 = por %p210, %p211
      %p213 = scmp.ne.s32.totalorder %s201, %s202
      %p214 = scmp.eq.s32.totalorder %s52, 3
      %p215 = por %p213, %p214
      %p217 = scmp.ne.s32.totalorder %s202, %s216
      %p218 = scmp.eq.s32.totalorder %s52, 0
      %p219 = por %p217, %p218
      %s221 = sadd.s32 %s220, 1
      %p224 = scmp.eq.s32.totalorder %s46, 3
      %p225 = scmp.ne.s32.totalorder %s220, %s222
      %p226 = scmp.eq.s32.totalorder %s46, 0
      %p227 = por %p225, %p226
      %p228 = scmp.ne.s32.totalorder %s220, %s222
      %p229 = scmp.eq.s32.totalorder %s51, 3
      %p230 = por %p228, %p229
      %p231 = scmp.ne.s32.totalorder %s222, %s223
      %p232 = scmp.eq.s32.totalorder %s51, 0
      %p233 = por %p231, %p232
      %p234 = scmp.ne.s32.totalorder %s222, %s223
      %p235 = scmp.eq.s32.totalorder %s52, 3
      %p236 = por %p234, %p235
      %p238 = scmp.ne.s32.totalorder %s223, %s237
      %p239 = scmp.eq.s32.totalorder %s52, 0
      %p240 = por %p238, %p239
      %s242 = sadd.s32 %s241, 1
      %p245 = scmp.eq.s32.totalorder %s46, 3
      %p246 = scmp.ne.s32.totalorder %s241, %s243
      %p247 = scmp.eq.s32.totalorder %s46, 0
      %p248 = por %p246, %p247
      %p249 = scmp.ne.s32.totalorder %s241, %s243
      %p250 = scmp.eq.s32.totalorder %s51, 3
      %p251 = por %p249, %p250
      %p252 = scmp.ne.s32.totalorder %s243, %s244
      %p253 = scmp.eq.s32.totalorder %s51, 0
      %p254 = por %p252, %p253
      %p255 = scmp.ne.s32.totalorder %s243, %s244
      %p256 = scmp.eq.s32.totalorder %s52, 3
      %p257 = por %p255, %p256
      %p259 = scmp.ne.s32.totalorder %s244, %s258
      %p260 = scmp.eq.s32.totalorder %s52, 0
      %p261 = por %p259, %p260
      %s263 = sadd.s32 %s262, 1
      %p266 = scmp.eq.s32.totalorder %s46, 3
      %p267 = scmp.ne.s32.totalorder %s262, %s264
      %p268 = scmp.eq.s32.totalorder %s46, 0
      %p269 = por %p267, %p268
      %p270 = scmp.ne.s32.totalorder %s262, %s264
      %p271 = scmp.eq.s32.totalorder %s51, 3
      %p272 = por %p270, %p271
      %p273 = scmp.ne.s32.totalorder %s264, %s265
      %p274 = scmp.eq.s32.totalorder %s51, 0
      %p275 = por %p273, %p274
      %p276 = scmp.ne.s32.totalorder %s264, %s265
      %p277 = scmp.eq.s32.totalorder %s52, 3
      %p278 = por %p276, %p277
      %p280 = scmp.ne.s32.totalorder %s265, %s279
      %p281 = scmp.eq.s32.totalorder %s52, 0
      %p282 = por %p280, %p281
      %s284 = sadd.s32 %s283, 1
      %p287 = scmp.eq.s32.totalorder %s46, 3
      %p288 = scmp.ne.s32.totalorder %s283, %s285
      %p289 = scmp.eq.s32.totalorder %s46, 0
      %p290 = por %p288, %p289
      %p291 = scmp.ne.s32.totalorder %s283, %s285
      %p292 = scmp.eq.s32.totalorder %s51, 3
      %p293 = por %p291, %p292
      %p294 = scmp.ne.s32.totalorder %s285, %s286
      %p295 = scmp.eq.s32.totalorder %s51, 0
      %p296 = por %p294, %p295
      %p297 = scmp.ne.s32.totalorder %s285, %s286
      %p298 = scmp.eq.s32.totalorder %s52, 3
      %p299 = por %p297, %p298
      %p301 = scmp.ne.s32.totalorder %s286, %s300
      %p302 = scmp.eq.s32.totalorder %s52, 0
      %p303 = por %p301, %p302
      %s305 = sadd.s32 %s304, 1
      %p308 = scmp.eq.s32.totalorder %s46, 3
      %p309 = scmp.ne.s32.totalorder %s304, %s306
      %p310 = scmp.eq.s32.totalorder %s46, 0
      %p311 = por %p309, %p310
      %p312 = scmp.ne.s32.totalorder %s304, %s306
      %p313 = scmp.eq.s32.totalorder %s51, 3
      %p314 = por %p312, %p313
      %p315 = scmp.ne.s32.totalorder %s306, %s307
      %p316 = scmp.eq.s32.totalorder %s51, 0
      %p317 = por %p315, %p316
      %p318 = scmp.ne.s32.totalorder %s306, %s307
      %p319 = scmp.eq.s32.totalorder %s52, 3
      %p320 = por %p318, %p319
      %p322 = scmp.ne.s32.totalorder %s307, %s321
      %p323 = scmp.eq.s32.totalorder %s52, 0
      %p324 = por %p322, %p323
      %s326 = sadd.s32 %s325, 1
      %p329 = scmp.eq.s32.totalorder %s46, 3
      %p330 = scmp.ne.s32.totalorder %s325, %s327
      %p331 = scmp.eq.s32.totalorder %s46, 0
      %p332 = por %p330, %p331
      %p333 = scmp.ne.s32.totalorder %s325, %s327
      %p334 = scmp.eq.s32.totalorder %s51, 3
      %p335 = por %p333, %p334
      %p336 = scmp.ne.s32.totalorder %s327, %s328
      %p337 = scmp.eq.s32.totalorder %s51, 0
      %p338 = por %p336, %p337
      %p339 = scmp.ne.s32.totalorder %s327, %s328
      %p340 = scmp.eq.s32.totalorder %s52, 3
      %p341 = por %p339, %p340
      %p343 = scmp.ne.s32.totalorder %s328, %s342
      %p344 = scmp.eq.s32.totalorder %s52, 0
      %p345 = por %p343, %p344
      %s347 = sadd.s32 %s346, 1
      %p350 = scmp.eq.s32.totalorder %s46, 3
      %p351 = scmp.ne.s32.totalorder %s346, %s348
      %p352 = scmp.eq.s32.totalorder %s46, 0
      %p353 = por %p351, %p352
      %p354 = scmp.ne.s32.totalorder %s346, %s348
      %p355 = scmp.eq.s32.totalorder %s51, 3
      %p356 = por %p354, %p355
      %p357 = scmp.ne.s32.totalorder %s348, %s349
      %p358 = scmp.eq.s32.totalorder %s51, 0
      %p359 = por %p357, %p358
      %p360 = scmp.ne.s32.totalorder %s348, %s349
      %p361 = scmp.eq.s32.totalorder %s52, 3
      %p362 = por %p360, %p361
      %p364 = scmp.ne.s32.totalorder %s349, %s363
      %p365 = scmp.eq.s32.totalorder %s52, 0
      %p366 = por %p364, %p365
      %s368 = sadd.s32 %s367, 1
      %p371 = scmp.eq.s32.totalorder %s46, 3
      %p372 = scmp.ne.s32.totalorder %s367, %s369
      %p373 = scmp.eq.s32.totalorder %s46, 0
      %p374 = por %p372, %p373
      %p375 = scmp.ne.s32.totalorder %s367, %s369
      %p376 = scmp.eq.s32.totalorder %s51, 3
      %p377 = por %p375, %p376
      %p378 = scmp.ne.s32.totalorder %s369, %s370
      %p379 = scmp.eq.s32.totalorder %s51, 0
      %p380 = por %p378, %p379
      %p381 = scmp.ne.s32.totalorder %s369, %s370
      %p382 = scmp.eq.s32.totalorder %s52, 3
      %p383 = por %p381, %p382
      %p385 = scmp.ne.s32.totalorder %s370, %s384
      %p386 = scmp.eq.s32.totalorder %s52, 0
      %p387 = por %p385, %p386
      %s389 = sadd.s32 %s388, 1
      %p392 = scmp.eq.s32.totalorder %s46, 3
      %p393 = scmp.ne.s32.totalorder %s388, %s390
      %p394 = scmp.eq.s32.totalorder %s46, 0
      %p395 = por %p393, %p394
      %p396 = scmp.ne.s32.totalorder %s388, %s390
      %p397 = scmp.eq.s32.totalorder %s51, 3
      %p398 = por %p396, %p397
      %p399 = scmp.ne.s32.totalorder %s390, %s391
      %p400 = scmp.eq.s32.totalorder %s51, 0
      %p401 = por %p399, %p400
      %p402 = scmp.ne.s32.totalorder %s390, %s391
      %p403 = scmp.eq.s32.totalorder %s52, 3
      %p404 = por %p402, %p403
      %p406 = scmp.ne.s32.totalorder %s391, %s405
      %p407 = scmp.eq.s32.totalorder %s52, 0
      %p408 = por %p406, %p407
      %s410 = sadd.s32 %s409, 1
      %p413 = scmp.eq.s32.totalorder %s46, 3
      %p414 = scmp.ne.s32.totalorder %s409, %s411
      %p415 = scmp.eq.s32.totalorder %s46, 0
      %p416 = por %p414, %p415
      %p417 = scmp.ne.s32.totalorder %s409, %s411
      %p418 = scmp.eq.s32.totalorder %s51, 3
      %p419 = por %p417, %p418
      %p420 = scmp.ne.s32.totalorder %s411, %s412
      %p421 = scmp.eq.s32.totalorder %s51, 0
      %p422 = por %p420, %p421
      %p423 = scmp.ne.s32.totalorder %s411, %s412
      %p424 = scmp.eq.s32.totalorder %s52, 3
      %p425 = por %p423, %p424
      %p427 = scmp.ne.s32.totalorder %s412, %s426
      %p428 = scmp.eq.s32.totalorder %s52, 0
      %p429 = por %p427, %p428
      %s431 = sadd.s32 %s430, 1
      %p434 = scmp.eq.s32.totalorder %s46, 3
      %p435 = scmp.ne.s32.totalorder %s430, %s432
      %p436 = scmp.eq.s32.totalorder %s46, 0
      %p437 = por %p435, %p436
      %p438 = scmp.ne.s32.totalorder %s430, %s432
      %p439 = scmp.eq.s32.totalorder %s51, 3
      %p440 = por %p438, %p439
      %p441 = scmp.ne.s32.totalorder %s432, %s433
      %p442 = scmp.eq.s32.totalorder %s51, 0
      %p443 = por %p441, %p442
      %p444 = scmp.ne.s32.totalorder %s432, %s433
      %p445 = scmp.eq.s32.totalorder %s52, 3
      %p446 = por %p444, %p445
      %p448 = scmp.ne.s32.totalorder %s433, %s447
      %p449 = scmp.eq.s32.totalorder %s52, 0
      %p450 = por %p448, %p449
      %s451 = ssub.s32 %s53, %s65
      %p452 = scmp.eq.s32.totalorder %s451, 0
      %s454 = sadd.s32 %s453, 1
      %s455 = scalar_select %p452, %s453, %s454
      %p458 = pneg %p452
      %p459 = scmp.eq.s32.totalorder %s46, 3
      %p460 = por %p458, %p459
      %p461 = scmp.ne.s32.totalorder %s453, %s456
      %p462 = scmp.eq.s32.totalorder %s46, 0
      %p463 = por %p461, %p462
      %p464 = scmp.ne.s32.totalorder %s453, %s456
      %p465 = scmp.eq.s32.totalorder %s51, 3
      %p466 = por %p464, %p465
      %p467 = scmp.ne.s32.totalorder %s456, %s457
      %p468 = scmp.eq.s32.totalorder %s51, 0
      %p469 = por %p467, %p468
      %p470 = scmp.ne.s32.totalorder %s456, %s457
      %p471 = scmp.eq.s32.totalorder %s52, 3
      %p472 = por %p470, %p471
      %p474 = scmp.ne.s32.totalorder %s457, %s473
      %p475 = scmp.eq.s32.totalorder %s52, 0
      %p476 = por %p474, %p475
      %s477 = ssub.s32 %s53, %s65
      %p478 = scmp.eq.s32.totalorder %s477, 0
      %s480 = sadd.s32 %s479, 1
      %s481 = scalar_select %p478, %s479, %s480
      %p484 = pneg %p478
      %p485 = scmp.eq.s32.totalorder %s46, 3
      %p486 = por %p484, %p485
      %p487 = scmp.ne.s32.totalorder %s479, %s482
      %p488 = scmp.eq.s32.totalorder %s46, 0
      %p489 = por %p487, %p488
      %p490 = scmp.ne.s32.totalorder %s479, %s482
      %p491 = scmp.eq.s32.totalorder %s51, 3
      %p492 = por %p490, %p491
      %p493 = scmp.ne.s32.totalorder %s482, %s483
      %p494 = scmp.eq.s32.totalorder %s51, 0
      %p495 = por %p493, %p494
      %p496 = scmp.ne.s32.totalorder %s482, %s483
      %p497 = scmp.eq.s32.totalorder %s52, 3
      %p498 = por %p496, %p497
      %p500 = scmp.ne.s32.totalorder %s483, %s499
      %p501 = scmp.eq.s32.totalorder %s52, 0
      %p502 = por %p500, %p501
      %p503 = scmp.le.s32.totalorder 1, %s46
      %p504 = scmp.lt.s32.totalorder %s46, 5
      %p505 = pnand %p503, %p504
      %p506 = pneg %p505
      // Predicated region
      $region9: #{tpu_custom_call.1} parent=5 // pred_check
        _
      $region10: #{tpu_custom_call.1} parent=5 // pred_check_branch
        %508 = sbr.rel (%p505) target = $region12
      $region11: #{tpu_custom_call.1} parent=5 // pred_region
        %s509 = ssub.s32 %s46, 1
        // Predicated region
        $region13: #{tpu_custom_call.1} parent=11 // pred_check
          %p510 = pneg %p191
        $region14: #{tpu_custom_call.1} parent=11 // pred_check_branch
          %512 = sbr.rel (%p510) target = $region16
        $region15: #{tpu_custom_call.1} parent=11 // pred_region
          %s514 = ssub.s32 6144, 6144
          %515 = vsyncadd [#allocation9], %s514
          %s516 = sshll.u32 [#allocation10], 4
          %s517 = int_to_ptr.vmem [resolvable:$true] %s516
          %522 = dma.hbm_to_vmem [thread:$0]  %s4, 6144, %s517, [#allocation9], 64, 64, 4
        $region16: #{tpu_custom_call.1} parent=11 // pred_fallthru
          _
        // Predicated region
        $region17: #{tpu_custom_call.1} parent=11 // pred_check
          %p523 = pneg %p212
        $region18: #{tpu_custom_call.1} parent=11 // pred_check_branch
          %525 = sbr.rel (%p523) target = $region20
        $region19: #{tpu_custom_call.1} parent=11 // pred_region
          %s527 = ssub.s32 32, 32
          %528 = vsyncadd [#allocation12], %s527
          %s529 = sshll.u32 [#allocation11], 4
          %s530 = int_to_ptr.vmem [resolvable:$true] %s529
          %535 = dma.hbm_to_vmem [thread:$0]  %s5, 32, %s530, [#allocation12], 16, 16, 1
        $region20: #{tpu_custom_call.1} parent=11 // pred_fallthru
          _
        // Predicated region
        $region21: #{tpu_custom_call.1} parent=11 // pred_check
          %p536 = pneg %p233
        $region22: #{tpu_custom_call.1} parent=11 // pred_check_branch
          %538 = sbr.rel (%p536) target = $region24
        $region23: #{tpu_custom_call.1} parent=11 // pred_region
          %s540 = ssub.s32 1024, 1024
          %541 = vsyncadd [#allocation12], %s540
          %s542 = sshll.u32 [#allocation13], 4
          %s543 = int_to_ptr.vmem [resolvable:$true] %s542
          %548 = dma.hbm_to_vmem [thread:$0]  %s6, 1024, %s543, [#allocation12], 64, 64, 4
        $region24: #{tpu_custom_call.1} parent=11 // pred_fallthru
          _
        // Predicated region
        $region25: #{tpu_custom_call.1} parent=11 // pred_check
          %p549 = pneg %p254
        $region26: #{tpu_custom_call.1} parent=11 // pred_check_branch
          %551 = sbr.rel (%p549) target = $region28
        $region27: #{tpu_custom_call.1} parent=11 // pred_region
          %s553 = ssub.s32 32, 32
          %554 = vsyncadd [#allocation15], %s553
          %s555 = sshll.u32 [#allocation14], 4
          %s556 = int_to_ptr.vmem [resolvable:$true] %s555
          %561 = dma.hbm_to_vmem [thread:$0]  %s7, 32, %s556, [#allocation15], 16, 16, 1
        $region28: #{tpu_custom_call.1} parent=11 // pred_fallthru
          _
        // Predicated region
        $region29: #{tpu_custom_call.1} parent=11 // pred_check
          %p562 = pneg %p275
        $region30: #{tpu_custom_call.1} parent=11 // pred_check_branch
          %564 = sbr.rel (%p562) target = $region32
        $region31: #{tpu_custom_call.1} parent=11 // pred_region
          %s566 = ssub.s32 6144, 6144
          %567 = vsyncadd [#allocation15], %s566
          %s568 = sshll.u32 [#allocation16], 4
          %s569 = int_to_ptr.vmem [resolvable:$true] %s568
          %574 = dma.hbm_to_vmem [thread:$0]  %s8, 6144, %s569, [#allocation15], 64, 64, 4
        $region32: #{tpu_custom_call.1} parent=11 // pred_fallthru
          _
        // Predicated region
        $region33: #{tpu_custom_call.1} parent=11 // pred_check
          %p575 = pneg %p296
        $region34: #{tpu_custom_call.1} parent=11 // pred_check_branch
          %577 = sbr.rel (%p575) target = $region36
        $region35: #{tpu_custom_call.1} parent=11 // pred_region
          %s579 = ssub.s32 32, 32
          %580 = vsyncadd [#allocation18], %s579
          %s581 = sshll.u32 [#allocation17], 4
          %s582 = int_to_ptr.vmem [resolvable:$true] %s581
          %587 = dma.hbm_to_vmem [thread:$0]  %s9, 32, %s582, [#allocation18], 16, 16, 1
        $region36: #{tpu_custom_call.1} parent=11 // pred_fallthru
          _
        // Predicated region
        $region37: #{tpu_custom_call.1} parent=11 // pred_check
          %p588 = pneg %p317
        $region38: #{tpu_custom_call.1} parent=11 // pred_check_branch
          %590 = sbr.rel (%p588) target = $region40
        $region39: #{tpu_custom_call.1} parent=11 // pred_region
          %s592 = ssub.s32 4096, 4096
          %593 = vsyncadd [#allocation18], %s592
          %s594 = sshll.u32 [#allocation19], 4
          %s595 = int_to_ptr.vmem [resolvable:$true] %s594
          %600 = dma.hbm_to_vmem [thread:$0]  %s10, 4096, %s595, [#allocation18], 64, 64, 4
        $region40: #{tpu_custom_call.1} parent=11 // pred_fallthru
          _
        // Predicated region
        $region41: #{tpu_custom_call.1} parent=11 // pred_check
          %p601 = pneg %p338
        $region42: #{tpu_custom_call.1} parent=11 // pred_check_branch
          %603 = sbr.rel (%p601) target = $region44
        $region43: #{tpu_custom_call.1} parent=11 // pred_region
          %s605 = ssub.s32 32, 32
          %606 = vsyncadd [#allocation21], %s605
          %s607 = sshll.u32 [#allocation20], 4
          %s608 = int_to_ptr.vmem [resolvable:$true] %s607
          %613 = dma.hbm_to_vmem [thread:$0]  %s11, 32, %s608, [#allocation21], 16, 16, 1
        $region44: #{tpu_custom_call.1} parent=11 // pred_fallthru
          _
        // Predicated region
        $region45: #{tpu_custom_call.1} parent=11 // pred_check
          %p614 = pneg %p359
        $region46: #{tpu_custom_call.1} parent=11 // pred_check_branch
          %616 = sbr.rel (%p614) target = $region48
        $region47: #{tpu_custom_call.1} parent=11 // pred_region
          %s618 = ssub.s32 1024, 1024
          %619 = vsyncadd [#allocation21], %s618
          %s620 = sshll.u32 [#allocation22], 4
          %s621 = int_to_ptr.vmem [resolvable:$true] %s620
          %626 = dma.hbm_to_vmem [thread:$0]  %s12, 1024, %s621, [#allocation21], 64, 64, 4
        $region48: #{tpu_custom_call.1} parent=11 // pred_fallthru
          _
        // Predicated region
        $region49: #{tpu_custom_call.1} parent=11 // pred_check
          %p627 = pneg %p380
        $region50: #{tpu_custom_call.1} parent=11 // pred_check_branch
          %629 = sbr.rel (%p627) target = $region52
        $region51: #{tpu_custom_call.1} parent=11 // pred_region
          %s631 = ssub.s32 1024, 1024
          %632 = vsyncadd [#allocation24], %s631
          %s633 = sshll.u32 [#allocation23], 4
          %s634 = int_to_ptr.vmem [resolvable:$true] %s633
          %639 = dma.hbm_to_vmem [thread:$0]  %s13, 1024, %s634, [#allocation24], 64, 64, 4
        $region52: #{tpu_custom_call.1} parent=11 // pred_fallthru
          _
        // Predicated region
        $region53: #{tpu_custom_call.1} parent=11 // pred_check
          %p640 = pneg %p401
        $region54: #{tpu_custom_call.1} parent=11 // pred_check_branch
          %642 = sbr.rel (%p640) target = $region56
        $region55: #{tpu_custom_call.1} parent=11 // pred_region
          %s644 = ssub.s32 32, 32
          %645 = vsyncadd [#allocation24], %s644
          %s646 = sshll.u32 [#allocation25], 4
          %s647 = int_to_ptr.vmem [resolvable:$true] %s646
          %652 = dma.hbm_to_vmem [thread:$0]  %s14, 32, %s647, [#allocation24], 16, 16, 1
        $region56: #{tpu_custom_call.1} parent=11 // pred_fallthru
          _
        // Predicated region
        $region57: #{tpu_custom_call.1} parent=11 // pred_check
          %p653 = pneg %p422
        $region58: #{tpu_custom_call.1} parent=11 // pred_check_branch
          %655 = sbr.rel (%p653) target = $region60
        $region59: #{tpu_custom_call.1} parent=11 // pred_region
          %s657 = ssub.s32 4096, 4096
          %658 = vsyncadd [#allocation27], %s657
          %s659 = sshll.u32 [#allocation26], 4
          %s660 = int_to_ptr.vmem [resolvable:$true] %s659
          %665 = dma.hbm_to_vmem [thread:$0]  %s15, 4096, %s660, [#allocation27], 64, 64, 4
        $region60: #{tpu_custom_call.1} parent=11 // pred_fallthru
          _
        // Predicated region
        $region61: #{tpu_custom_call.1} parent=11 // pred_check
          %p666 = pneg %p443
        $region62: #{tpu_custom_call.1} parent=11 // pred_check_branch
          %668 = sbr.rel (%p666) target = $region64
        $region63: #{tpu_custom_call.1} parent=11 // pred_region
          %s670 = ssub.s32 32, 32
          %671 = vsyncadd [#allocation27], %s670
          %s672 = sshll.u32 [#allocation28], 4
          %s673 = int_to_ptr.vmem [resolvable:$true] %s672
          %678 = dma.hbm_to_vmem [thread:$0]  %s16, 32, %s673, [#allocation27], 16, 16, 1
        $region64: #{tpu_custom_call.1} parent=11 // pred_fallthru
          _
      $region12: #{tpu_custom_call.1} parent=5 // pred_fallthru
        _
      %p679 = scmp.lt.s32.totalorder %s46, 4
      // Predicated region
      $region65: #{tpu_custom_call.1} parent=5 // pred_check
        %p680 = pneg %p679
      $region66: #{tpu_custom_call.1} parent=5 // pred_check_branch
        %682 = sbr.rel (%p680) target = $region68
      $region67: #{tpu_custom_call.1} parent=5 // pred_region
        // Predicated region
        $region69: #{tpu_custom_call.1} parent=67 // pred_check
          %p683 = pneg %p78
        $region70: #{tpu_custom_call.1} parent=67 // pred_check_branch
          %685 = sbr.rel (%p683) target = $region72
        $region71: #{tpu_custom_call.1} parent=67 // pred_region
          %s686 = sand.u32 %s68, 1
          %s687 = scalar_lea.sflag [#allocation3], %s686
          %s688 = sand.u32 %s68, 1
          %s689 = smul.addr %s688, 128
          %s690 = scalar_lea.vmem [#allocation2], %s689
          %s691 = smul.u32 2, %s53
          %s693 = ssub.s32 2048, 2048
          %694 = vsyncadd %s687, %s693
          %s695 = smul.addr %s691, 8
          %s696 = smul.addr %s695, 128
          %s697 = scalar_lea.hbm %s0, %s696
          %s698 = sshll.u32 %s690, 4
          %s699 = int_to_ptr.vmem [resolvable:$true] %s698
          %704 = dma.hbm_to_vmem [thread:$0]  %s697, 2048, %s699, %s687, 128, 128, 8
        $region72: #{tpu_custom_call.1} parent=67 // pred_fallthru
          _
        // Predicated region
        $region73: #{tpu_custom_call.1} parent=67 // pred_check
          %p705 = pneg %p104
        $region74: #{tpu_custom_call.1} parent=67 // pred_check_branch
          %707 = sbr.rel (%p705) target = $region76
        $region75: #{tpu_custom_call.1} parent=67 // pred_region
          %s708 = sand.u32 %s46, 1
          %s709 = scalar_lea.sflag [#allocation6], %s708
          %s710 = sand.u32 %s94, 1
          %s711 = smul.addr %s710, 128
          %s712 = scalar_lea.vmem [#allocation5], %s711
          %s713 = smul.u32 2, %s53
          %s715 = ssub.s32 2048, 2048
          %716 = vsyncadd %s709, %s715
          %s717 = smul.addr %s713, 8
          %s718 = smul.addr %s717, 128
          %s719 = scalar_lea.hbm %s1, %s718
          %s720 = sshll.u32 %s712, 4
          %s721 = int_to_ptr.vmem [resolvable:$true] %s720
          %726 = dma.hbm_to_vmem [thread:$0]  %s719, 2048, %s721, %s709, 128, 128, 8
        $region76: #{tpu_custom_call.1} parent=67 // pred_fallthru
          _
        // Predicated region
        $region77: #{tpu_custom_call.1} parent=67 // pred_check
          %p727 = pneg %p134
        $region78: #{tpu_custom_call.1} parent=67 // pred_check_branch
          %729 = sbr.rel (%p727) target = $region80
        $region79: #{tpu_custom_call.1} parent=67 // pred_region
          %s730 = sand.u32 %s46, 1
          %s731 = scalar_lea.sflag [#allocation6], %s730
          %s732 = sand.u32 %s124, 1
          %s733 = smul.addr %s732, 128
          %s734 = scalar_lea.vmem [#allocation7], %s733
          %s735 = ssub.s32 1, %s54
          %s736 = smul.u32 2, %s53
          %s738 = ssub.s32 2048, 2048
          %739 = vsyncadd %s731, %s738
          %s740 = smul.addr %s736, 8
          %s741 = smul.addr %s735, 32
          %s742 = sadd.s32 %s740, %s741
          %s743 = smul.addr %s742, 128
          %s744 = scalar_lea.hbm %s2, %s743
          %s745 = sshll.u32 %s734, 4
          %s746 = int_to_ptr.vmem [resolvable:$true] %s745
          %751 = dma.hbm_to_vmem [thread:$0]  %s744, 2048, %s746, %s731, 128, 128, 8
        $region80: #{tpu_custom_call.1} parent=67 // pred_fallthru
          _
        // Predicated region
        $region81: #{tpu_custom_call.1} parent=67 // pred_check
          %p752 = pneg %p164
        $region82: #{tpu_custom_call.1} parent=67 // pred_check_branch
          %754 = sbr.rel (%p752) target = $region84
        $region83: #{tpu_custom_call.1} parent=67 // pred_region
          %s755 = sand.u32 %s46, 1
          %s756 = scalar_lea.sflag [#allocation9], %s755
          %s757 = sand.u32 %s154, 1
          %s758 = smul.addr %s757, 128
          %s759 = scalar_lea.vmem [#allocation8], %s758
          %s760 = ssub.s32 1, %s54
          %s761 = smul.u32 2, %s53
          %s763 = ssub.s32 2048, 2048
          %764 = vsyncadd %s756, %s763
          %s765 = smul.addr %s761, 8
          %s766 = smul.addr %s760, 32
          %s767 = sadd.s32 %s765, %s766
          %s768 = smul.addr %s767, 128
          %s769 = scalar_lea.hbm %s3, %s768
          %s770 = sshll.u32 %s759, 4
          %s771 = int_to_ptr.vmem [resolvable:$true] %s770
          %776 = dma.hbm_to_vmem [thread:$0]  %s769, 2048, %s771, %s756, 128, 128, 8
        $region84: #{tpu_custom_call.1} parent=67 // pred_fallthru
          _
      $region68: #{tpu_custom_call.1} parent=5 // pred_fallthru
        _
      %p777 = scmp.le.s32.totalorder 1, %s46
      %p778 = scmp.lt.s32.totalorder %s46, 5
      %p779 = pnand %p777, %p778
      %p780 = pneg %p779
      // Predicated region
      $region85: #{tpu_custom_call.1} parent=5 // pred_check
        _
      $region86: #{tpu_custom_call.1} parent=5 // pred_check_branch
        %782 = sbr.rel (%p779) target = $region88
      $region87: #{tpu_custom_call.1} parent=5 // pred_region
        %s783 = ssub.s32 %s46, 1
        %s784 = sand.u32 %s71, 1
        %s785 = scalar_lea.sflag [#allocation3], %s784
        %s786 = sand.u32 %s71, 1
        %s787 = smul.addr %s786, 128
        %s788 = scalar_lea.vmem [#allocation2], %s787
        // Predicated region
        $region89: #{tpu_custom_call.1} parent=87 // pred_check
          %p789 = pneg %p84
        $region90: #{tpu_custom_call.1} parent=87 // pred_check_branch
          %791 = sbr.rel (%p789) target = $region92
        $region91: #{tpu_custom_call.1} parent=87 // pred_region
          %792 = dma.done %s785, 2048
        $region92: #{tpu_custom_call.1} parent=87 // pred_fallthru
          _
        %s793 = sand.u32 %s51, 1
        %s794 = scalar_lea.sflag [#allocation6], %s793
        %s795 = sand.u32 %s97, 1
        %s796 = smul.addr %s795, 128
        %s797 = scalar_lea.vmem [#allocation5], %s796
        // Predicated region
        $region93: #{tpu_custom_call.1} parent=87 // pred_check
          %p798 = pneg %p110
        $region94: #{tpu_custom_call.1} parent=87 // pred_check_branch
          %800 = sbr.rel (%p798) target = $region96
        $region95: #{tpu_custom_call.1} parent=87 // pred_region
          %801 = dma.done %s794, 2048
        $region96: #{tpu_custom_call.1} parent=87 // pred_fallthru
          _
        %s802 = sand.u32 %s51, 1
        %s803 = scalar_lea.sflag [#allocation6], %s802
        %s804 = sand.u32 %s127, 1
        %s805 = smul.addr %s804, 128
        %s806 = scalar_lea.vmem [#allocation7], %s805
        // Predicated region
        $region97: #{tpu_custom_call.1} parent=87 // pred_check
          %p807 = pneg %p140
        $region98: #{tpu_custom_call.1} parent=87 // pred_check_branch
          %809 = sbr.rel (%p807) target = $region100
        $region99: #{tpu_custom_call.1} parent=87 // pred_region
          %810 = dma.done %s803, 2048
        $region100: #{tpu_custom_call.1} parent=87 // pred_fallthru
          _
        %s811 = sand.u32 %s51, 1
        %s812 = scalar_lea.sflag [#allocation9], %s811
        %s813 = sand.u32 %s157, 1
        %s814 = smul.addr %s813, 128
        %s815 = scalar_lea.vmem [#allocation8], %s814
        // Predicated region
        $region101: #{tpu_custom_call.1} parent=87 // pred_check
          %p816 = pneg %p170
        $region102: #{tpu_custom_call.1} parent=87 // pred_check_branch
          %818 = sbr.rel (%p816) target = $region104
        $region103: #{tpu_custom_call.1} parent=87 // pred_region
          %819 = dma.done %s812, 2048
        $region104: #{tpu_custom_call.1} parent=87 // pred_fallthru
          _
        // Predicated region
        $region105: #{tpu_custom_call.1} parent=87 // pred_check
          %p820 = pneg %p191
        $region106: #{tpu_custom_call.1} parent=87 // pred_check_branch
          %822 = sbr.rel (%p820) target = $region108
        $region107: #{tpu_custom_call.1} parent=87 // pred_region
          %823 = dma.done [#allocation9], 6144
        $region108: #{tpu_custom_call.1} parent=87 // pred_fallthru
          _
        // Predicated region
        $region109: #{tpu_custom_call.1} parent=87 // pred_check
          %p824 = pneg %p212
        $region110: #{tpu_custom_call.1} parent=87 // pred_check_branch
          %826 = sbr.rel (%p824) target = $region112
        $region111: #{tpu_custom_call.1} parent=87 // pred_region
          %827 = dma.done [#allocation12], 32
        $region112: #{tpu_custom_call.1} parent=87 // pred_fallthru
          _
        // Predicated region
        $region113: #{tpu_custom_call.1} parent=87 // pred_check
          %p828 = pneg %p233
        $region114: #{tpu_custom_call.1} parent=87 // pred_check_branch
          %830 = sbr.rel (%p828) target = $region116
        $region115: #{tpu_custom_call.1} parent=87 // pred_region
          %831 = dma.done [#allocation12], 1024
        $region116: #{tpu_custom_call.1} parent=87 // pred_fallthru
          _
        // Predicated region
        $region117: #{tpu_custom_call.1} parent=87 // pred_check
          %p832 = pneg %p254
        $region118: #{tpu_custom_call.1} parent=87 // pred_check_branch
          %834 = sbr.rel (%p832) target = $region120
        $region119: #{tpu_custom_call.1} parent=87 // pred_region
          %835 = dma.done [#allocation15], 32
        $region120: #{tpu_custom_call.1} parent=87 // pred_fallthru
          _
        // Predicated region
        $region121: #{tpu_custom_call.1} parent=87 // pred_check
          %p836 = pneg %p275
        $region122: #{tpu_custom_call.1} parent=87 // pred_check_branch
          %838 = sbr.rel (%p836) target = $region124
        $region123: #{tpu_custom_call.1} parent=87 // pred_region
          %839 = dma.done [#allocation15], 6144
        $region124: #{tpu_custom_call.1} parent=87 // pred_fallthru
          _
        // Predicated region
        $region125: #{tpu_custom_call.1} parent=87 // pred_check
          %p840 = pneg %p296
        $region126: #{tpu_custom_call.1} parent=87 // pred_check_branch
          %842 = sbr.rel (%p840) target = $region128
        $region127: #{tpu_custom_call.1} parent=87 // pred_region
          %843 = dma.done [#allocation18], 32
        $region128: #{tpu_custom_call.1} parent=87 // pred_fallthru
          _
        // Predicated region
        $region129: #{tpu_custom_call.1} parent=87 // pred_check
          %p844 = pneg %p317
        $region130: #{tpu_custom_call.1} parent=87 // pred_check_branch
          %846 = sbr.rel (%p844) target = $region132
        $region131: #{tpu_custom_call.1} parent=87 // pred_region
          %847 = dma.done [#allocation18], 4096
        $region132: #{tpu_custom_call.1} parent=87 // pred_fallthru
          _
        // Predicated region
        $region133: #{tpu_custom_call.1} parent=87 // pred_check
          %p848 = pneg %p338
        $region134: #{tpu_custom_call.1} parent=87 // pred_check_branch
          %850 = sbr.rel (%p848) target = $region136
        $region135: #{tpu_custom_call.1} parent=87 // pred_region
          %851 = dma.done [#allocation21], 32
        $region136: #{tpu_custom_call.1} parent=87 // pred_fallthru
          _
        // Predicated region
        $region137: #{tpu_custom_call.1} parent=87 // pred_check
          %p852 = pneg %p359
        $region138: #{tpu_custom_call.1} parent=87 // pred_check_branch
          %854 = sbr.rel (%p852) target = $region140
        $region139: #{tpu_custom_call.1} parent=87 // pred_region
          %855 = dma.done [#allocation21], 1024
        $region140: #{tpu_custom_call.1} parent=87 // pred_fallthru
          _
        // Predicated region
        $region141: #{tpu_custom_call.1} parent=87 // pred_check
          %p856 = pneg %p380
        $region142: #{tpu_custom_call.1} parent=87 // pred_check_branch
          %858 = sbr.rel (%p856) target = $region144
        $region143: #{tpu_custom_call.1} parent=87 // pred_region
          %859 = dma.done [#allocation24], 1024
        $region144: #{tpu_custom_call.1} parent=87 // pred_fallthru
          _
        // Predicated region
        $region145: #{tpu_custom_call.1} parent=87 // pred_check
          %p860 = pneg %p401
        $region146: #{tpu_custom_call.1} parent=87 // pred_check_branch
          %862 = sbr.rel (%p860) target = $region148
        $region147: #{tpu_custom_call.1} parent=87 // pred_region
          %863 = dma.done [#allocation24], 32
        $region148: #{tpu_custom_call.1} parent=87 // pred_fallthru
          _
        // Predicated region
        $region149: #{tpu_custom_call.1} parent=87 // pred_check
          %p864 = pneg %p422
        $region150: #{tpu_custom_call.1} parent=87 // pred_check_branch
          %866 = sbr.rel (%p864) target = $region152
        $region151: #{tpu_custom_call.1} parent=87 // pred_region
          %867 = dma.done [#allocation27], 4096
        $region152: #{tpu_custom_call.1} parent=87 // pred_fallthru
          _
        // Predicated region
        $region153: #{tpu_custom_call.1} parent=87 // pred_check
          %p868 = pneg %p443
        $region154: #{tpu_custom_call.1} parent=87 // pred_check_branch
          %870 = sbr.rel (%p868) target = $region156
        $region155: #{tpu_custom_call.1} parent=87 // pred_region
          %871 = dma.done [#allocation27], 32
        $region156: #{tpu_custom_call.1} parent=87 // pred_fallthru
          _
        %s872 = sand.u32 %s71, 1
        %s873 = scalar_lea.sflag [#allocation3], %s872
        %s874 = sand.u32 %s71, 1
        %s875 = smul.addr %s874, 128
        %s876 = scalar_lea.vmem [#allocation2], %s875
        %p877 = pneg %p84
        %p878 = pneg %p81
        %s879 = sand.u32 %s51, 1
        %s880 = scalar_lea.sflag [#allocation6], %s879
        %s881 = sand.u32 %s97, 1
        %s882 = smul.addr %s881, 128
        %s883 = scalar_lea.vmem [#allocation5], %s882
        %p884 = pneg %p110
        %p885 = pneg %p107
        %s886 = sand.u32 %s51, 1
        %s887 = scalar_lea.sflag [#allocation6], %s886
        %s888 = sand.u32 %s127, 1
        %s889 = smul.addr %s888, 128
        %s890 = scalar_lea.vmem [#allocation7], %s889
        %p891 = pneg %p140
        %p892 = pneg %p137
        %s893 = sand.u32 %s51, 1
        %s894 = scalar_lea.sflag [#allocation9], %s893
        %s895 = sand.u32 %s157, 1
        %s896 = smul.addr %s895, 128
        %s897 = scalar_lea.vmem [#allocation8], %s896
        %p898 = pneg %p170
        %p899 = pneg %p167
        %p900 = pneg %p191
        %p901 = pneg %p188
        %p902 = pneg %p212
        %p903 = pneg %p209
        %p904 = pneg %p233
        %p905 = pneg %p230
        %p906 = pneg %p254
        %p907 = pneg %p251
        %p908 = pneg %p275
        %p909 = pneg %p272
        %p910 = pneg %p296
        %p911 = pneg %p293
        %p912 = pneg %p317
        %p913 = pneg %p314
        %p914 = pneg %p338
        %p915 = pneg %p335
        %p916 = pneg %p359
        %p917 = pneg %p356
        %p918 = pneg %p380
        %p919 = pneg %p377
        %p920 = pneg %p401
        %p921 = pneg %p398
        %p922 = pneg %p422
        %p923 = pneg %p419
        %p924 = pneg %p443
        %p925 = pneg %p440
        %p926 = pneg %p469
        %p927 = pneg %p466
        %s928 = sand.u32 %s456, 1
        %s929 = scalar_lea.sflag [#allocation4], %s928
        %s930 = sand.u32 %s456, 1
        %s931 = smul.addr %s930, 128
        %s932 = scalar_lea.vmem [#allocation29], %s931
        %p933 = pneg %p495
        %p934 = pneg %p492
        %s935 = sand.u32 %s482, 1
        %s936 = scalar_lea.sflag [#allocation31], %s935
        %s937 = sand.u32 %s482, 1
        %s938 = smul.addr %s937, 128
        %s939 = scalar_lea.vmem [#allocation30], %s938
        %s940 = smul.u32 2, %s55
        %s941 = smul.u32 2, %s55
        %s942 = ssub.s32 1, %s56
        %s943 = smul.u32 2, %s55
        %s944 = ssub.s32 1, %s56
        %s945 = smul.u32 2, %s55
        %s946 = smul.u32 2, %s55
        %s947 = smul.u32 2, %s55
        %p949 = scmp.eq.s32.totalorder %s56, 0
        // Predicated region
        $region157: #{tpu_custom_call.1} parent=87 // pred_check
          %p950 = pneg %p949
        $region158: #{tpu_custom_call.1} parent=87 // pred_check_branch
          %952 = sbr.rel (%p950) target = $region160
        $region159: #{tpu_custom_call.1} parent=87 // pred_region
          %v953 = vld [vmem:[%s788] sm:$0xff]
          %v954 = vld [vmem:[%s788 + $0x8] sm:$0xff]
          %v955 = vld [vmem:[%s788 + $0x10] sm:$0xff]
          %v956 = vld [vmem:[%s788 + $0x18] sm:$0xff]
          %v957 = vld [vmem:[%s788 + $0x20] sm:$0xff]
          %v958 = vld [vmem:[%s788 + $0x28] sm:$0xff]
          %v959 = vld [vmem:[%s788 + $0x30] sm:$0xff]
          %v960 = vld [vmem:[%s788 + $0x38] sm:$0xff]
          %v961 = vld [vmem:[%s788 + $0x40] sm:$0xff]
          %v962 = vld [vmem:[%s788 + $0x48] sm:$0xff]
          %v963 = vld [vmem:[%s788 + $0x50] sm:$0xff]
          %v964 = vld [vmem:[%s788 + $0x58] sm:$0xff]
          %v965 = vld [vmem:[%s788 + $0x60] sm:$0xff]
          %v966 = vld [vmem:[%s788 + $0x68] sm:$0xff]
          %v967 = vld [vmem:[%s788 + $0x70] sm:$0xff]
          %v968 = vld [vmem:[%s788 + $0x78] sm:$0xff]
          %vm969 = vcmask 261120
          %970 = vst.msk [vmem:[%s932] sm:$0xff] %vm969, %v953
          %971 = vst.msk [vmem:[%s932 + $0x8] sm:$0xff] %vm969, %v954
          %972 = vst.msk [vmem:[%s932 + $0x10] sm:$0xff] %vm969, %v955
          %973 = vst.msk [vmem:[%s932 + $0x18] sm:$0xff] %vm969, %v956
          %974 = vst.msk [vmem:[%s932 + $0x20] sm:$0xff] %vm969, %v957
          %975 = vst.msk [vmem:[%s932 + $0x28] sm:$0xff] %vm969, %v958
          %976 = vst.msk [vmem:[%s932 + $0x30] sm:$0xff] %vm969, %v959
          %977 = vst.msk [vmem:[%s932 + $0x38] sm:$0xff] %vm969, %v960
          %978 = vst.msk [vmem:[%s932 + $0x40] sm:$0xff] %vm969, %v961
          %979 = vst.msk [vmem:[%s932 + $0x48] sm:$0xff] %vm969, %v962
          %980 = vst.msk [vmem:[%s932 + $0x50] sm:$0xff] %vm969, %v963
          %981 = vst.msk [vmem:[%s932 + $0x58] sm:$0xff] %vm969, %v964
          %982 = vst.msk [vmem:[%s932 + $0x60] sm:$0xff] %vm969, %v965
          %983 = vst.msk [vmem:[%s932 + $0x68] sm:$0xff] %vm969, %v966
          %984 = vst.msk [vmem:[%s932 + $0x70] sm:$0xff] %vm969, %v967
          %985 = vst.msk [vmem:[%s932 + $0x78] sm:$0xff] %vm969, %v968
          %v986 = vld [vmem:[%s797] sm:$0xff]
          %v987 = vld [vmem:[%s797 + $0x8] sm:$0xff]
          %v988 = vld [vmem:[%s797 + $0x10] sm:$0xff]
          %v989 = vld [vmem:[%s797 + $0x18] sm:$0xff]
          %v990 = vld [vmem:[%s797 + $0x20] sm:$0xff]
          %v991 = vld [vmem:[%s797 + $0x28] sm:$0xff]
          %v992 = vld [vmem:[%s797 + $0x30] sm:$0xff]
          %v993 = vld [vmem:[%s797 + $0x38] sm:$0xff]
          %v994 = vld [vmem:[%s797 + $0x40] sm:$0xff]
          %v995 = vld [vmem:[%s797 + $0x48] sm:$0xff]
          %v996 = vld [vmem:[%s797 + $0x50] sm:$0xff]
          %v997 = vld [vmem:[%s797 + $0x58] sm:$0xff]
          %v998 = vld [vmem:[%s797 + $0x60] sm:$0xff]
          %v999 = vld [vmem:[%s797 + $0x68] sm:$0xff]
          %v1000 = vld [vmem:[%s797 + $0x70] sm:$0xff]
          %v1001 = vld [vmem:[%s797 + $0x78] sm:$0xff]
          %1002 = vst.msk [vmem:[%s939] sm:$0xff] %vm969, %v986
          %1003 = vst.msk [vmem:[%s939 + $0x8] sm:$0xff] %vm969, %v987
          %1004 = vst.msk [vmem:[%s939 + $0x10] sm:$0xff] %vm969, %v988
          %1005 = vst.msk [vmem:[%s939 + $0x18] sm:$0xff] %vm969, %v989
          %1006 = vst.msk [vmem:[%s939 + $0x20] sm:$0xff] %vm969, %v990
          %1007 = vst.msk [vmem:[%s939 + $0x28] sm:$0xff] %vm969, %v991
          %1008 = vst.msk [vmem:[%s939 + $0x30] sm:$0xff] %vm969, %v992
          %1009 = vst.msk [vmem:[%s939 + $0x38] sm:$0xff] %vm969, %v993
          %1010 = vst.msk [vmem:[%s939 + $0x40] sm:$0xff] %vm969, %v994
          %1011 = vst.msk [vmem:[%s939 + $0x48] sm:$0xff] %vm969, %v995
          %1012 = vst.msk [vmem:[%s939 + $0x50] sm:$0xff] %vm969, %v996
          %1013 = vst.msk [vmem:[%s939 + $0x58] sm:$0xff] %vm969, %v997
          %1014 = vst.msk [vmem:[%s939 + $0x60] sm:$0xff] %vm969, %v998
          %1015 = vst.msk [vmem:[%s939 + $0x68] sm:$0xff] %vm969, %v999
          %1016 = vst.msk [vmem:[%s939 + $0x70] sm:$0xff] %vm969, %v1000
          %1017 = vst.msk [vmem:[%s939 + $0x78] sm:$0xff] %vm969, %v1001
        $region160: #{tpu_custom_call.1} parent=87 // pred_fallthru
          _
        %v1018 = vld [vmem:[%s932] sm:$0xff]
        %v1019 = vld [vmem:[%s932 + $0x8] sm:$0xff]
        %v1020 = vld [vmem:[%s932 + $0x10] sm:$0xff]
        %v1021 = vld [vmem:[%s932 + $0x18] sm:$0xff]
        %v1022 = vld [vmem:[%s932 + $0x20] sm:$0xff]
        %v1023 = vld [vmem:[%s932 + $0x28] sm:$0xff]
        %v1024 = vld [vmem:[%s932 + $0x30] sm:$0xff]
        %v1025 = vld [vmem:[%s932 + $0x38] sm:$0xff]
        %v1026 = vld [vmem:[%s932 + $0x40] sm:$0xff]
        %v1027 = vld [vmem:[%s932 + $0x48] sm:$0xff]
        %v1028 = vld [vmem:[%s932 + $0x50] sm:$0xff]
        %v1029 = vld [vmem:[%s932 + $0x58] sm:$0xff]
        %v1030 = vld [vmem:[%s932 + $0x60] sm:$0xff]
        %v1031 = vld [vmem:[%s932 + $0x68] sm:$0xff]
        %v1032 = vld [vmem:[%s932 + $0x70] sm:$0xff]
        %v1033 = vld [vmem:[%s932 + $0x78] sm:$0xff]
        %v1034 = vld [vmem:[%s939] sm:$0xff]
        %v1035 = vld [vmem:[%s939 + $0x8] sm:$0xff]
        %v1036 = vld [vmem:[%s939 + $0x10] sm:$0xff]
        %v1037 = vld [vmem:[%s939 + $0x18] sm:$0xff]
        %v1038 = vld [vmem:[%s939 + $0x20] sm:$0xff]
        %v1039 = vld [vmem:[%s939 + $0x28] sm:$0xff]
        %v1040 = vld [vmem:[%s939 + $0x30] sm:$0xff]
        %v1041 = vld [vmem:[%s939 + $0x38] sm:$0xff]
        %v1042 = vld [vmem:[%s939 + $0x40] sm:$0xff]
        %v1043 = vld [vmem:[%s939 + $0x48] sm:$0xff]
        %v1044 = vld [vmem:[%s939 + $0x50] sm:$0xff]
        %v1045 = vld [vmem:[%s939 + $0x58] sm:$0xff]
        %v1046 = vld [vmem:[%s939 + $0x60] sm:$0xff]
        %v1047 = vld [vmem:[%s939 + $0x68] sm:$0xff]
        %v1048 = vld [vmem:[%s939 + $0x70] sm:$0xff]
        %v1049 = vld [vmem:[%s939 + $0x78] sm:$0xff]
        %s1050 = smul.u32 %s56, 48
        %s1051 = smul.addr %s1050, 4
        %s1052 = scalar_lea.vmem [#allocation10], %s1051
        %v1053 = vld [vmem:[%s1052] sm:$0xf]
        %v1054 = vld [vmem:[%s1052 + $0x4] sm:$0xf]
        %v1055 = vld [vmem:[%s1052 + $0x8] sm:$0xf]
        %v1056 = vld [vmem:[%s1052 + $0xc] sm:$0xf]
        %v1057 = vld [vmem:[%s1052 + $0x10] sm:$0xf]
        %v1058 = vld [vmem:[%s1052 + $0x14] sm:$0xf]
        %v1059 = vld [vmem:[%s1052 + $0x18] sm:$0xf]
        %v1060 = vld [vmem:[%s1052 + $0x1c] sm:$0xf]
        %v1061 = vld [vmem:[%s1052 + $0x20] sm:$0xf]
        %v1062 = vld [vmem:[%s1052 + $0x24] sm:$0xf]
        %v1063 = vld [vmem:[%s1052 + $0x28] sm:$0xf]
        %v1064 = vld [vmem:[%s1052 + $0x2c] sm:$0xf]
        %v1065 = vld [vmem:[%s1052 + $0x30] sm:$0xf]
        %v1066 = vld [vmem:[%s1052 + $0x34] sm:$0xf]
        %v1067 = vld [vmem:[%s1052 + $0x38] sm:$0xf]
        %v1068 = vld [vmem:[%s1052 + $0x3c] sm:$0xf]
        %v1069 = vld [vmem:[%s1052 + $0x40] sm:$0xf]
        %v1070 = vld [vmem:[%s1052 + $0x44] sm:$0xf]
        %v1071 = vld [vmem:[%s1052 + $0x48] sm:$0xf]
        %v1072 = vld [vmem:[%s1052 + $0x4c] sm:$0xf]
        %v1073 = vld [vmem:[%s1052 + $0x50] sm:$0xf]
        %v1074 = vld [vmem:[%s1052 + $0x54] sm:$0xf]
        %v1075 = vld [vmem:[%s1052 + $0x58] sm:$0xf]
        %v1076 = vld [vmem:[%s1052 + $0x5c] sm:$0xf]
        %v1077 = vld [vmem:[%s1052 + $0x60] sm:$0xf]
        %v1078 = vld [vmem:[%s1052 + $0x64] sm:$0xf]
        %v1079 = vld [vmem:[%s1052 + $0x68] sm:$0xf]
        %v1080 = vld [vmem:[%s1052 + $0x6c] sm:$0xf]
        %v1081 = vld [vmem:[%s1052 + $0x70] sm:$0xf]
        %v1082 = vld [vmem:[%s1052 + $0x74] sm:$0xf]
        %v1083 = vld [vmem:[%s1052 + $0x78] sm:$0xf]
        %v1084 = vld [vmem:[%s1052 + $0x7c] sm:$0xf]
        %v1085 = vld [vmem:[%s1052 + $0x80] sm:$0xf]
        %v1086 = vld [vmem:[%s1052 + $0x84] sm:$0xf]
        %v1087 = vld [vmem:[%s1052 + $0x88] sm:$0xf]
        %v1088 = vld [vmem:[%s1052 + $0x8c] sm:$0xf]
        %v1089 = vld [vmem:[%s1052 + $0x90] sm:$0xf]
        %v1090 = vld [vmem:[%s1052 + $0x94] sm:$0xf]
        %v1091 = vld [vmem:[%s1052 + $0x98] sm:$0xf]
        %v1092 = vld [vmem:[%s1052 + $0x9c] sm:$0xf]
        %v1093 = vld [vmem:[%s1052 + $0xa0] sm:$0xf]
        %v1094 = vld [vmem:[%s1052 + $0xa4] sm:$0xf]
        %v1095 = vld [vmem:[%s1052 + $0xa8] sm:$0xf]
        %v1096 = vld [vmem:[%s1052 + $0xac] sm:$0xf]
        %v1097 = vld [vmem:[%s1052 + $0xb0] sm:$0xf]
        %v1098 = vld [vmem:[%s1052 + $0xb4] sm:$0xf]
        %v1099 = vld [vmem:[%s1052 + $0xb8] sm:$0xf]
        %v1100 = vld [vmem:[%s1052 + $0xbc] sm:$0xf]
        %s1101 = scalar_lea.vmem [#allocation11], %s56
        %v1102 = vld [vmem:[%s1101] sm:$0x1]
        %v1103 = vand.u32 2147483647, %v1018
        %v1104 = vand.u32 2147483647, %v1019
        %v1105 = vand.u32 2147483647, %v1020
        %v1106 = vand.u32 2147483647, %v1021
        %v1107 = vand.u32 2147483647, %v1022
        %v1108 = vand.u32 2147483647, %v1023
        %v1109 = vand.u32 2147483647, %v1024
        %v1110 = vand.u32 2147483647, %v1025
        %v1111 = vand.u32 2147483647, %v1026
        %v1112 = vand.u32 2147483647, %v1027
        %v1113 = vand.u32 2147483647, %v1028
        %v1114 = vand.u32 2147483647, %v1029
        %v1115 = vand.u32 2147483647, %v1030
        %v1116 = vand.u32 2147483647, %v1031
        %v1117 = vand.u32 2147483647, %v1032
        %v1118 = vand.u32 2147483647, %v1033
        %v1119 = vsub.f32 0.0, %v1103
        %v1120 = vsub.f32 0.0, %v1104
        %v1121 = vsub.f32 0.0, %v1105
        %v1122 = vsub.f32 0.0, %v1106
        %v1123 = vsub.f32 0.0, %v1107
        %v1124 = vsub.f32 0.0, %v1108
        %v1125 = vsub.f32 0.0, %v1109
        %v1126 = vsub.f32 0.0, %v1110
        %v1127 = vsub.f32 0.0, %v1111
        %v1128 = vsub.f32 0.0, %v1112
        %v1129 = vsub.f32 0.0, %v1113
        %v1130 = vsub.f32 0.0, %v1114
        %v1131 = vsub.f32 0.0, %v1115
        %v1132 = vsub.f32 0.0, %v1116
        %v1133 = vsub.f32 0.0, %v1117
        %v1134 = vsub.f32 0.0, %v1118
        %v1135 = vmul.f32 %v1119, 1.442695
        %v1136 = vpow.pop %v1135
        %v1137 = vmul.f32 %v1120, 1.442695
        %v1138 = vpow.pop %v1137
        %v1139 = vmul.f32 %v1121, 1.442695
        %v1140 = vpow.pop %v1139
        %v1141 = vmul.f32 %v1122, 1.442695
        %v1142 = vpow.pop %v1141
        %v1143 = vmul.f32 %v1123, 1.442695
        %v1144 = vpow.pop %v1143
        %v1145 = vmul.f32 %v1124, 1.442695
        %v1146 = vpow.pop %v1145
        %v1147 = vmul.f32 %v1125, 1.442695
        %v1148 = vpow.pop %v1147
        %v1149 = vmul.f32 %v1126, 1.442695
        %v1150 = vpow.pop %v1149
        %v1151 = vmul.f32 %v1127, 1.442695
        %v1152 = vpow.pop %v1151
        %v1153 = vmul.f32 %v1128, 1.442695
        %v1154 = vpow.pop %v1153
        %v1155 = vmul.f32 %v1129, 1.442695
        %v1156 = vpow.pop %v1155
        %v1157 = vmul.f32 %v1130, 1.442695
        %v1158 = vpow.pop %v1157
        %v1159 = vmul.f32 %v1131, 1.442695
        %v1160 = vpow.pop %v1159
        %v1161 = vmul.f32 %v1132, 1.442695
        %v1162 = vpow.pop %v1161
        %v1163 = vmul.f32 %v1133, 1.442695
        %v1164 = vpow.pop %v1163
        %v1165 = vmul.f32 %v1134, 1.442695
        %v1166 = vpow.pop %v1165
        %v1167 = vsub.f32 %v1136, 1.0
        %v1168 = vsub.f32 %v1138, 1.0
        %v1169 = vsub.f32 %v1140, 1.0
        %v1170 = vsub.f32 %v1142, 1.0
        %v1171 = vsub.f32 %v1144, 1.0
        %v1172 = vsub.f32 %v1146, 1.0
        %v1173 = vsub.f32 %v1148, 1.0
        %v1174 = vsub.f32 %v1150, 1.0
        %v1175 = vsub.f32 %v1152, 1.0
        %v1176 = vsub.f32 %v1154, 1.0
        %v1177 = vsub.f32 %v1156, 1.0
        %v1178 = vsub.f32 %v1158, 1.0
        %v1179 = vsub.f32 %v1160, 1.0
        %v1180 = vsub.f32 %v1162, 1.0
        %v1181 = vsub.f32 %v1164, 1.0
        %v1182 = vsub.f32 %v1166, 1.0
        %vm1183 = vcmp.gt.f32.partialorder %v1018, 0.0
        %vm1184 = vcmp.gt.f32.partialorder %v1019, 0.0
        %vm1185 = vcmp.gt.f32.partialorder %v1020, 0.0
        %vm1186 = vcmp.gt.f32.partialorder %v1021, 0.0
        %vm1187 = vcmp.gt.f32.partialorder %v1022, 0.0
        %vm1188 = vcmp.gt.f32.partialorder %v1023, 0.0
        %vm1189 = vcmp.gt.f32.partialorder %v1024, 0.0
        %vm1190 = vcmp.gt.f32.partialorder %v1025, 0.0
        %vm1191 = vcmp.gt.f32.partialorder %v1026, 0.0
        %vm1192 = vcmp.gt.f32.partialorder %v1027, 0.0
        %vm1193 = vcmp.gt.f32.partialorder %v1028, 0.0
        %vm1194 = vcmp.gt.f32.partialorder %v1029, 0.0
        %vm1195 = vcmp.gt.f32.partialorder %v1030, 0.0
        %vm1196 = vcmp.gt.f32.partialorder %v1031, 0.0
        %vm1197 = vcmp.gt.f32.partialorder %v1032, 0.0
        %vm1198 = vcmp.gt.f32.partialorder %v1033, 0.0
        %v1199 = vsel %vm1183, %v1018, %v1167
        %v1200 = vsel %vm1184, %v1019, %v1168
        %v1201 = vsel %vm1185, %v1020, %v1169
        %v1202 = vsel %vm1186, %v1021, %v1170
        %v1203 = vsel %vm1187, %v1022, %v1171
        %v1204 = vsel %vm1188, %v1023, %v1172
        %v1205 = vsel %vm1189, %v1024, %v1173
        %v1206 = vsel %vm1190, %v1025, %v1174
        %v1207 = vsel %vm1191, %v1026, %v1175
        %v1208 = vsel %vm1192, %v1027, %v1176
        %v1209 = vsel %vm1193, %v1028, %v1177
        %v1210 = vsel %vm1194, %v1029, %v1178
        %v1211 = vsel %vm1195, %v1030, %v1179
        %v1212 = vsel %vm1196, %v1031, %v1180
        %v1213 = vsel %vm1197, %v1032, %v1181
        %v1214 = vsel %vm1198, %v1033, %v1182
        %v1215 = vsub.f32 0.0, %v1018
        %v1216 = vsub.f32 0.0, %v1019
        %v1217 = vsub.f32 0.0, %v1020
        %v1218 = vsub.f32 0.0, %v1021
        %v1219 = vsub.f32 0.0, %v1022
        %v1220 = vsub.f32 0.0, %v1023
        %v1221 = vsub.f32 0.0, %v1024
        %v1222 = vsub.f32 0.0, %v1025
        %v1223 = vsub.f32 0.0, %v1026
        %v1224 = vsub.f32 0.0, %v1027
        %v1225 = vsub.f32 0.0, %v1028
        %v1226 = vsub.f32 0.0, %v1029
        %v1227 = vsub.f32 0.0, %v1030
        %v1228 = vsub.f32 0.0, %v1031
        %v1229 = vsub.f32 0.0, %v1032
        %v1230 = vsub.f32 0.0, %v1033
        %v1231 = vsel %vm1183, %v1167, %v1215
        %v1232 = vsel %vm1184, %v1168, %v1216
        %v1233 = vsel %vm1185, %v1169, %v1217
        %v1234 = vsel %vm1186, %v1170, %v1218
        %v1235 = vsel %vm1187, %v1171, %v1219
        %v1236 = vsel %vm1188, %v1172, %v1220
        %v1237 = vsel %vm1189, %v1173, %v1221
        %v1238 = vsel %vm1190, %v1174, %v1222
        %v1239 = vsel %vm1191, %v1175, %v1223
        %v1240 = vsel %vm1192, %v1176, %v1224
        %v1241 = vsel %vm1193, %v1177, %v1225
        %v1242 = vsel %vm1194, %v1178, %v1226
        %v1243 = vsel %vm1195, %v1179, %v1227
        %v1244 = vsel %vm1196, %v1180, %v1228
        %v1245 = vsel %vm1197, %v1181, %v1229
        %v1246 = vsel %vm1198, %v1182, %v1230
        %1263 = vrot.lane.b32.xlu0 %v1231, 32
        %v1264 = vpop.permute.xlu0 %1263
        %1265 = vrot.lane.b32.xlu0 %v1232, 32
        %v1266 = vpop.permute.xlu0 %1265
        %1267 = vrot.lane.b32.xlu0 %v1233, 32
        %v1268 = vpop.permute.xlu0 %1267
        %1269 = vrot.lane.b32.xlu0 %v1234, 32
        %v1270 = vpop.permute.xlu0 %1269
        %1271 = vrot.lane.b32.xlu0 %v1235, 32
        %v1272 = vpop.permute.xlu0 %1271
        %1273 = vrot.lane.b32.xlu0 %v1236, 32
        %v1274 = vpop.permute.xlu0 %1273
        %1275 = vrot.lane.b32.xlu0 %v1237, 32
        %v1276 = vpop.permute.xlu0 %1275
        %1277 = vrot.lane.b32.xlu0 %v1238, 32
        %v1278 = vpop.permute.xlu0 %1277
        %1279 = vrot.lane.b32.xlu0 %v1239, 32
        %v1280 = vpop.permute.xlu0 %1279
        %1281 = vrot.lane.b32.xlu0 %v1240, 32
        %v1282 = vpop.permute.xlu0 %1281
        %1283 = vrot.lane.b32.xlu0 %v1241, 32
        %v1284 = vpop.permute.xlu0 %1283
        %1285 = vrot.lane.b32.xlu0 %v1242, 32
        %v1286 = vpop.permute.xlu0 %1285
        %1287 = vrot.lane.b32.xlu0 %v1243, 32
        %v1288 = vpop.permute.xlu0 %1287
        %1289 = vrot.lane.b32.xlu0 %v1244, 32
        %v1290 = vpop.permute.xlu0 %1289
        %1291 = vrot.lane.b32.xlu0 %v1245, 32
        %v1292 = vpop.permute.xlu0 %1291
        %1293 = vrot.lane.b32.xlu0 %v1246, 32
        %v1294 = vpop.permute.xlu0 %1293
        %vm1311 = vcmask 261120
        %v1312 = vsel %vm1311, %v1199, %v1264
        %v1313 = vsel %vm1311, %v1200, %v1266
        %v1314 = vsel %vm1311, %v1201, %v1268
        %v1315 = vsel %vm1311, %v1202, %v1270
        %v1316 = vsel %vm1311, %v1203, %v1272
        %v1317 = vsel %vm1311, %v1204, %v1274
        %v1318 = vsel %vm1311, %v1205, %v1276
        %v1319 = vsel %vm1311, %v1206, %v1278
        %v1320 = vsel %vm1311, %v1207, %v1280
        %v1321 = vsel %vm1311, %v1208, %v1282
        %v1322 = vsel %vm1311, %v1209, %v1284
        %v1323 = vsel %vm1311, %v1210, %v1286
        %v1324 = vsel %vm1311, %v1211, %v1288
        %v1325 = vsel %vm1311, %v1212, %v1290
        %v1326 = vsel %vm1311, %v1213, %v1292
        %v1327 = vsel %vm1311, %v1214, %v1294
        %v1345 = vrot.slane 0.0, 7
        %v1346 = vrot.slane %v1312, 7
        %v1347 = vrot.slane %v1313, 7
        %v1348 = vrot.slane %v1314, 7
        %v1349 = vrot.slane %v1315, 7
        %v1350 = vrot.slane %v1316, 7
        %v1351 = vrot.slane %v1317, 7
        %v1352 = vrot.slane %v1318, 7
        %v1353 = vrot.slane %v1319, 7
        %v1354 = vrot.slane %v1320, 7
        %v1355 = vrot.slane %v1321, 7
        %v1356 = vrot.slane %v1322, 7
        %v1357 = vrot.slane %v1323, 7
        %v1358 = vrot.slane %v1324, 7
        %v1359 = vrot.slane %v1325, 7
        %v1360 = vrot.slane %v1326, 7
        %v1361 = vrot.slane %v1327, 7
        %vm1379 = vcmask 1040384
        %v1380 = vsel %vm1379, 0.0, %v1345
        %v1381 = vsel %vm1379, 0.0, %v1346
        %v1382 = vsel %vm1379, 0.0, %v1347
        %v1383 = vsel %vm1379, 0.0, %v1348
        %v1384 = vsel %vm1379, 0.0, %v1349
        %v1385 = vsel %vm1379, 0.0, %v1350
        %v1386 = vsel %vm1379, 0.0, %v1351
        %v1387 = vsel %vm1379, 0.0, %v1352
        %v1388 = vsel %vm1379, 0.0, %v1353
        %v1389 = vsel %vm1379, 0.0, %v1354
        %v1390 = vsel %vm1379, 0.0, %v1355
        %v1391 = vsel %vm1379, 0.0, %v1356
        %v1392 = vsel %vm1379, 0.0, %v1357
        %v1393 = vsel %vm1379, 0.0, %v1358
        %v1394 = vsel %vm1379, 0.0, %v1359
        %v1395 = vsel %vm1379, 0.0, %v1360
        %v1396 = vsel %vm1379, 0.0, %v1361
        %v1397 = vsel %vm1379, %v1345, 0.0
        %v1398 = vsel %vm1379, %v1346, 0.0
        %v1399 = vsel %vm1379, %v1347, 0.0
        %v1400 = vsel %vm1379, %v1348, 0.0
        %v1401 = vsel %vm1379, %v1349, 0.0
        %v1402 = vsel %vm1379, %v1350, 0.0
        %v1403 = vsel %vm1379, %v1351, 0.0
        %v1404 = vsel %vm1379, %v1352, 0.0
        %v1405 = vsel %vm1379, %v1353, 0.0
        %v1406 = vsel %vm1379, %v1354, 0.0
        %v1407 = vsel %vm1379, %v1355, 0.0
        %v1408 = vsel %vm1379, %v1356, 0.0
        %v1409 = vsel %vm1379, %v1357, 0.0
        %v1410 = vsel %vm1379, %v1358, 0.0
        %v1411 = vsel %vm1379, %v1359, 0.0
        %v1412 = vsel %vm1379, %v1360, 0.0
        %v1413 = vsel %vm1379, %v1361, 0.0
        %vm1444 = vcmask 1046528
        %v1445 = vrot.slane %v1380, 1
        %v1446 = vrot.slane %v1397, 1
        %v1447 = vsel %vm1444, %v1445, %v1446
        %v1448 = vrot.slane %v1381, 1
        %v1449 = vrot.slane %v1398, 1
        %v1450 = vsel %vm1444, %v1448, %v1449
        %v1451 = vrot.slane %v1382, 1
        %v1452 = vrot.slane %v1399, 1
        %v1453 = vsel %vm1444, %v1451, %v1452
        %v1454 = vrot.slane %v1383, 1
        %v1455 = vrot.slane %v1400, 1
        %v1456 = vsel %vm1444, %v1454, %v1455
        %v1457 = vrot.slane %v1384, 1
        %v1458 = vrot.slane %v1401, 1
        %v1459 = vsel %vm1444, %v1457, %v1458
        %v1460 = vrot.slane %v1385, 1
        %v1461 = vrot.slane %v1402, 1
        %v1462 = vsel %vm1444, %v1460, %v1461
        %v1463 = vrot.slane %v1386, 1
        %v1464 = vrot.slane %v1403, 1
        %v1465 = vsel %vm1444, %v1463, %v1464
        %v1466 = vrot.slane %v1387, 1
        %v1467 = vrot.slane %v1404, 1
        %v1468 = vsel %vm1444, %v1466, %v1467
        %v1469 = vrot.slane %v1389, 1
        %v1470 = vrot.slane %v1406, 1
        %v1471 = vsel %vm1444, %v1469, %v1470
        %v1472 = vrot.slane %v1390, 1
        %v1473 = vrot.slane %v1407, 1
        %v1474 = vsel %vm1444, %v1472, %v1473
        %v1475 = vrot.slane %v1391, 1
        %v1476 = vrot.slane %v1408, 1
        %v1477 = vsel %vm1444, %v1475, %v1476
        %v1478 = vrot.slane %v1392, 1
        %v1479 = vrot.slane %v1409, 1
        %v1480 = vsel %vm1444, %v1478, %v1479
        %v1481 = vrot.slane %v1393, 1
        %v1482 = vrot.slane %v1410, 1
        %v1483 = vsel %vm1444, %v1481, %v1482
        %v1484 = vrot.slane %v1394, 1
        %v1485 = vrot.slane %v1411, 1
        %v1486 = vsel %vm1444, %v1484, %v1485
        %v1487 = vrot.slane %v1395, 1
        %v1488 = vrot.slane %v1412, 1
        %v1489 = vsel %vm1444, %v1487, %v1488
        %1490 = vrot.lane.b32.xlu0 %v1447, 64
        %v1491 = vpop.permute.xlu0 %1490
        %1492 = vrot.lane.b32.xlu0 %v1450, 64
        %v1493 = vpop.permute.xlu0 %1492
        %1494 = vrot.lane.b32.xlu0 %v1453, 64
        %v1495 = vpop.permute.xlu0 %1494
        %1496 = vrot.lane.b32.xlu0 %v1456, 64
        %v1497 = vpop.permute.xlu0 %1496
        %1498 = vrot.lane.b32.xlu0 %v1459, 64
        %v1499 = vpop.permute.xlu0 %1498
        %1500 = vrot.lane.b32.xlu0 %v1462, 64
        %v1501 = vpop.permute.xlu0 %1500
        %1502 = vrot.lane.b32.xlu0 %v1465, 64
        %v1503 = vpop.permute.xlu0 %1502
        %1504 = vrot.lane.b32.xlu0 %v1468, 64
        %v1505 = vpop.permute.xlu0 %1504
        %1506 = vrot.lane.b32.xlu0 %v1471, 64
        %v1507 = vpop.permute.xlu0 %1506
        %1508 = vrot.lane.b32.xlu0 %v1474, 64
        %v1509 = vpop.permute.xlu0 %1508
        %1510 = vrot.lane.b32.xlu0 %v1477, 64
        %v1511 = vpop.permute.xlu0 %1510
        %1512 = vrot.lane.b32.xlu0 %v1480, 64
        %v1513 = vpop.permute.xlu0 %1512
        %1514 = vrot.lane.b32.xlu0 %v1483, 64
        %v1515 = vpop.permute.xlu0 %1514
        %1516 = vrot.lane.b32.xlu0 %v1486, 64
        %v1517 = vpop.permute.xlu0 %1516
        %1518 = vrot.lane.b32.xlu0 %v1489, 64
        %v1519 = vpop.permute.xlu0 %1518
        %vm1535 = vcmask 1045504
        %v1536 = vrot.slane %v1380, 2
        %v1537 = vrot.slane %v1397, 2
        %v1538 = vsel %vm1535, %v1536, %v1537
        %v1539 = vrot.slane %v1381, 2
        %v1540 = vrot.slane %v1398, 2
        %v1541 = vsel %vm1535, %v1539, %v1540
        %v1542 = vrot.slane %v1382, 2
        %v1543 = vrot.slane %v1399, 2
        %v1544 = vsel %vm1535, %v1542, %v1543
        %v1545 = vrot.slane %v1383, 2
        %v1546 = vrot.slane %v1400, 2
        %v1547 = vsel %vm1535, %v1545, %v1546
        %v1548 = vrot.slane %v1384, 2
        %v1549 = vrot.slane %v1401, 2
        %v1550 = vsel %vm1535, %v1548, %v1549
        %v1551 = vrot.slane %v1385, 2
        %v1552 = vrot.slane %v1402, 2
        %v1553 = vsel %vm1535, %v1551, %v1552
        %v1554 = vrot.slane %v1386, 2
        %v1555 = vrot.slane %v1403, 2
        %v1556 = vsel %vm1535, %v1554, %v1555
        %v1557 = vrot.slane %v1387, 2
        %v1558 = vrot.slane %v1404, 2
        %v1559 = vsel %vm1535, %v1557, %v1558
        %v1560 = vrot.slane %v1389, 2
        %v1561 = vrot.slane %v1406, 2
        %v1562 = vsel %vm1535, %v1560, %v1561
        %v1563 = vrot.slane %v1390, 2
        %v1564 = vrot.slane %v1407, 2
        %v1565 = vsel %vm1535, %v1563, %v1564
        %v1566 = vrot.slane %v1391, 2
        %v1567 = vrot.slane %v1408, 2
        %v1568 = vsel %vm1535, %v1566, %v1567
        %v1569 = vrot.slane %v1392, 2
        %v1570 = vrot.slane %v1409, 2
        %v1571 = vsel %vm1535, %v1569, %v1570
        %v1572 = vrot.slane %v1393, 2
        %v1573 = vrot.slane %v1410, 2
        %v1574 = vsel %vm1535, %v1572, %v1573
        %v1575 = vrot.slane %v1394, 2
        %v1576 = vrot.slane %v1411, 2
        %v1577 = vsel %vm1535, %v1575, %v1576
        %v1578 = vrot.slane %v1395, 2
        %v1579 = vrot.slane %v1412, 2
        %v1580 = vsel %vm1535, %v1578, %v1579
        %1598 = vrot.lane.b32.xlu0 %v1381, 64
        %v1599 = vpop.permute.xlu0 %1598
        %1600 = vrot.lane.b32.xlu0 %v1382, 64
        %v1601 = vpop.permute.xlu0 %1600
        %1602 = vrot.lane.b32.xlu0 %v1383, 64
        %v1603 = vpop.permute.xlu0 %1602
        %1604 = vrot.lane.b32.xlu0 %v1384, 64
        %v1605 = vpop.permute.xlu0 %1604
        %1606 = vrot.lane.b32.xlu0 %v1385, 64
        %v1607 = vpop.permute.xlu0 %1606
        %1608 = vrot.lane.b32.xlu0 %v1386, 64
        %v1609 = vpop.permute.xlu0 %1608
        %1610 = vrot.lane.b32.xlu0 %v1387, 64
        %v1611 = vpop.permute.xlu0 %1610
        %1612 = vrot.lane.b32.xlu0 %v1388, 64
        %v1613 = vpop.permute.xlu0 %1612
        %1614 = vrot.lane.b32.xlu0 %v1389, 64
        %v1615 = vpop.permute.xlu0 %1614
        %1616 = vrot.lane.b32.xlu0 %v1390, 64
        %v1617 = vpop.permute.xlu0 %1616
        %1618 = vrot.lane.b32.xlu0 %v1391, 64
        %v1619 = vpop.permute.xlu0 %1618
        %1620 = vrot.lane.b32.xlu0 %v1392, 64
        %v1621 = vpop.permute.xlu0 %1620
        %1622 = vrot.lane.b32.xlu0 %v1393, 64
        %v1623 = vpop.permute.xlu0 %1622
        %1624 = vrot.lane.b32.xlu0 %v1394, 64
        %v1625 = vpop.permute.xlu0 %1624
        %1626 = vrot.lane.b32.xlu0 %v1395, 64
        %v1627 = vpop.permute.xlu0 %1626
        %1628 = vrot.lane.b32.xlu0 %v1396, 64
        %v1629 = vpop.permute.xlu0 %1628
        %v1648 = vrot.slane %v1388, 1
        %v1649 = vrot.slane %v1405, 1
        %v1650 = vsel %vm1444, %v1648, %v1649
        %v1651 = vrot.slane %v1396, 1
        %v1652 = vrot.slane %v1413, 1
        %v1653 = vsel %vm1444, %v1651, %v1652
        %v1670 = vrot.slane %v1388, 2
        %v1671 = vrot.slane %v1405, 2
        %v1672 = vsel %vm1535, %v1670, %v1671
        %v1673 = vrot.slane %v1396, 2
        %v1674 = vrot.slane %v1413, 2
        %v1675 = vsel %vm1535, %v1673, %v1674
        %1676 = vrot.lane.b32.xlu0 %v1541, 64
        %v1677 = vpop.permute.xlu0 %1676
        %1678 = vrot.lane.b32.xlu0 %v1544, 64
        %v1679 = vpop.permute.xlu0 %1678
        %1680 = vrot.lane.b32.xlu0 %v1547, 64
        %v1681 = vpop.permute.xlu0 %1680
        %1682 = vrot.lane.b32.xlu0 %v1550, 64
        %v1683 = vpop.permute.xlu0 %1682
        %1684 = vrot.lane.b32.xlu0 %v1553, 64
        %v1685 = vpop.permute.xlu0 %1684
        %1686 = vrot.lane.b32.xlu0 %v1556, 64
        %v1687 = vpop.permute.xlu0 %1686
        %1688 = vrot.lane.b32.xlu0 %v1559, 64
        %v1689 = vpop.permute.xlu0 %1688
        %1690 = vrot.lane.b32.xlu0 %v1672, 64
        %v1691 = vpop.permute.xlu0 %1690
        %1692 = vrot.lane.b32.xlu0 %v1562, 64
        %v1693 = vpop.permute.xlu0 %1692
        %1694 = vrot.lane.b32.xlu0 %v1565, 64
        %v1695 = vpop.permute.xlu0 %1694
        %1696 = vrot.lane.b32.xlu0 %v1568, 64
        %v1697 = vpop.permute.xlu0 %1696
        %1698 = vrot.lane.b32.xlu0 %v1571, 64
        %v1699 = vpop.permute.xlu0 %1698
        %1700 = vrot.lane.b32.xlu0 %v1574, 64
        %v1701 = vpop.permute.xlu0 %1700
        %1702 = vrot.lane.b32.xlu0 %v1577, 64
        %v1703 = vpop.permute.xlu0 %1702
        %1704 = vrot.lane.b32.xlu0 %v1580, 64
        %v1705 = vpop.permute.xlu0 %1704
        %1706 = vrot.lane.b32.xlu0 %v1675, 64
        %v1707 = vpop.permute.xlu0 %1706
        %vm1724 = vcmask 523264
        %v1725 = vsel %vm1724, %v1380, %v1491
        %v1726 = vsel %vm1724, %v1381, %v1493
        %v1727 = vsel %vm1724, %v1382, %v1495
        %v1728 = vsel %vm1724, %v1383, %v1497
        %v1729 = vsel %vm1724, %v1384, %v1499
        %v1730 = vsel %vm1724, %v1385, %v1501
        %v1731 = vsel %vm1724, %v1386, %v1503
        %v1732 = vsel %vm1724, %v1387, %v1505
        %v1733 = vsel %vm1724, %v1389, %v1507
        %v1734 = vsel %vm1724, %v1390, %v1509
        %v1735 = vsel %vm1724, %v1391, %v1511
        %v1736 = vsel %vm1724, %v1392, %v1513
        %v1737 = vsel %vm1724, %v1393, %v1515
        %v1738 = vsel %vm1724, %v1394, %v1517
        %v1739 = vsel %vm1724, %v1395, %v1519
        %v1740 = vsel %vm1724, %v1538, %v1599
        %v1741 = vsel %vm1724, %v1541, %v1601
        %v1742 = vsel %vm1724, %v1544, %v1603
        %v1743 = vsel %vm1724, %v1547, %v1605
        %v1744 = vsel %vm1724, %v1550, %v1607
        %v1745 = vsel %vm1724, %v1553, %v1609
        %v1746 = vsel %vm1724, %v1556, %v1611
        %v1747 = vsel %vm1724, %v1559, %v1613
        %v1748 = vsel %vm1724, %v1538, %v1615
        %v1749 = vsel %vm1724, %v1562, %v1617
        %v1750 = vsel %vm1724, %v1565, %v1619
        %v1751 = vsel %vm1724, %v1568, %v1621
        %v1752 = vsel %vm1724, %v1571, %v1623
        %v1753 = vsel %vm1724, %v1574, %v1625
        %v1754 = vsel %vm1724, %v1577, %v1627
        %v1755 = vsel %vm1724, %v1580, %v1629
        %v1756 = vsel %vm1724, %v1450, %v1677
        %v1757 = vsel %vm1724, %v1453, %v1679
        %v1758 = vsel %vm1724, %v1456, %v1681
        %v1759 = vsel %vm1724, %v1459, %v1683
        %v1760 = vsel %vm1724, %v1462, %v1685
        %v1761 = vsel %vm1724, %v1465, %v1687
        %v1762 = vsel %vm1724, %v1468, %v1689
        %v1763 = vsel %vm1724, %v1650, %v1691
        %v1764 = vsel %vm1724, %v1471, %v1693
        %v1765 = vsel %vm1724, %v1474, %v1695
        %v1766 = vsel %vm1724, %v1477, %v1697
        %v1767 = vsel %vm1724, %v1480, %v1699
        %v1768 = vsel %vm1724, %v1483, %v1701
        %v1769 = vsel %vm1724, %v1486, %v1703
        %v1770 = vsel %vm1724, %v1489, %v1705
        %v1771 = vsel %vm1724, %v1653, %v1707
        %v1772 = vpack.c.bf16 %v1726, %v1725
        %v1773 = vpack.c.bf16 %v1741, %v1740
        %v1774 = vpack.c.bf16 %v1757, %v1756
        %v1775 = vpack.c.bf16 %v1728, %v1727
        %v1776 = vpack.c.bf16 %v1743, %v1742
        %v1777 = vpack.c.bf16 %v1759, %v1758
        %v1778 = vpack.c.bf16 %v1730, %v1729
        %v1779 = vpack.c.bf16 %v1745, %v1744
        %v1780 = vpack.c.bf16 %v1761, %v1760
        %v1781 = vpack.c.bf16 %v1732, %v1731
        %v1782 = vpack.c.bf16 %v1747, %v1746
        %v1783 = vpack.c.bf16 %v1763, %v1762
        %v1784 = vpack.c.bf16 %v1733, %v1725
        %v1785 = vpack.c.bf16 %v1749, %v1748
        %v1786 = vpack.c.bf16 %v1765, %v1764
        %v1787 = vpack.c.bf16 %v1735, %v1734
        %v1788 = vpack.c.bf16 %v1751, %v1750
        %v1789 = vpack.c.bf16 %v1767, %v1766
        %v1790 = vpack.c.bf16 %v1737, %v1736
        %v1791 = vpack.c.bf16 %v1753, %v1752
        %v1792 = vpack.c.bf16 %v1769, %v1768
        %v1793 = vpack.c.bf16 %v1739, %v1738
        %v1794 = vpack.c.bf16 %v1755, %v1754
        %v1795 = vpack.c.bf16 %v1771, %v1770
        %v1797 = vlaneseq
        %v1798 = vshrl.u32 %v1797, 7
        %v1799 = vsub.s32 0, %v1798
        %v1800 = vrot.slane %v1102, %v1799
        %v1850 = vunpack.c.l.b16 %v1053
        %v1851 = vunpack.c.l.b16 %v1054
        %v1852 = vunpack.c.l.b16 %v1055
        %v1853 = vunpack.c.l.b16 %v1056
        %v1854 = vunpack.c.l.b16 %v1057
        %v1855 = vunpack.c.l.b16 %v1058
        %v1856 = vunpack.c.l.b16 %v1059
        %v1857 = vunpack.c.l.b16 %v1060
        %v1858 = vunpack.c.l.b16 %v1061
        %v1859 = vunpack.c.l.b16 %v1062
        %v1860 = vunpack.c.l.b16 %v1063
        %v1861 = vunpack.c.l.b16 %v1064
        %v1862 = vunpack.c.l.b16 %v1065
        %v1863 = vunpack.c.l.b16 %v1066
        %v1864 = vunpack.c.l.b16 %v1067
        %v1865 = vunpack.c.l.b16 %v1068
        %v1866 = vunpack.c.l.b16 %v1069
        %v1867 = vunpack.c.l.b16 %v1070
        %v1868 = vunpack.c.l.b16 %v1071
        %v1869 = vunpack.c.l.b16 %v1072
        %v1870 = vunpack.c.l.b16 %v1073
        %v1871 = vunpack.c.l.b16 %v1074
        %v1872 = vunpack.c.l.b16 %v1075
        %v1873 = vunpack.c.l.b16 %v1076
        %v1874 = vunpack.c.l.b16 %v1077
        %v1875 = vunpack.c.l.b16 %v1078
        %v1876 = vunpack.c.l.b16 %v1079
        %v1877 = vunpack.c.l.b16 %v1080
        %v1878 = vunpack.c.l.b16 %v1081
        %v1879 = vunpack.c.l.b16 %v1082
        %v1880 = vunpack.c.l.b16 %v1083
        %v1881 = vunpack.c.l.b16 %v1084
        %v1882 = vunpack.c.l.b16 %v1085
        %v1883 = vunpack.c.l.b16 %v1086
        %v1884 = vunpack.c.l.b16 %v1087
        %v1885 = vunpack.c.l.b16 %v1088
        %v1886 = vunpack.c.l.b16 %v1089
        %v1887 = vunpack.c.l.b16 %v1090
        %v1888 = vunpack.c.l.b16 %v1091
        %v1889 = vunpack.c.l.b16 %v1092
        %v1890 = vunpack.c.l.b16 %v1093
        %v1891 = vunpack.c.l.b16 %v1094
        %v1892 = vunpack.c.l.b16 %v1095
        %v1893 = vunpack.c.l.b16 %v1096
        %v1894 = vunpack.c.l.b16 %v1097
        %v1895 = vunpack.c.l.b16 %v1098
        %v1896 = vunpack.c.l.b16 %v1099
        %v1897 = vunpack.c.l.b16 %v1100
        %v1898 = vpack.c.b16 %v1851, %v1850
        %v1899 = vpack.c.b16 %v1853, %v1852
        %v1900 = vpack.c.b16 %v1855, %v1854
        %v1901 = vpack.c.b16 %v1857, %v1856
        %v1902 = vpack.c.b16 %v1859, %v1858
        %v1903 = vpack.c.b16 %v1861, %v1860
        %v1904 = vpack.c.b16 %v1863, %v1862
        %v1905 = vpack.c.b16 %v1865, %v1864
        %v1906 = vpack.c.b16 %v1867, %v1866
        %v1907 = vpack.c.b16 %v1869, %v1868
        %v1908 = vpack.c.b16 %v1871, %v1870
        %v1909 = vpack.c.b16 %v1873, %v1872
        %v1910 = vpack.c.b16 %v1875, %v1874
        %v1911 = vpack.c.b16 %v1877, %v1876
        %v1912 = vpack.c.b16 %v1879, %v1878
        %v1913 = vpack.c.b16 %v1881, %v1880
        %v1914 = vpack.c.b16 %v1883, %v1882
        %v1915 = vpack.c.b16 %v1885, %v1884
        %v1916 = vpack.c.b16 %v1887, %v1886
        %v1917 = vpack.c.b16 %v1889, %v1888
        %v1918 = vpack.c.b16 %v1891, %v1890
        %v1919 = vpack.c.b16 %v1893, %v1892
        %v1920 = vpack.c.b16 %v1895, %v1894
        %v1921 = vpack.c.b16 %v1897, %v1896
        %1946 = vmatprep.subr.bf16.mxu0 0
        %1947 = vmatpush1.bf16.msra.mxu0 %v1898
        %1948 = vmatprep.subr.bf16.mxu0 0
        %1949 = vmatpush1.bf16.msra.mxu0 %v1899
        %1950 = vmatprep.subr.bf16.mxu0 0
        %1951 = vmatpush1.bf16.msra.mxu0 %v1900
        %1952 = vmatprep.subr.bf16.mxu0 0
        %1953 = vmatpush1.bf16.msra.mxu0 %v1901
        %1954 = vmatprep.subr.bf16.mxu0 0
        %1955 = vmatpush1.bf16.msra.mxu0 %v1902
        %1956 = vmatprep.subr.bf16.mxu0 0
        %1957 = vmatpush1.bf16.msra.mxu0 %v1903
        %1958 = vmatprep.subr.bf16.mxu0 0
        %1959 = vmatpush1.bf16.msra.mxu0 %v1904
        %1960 = vmatprep.subr.bf16.mxu0 0
        %1961 = vmatpush1.bf16.msra.mxu0 %v1905
        %1962 = vmatprep.subr.bf16.mxu0 0
        %1963 = vmatpush1.bf16.msra.mxu0 %v1906
        %1964 = vmatprep.subr.bf16.mxu0 0
        %1965 = vmatpush1.bf16.msra.mxu0 %v1907
        %1966 = vmatprep.subr.bf16.mxu0 0
        %1967 = vmatpush1.bf16.msra.mxu0 %v1908
        %1968 = vmatprep.subr.bf16.mxu0 0
        %1969 = vmatpush1.bf16.msra.mxu0 %v1909
        %1970 = vmatprep.subr.bf16.mxu0 0
        %1971 = vmatpush1.bf16.msra.mxu0 %v1910
        %1972 = vmatprep.subr.bf16.mxu0 0
        %1973 = vmatpush1.bf16.msra.mxu0 %v1911
        %1974 = vmatprep.subr.bf16.mxu0 0
        %1975 = vmatpush1.bf16.msra.mxu0 %v1912
        %1976 = vmatprep.subr.bf16.mxu0 0
        %1977 = vmatpush1.bf16.msra.mxu0 %v1913
        %1978 = vmatprep.mubr.bf16.mxu0 %v1773
        %1979 = vmatmul.mubr.bf16.gmra.mrb[0].mxu0 %v1772
        %v1980 = vpop.f32.mrb[0].mxu0
        %v1981 = vadd.f32 %v1800, %v1980
        %v1982 = vpop.f32.mrb[0].mxu0
        %v1983 = vpop.f32.mrb[0].mxu0
        %v1984 = vadd.f32 %v1800, %v1983
        %v1985 = vpop.f32.mrb[0].mxu0
        %1986 = vmatprep.mubr.bf16.mxu0 %v1776
        %1987 = vmatmul.mubr.bf16.gmra.mrb[0].mxu0 %v1775
        %v1988 = vpop.f32.mrb[0].mxu0
        %v1989 = vadd.f32 %v1800, %v1988
        %v1990 = vpop.f32.mrb[0].mxu0
        %v1991 = vpop.f32.mrb[0].mxu0
        %v1992 = vadd.f32 %v1800, %v1991
        %v1993 = vpop.f32.mrb[0].mxu0
        %1994 = vmatprep.mubr.bf16.mxu0 %v1779
        %1995 = vmatmul.mubr.bf16.gmra.mrb[0].mxu0 %v1778
        %v1996 = vpop.f32.mrb[0].mxu0
        %v1997 = vadd.f32 %v1800, %v1996
        %v1998 = vpop.f32.mrb[0].mxu0
        %v1999 = vpop.f32.mrb[0].mxu0
        %v2000 = vadd.f32 %v1800, %v1999
        %v2001 = vpop.f32.mrb[0].mxu0
        %2002 = vmatprep.mubr.bf16.mxu0 %v1782
        %2003 = vmatmul.mubr.bf16.gmra.mrb[0].mxu0 %v1781
        %v2004 = vpop.f32.mrb[0].mxu0
        %v2005 = vadd.f32 %v1800, %v2004
        %v2006 = vpop.f32.mrb[0].mxu0
        %v2007 = vpop.f32.mrb[0].mxu0
        %v2008 = vadd.f32 %v1800, %v2007
        %v2009 = vpop.f32.mrb[0].mxu0
        %2010 = vmatprep.mubr.bf16.mxu0 %v1785
        %2011 = vmatmul.mubr.bf16.gmra.mrb[0].mxu0 %v1784
        %v2012 = vpop.f32.mrb[0].mxu0
        %v2013 = vadd.f32 %v1800, %v2012
        %v2014 = vpop.f32.mrb[0].mxu0
        %v2015 = vpop.f32.mrb[0].mxu0
        %v2016 = vadd.f32 %v1800, %v2015
        %v2017 = vpop.f32.mrb[0].mxu0
        %2018 = vmatprep.mubr.bf16.mxu0 %v1788
        %2019 = vmatmul.mubr.bf16.gmra.mrb[0].mxu0 %v1787
        %v2020 = vpop.f32.mrb[0].mxu0
        %v2021 = vadd.f32 %v1800, %v2020
        %v2022 = vpop.f32.mrb[0].mxu0
        %v2023 = vpop.f32.mrb[0].mxu0
        %v2024 = vadd.f32 %v1800, %v2023
        %v2025 = vpop.f32.mrb[0].mxu0
        %2026 = vmatprep.mubr.bf16.mxu0 %v1791
        %2027 = vmatmul.mubr.bf16.gmra.mrb[0].mxu0 %v1790
        %v2028 = vpop.f32.mrb[0].mxu0
        %v2029 = vadd.f32 %v1800, %v2028
        %v2030 = vpop.f32.mrb[0].mxu0
        %v2031 = vpop.f32.mrb[0].mxu0
        %v2032 = vadd.f32 %v1800, %v2031
        %v2033 = vpop.f32.mrb[0].mxu0
        %2034 = vmatprep.mubr.bf16.mxu0 %v1794
        %2035 = vmatmul.mubr.bf16.gmra.mrb[0].mxu0 %v1793
        %v2036 = vpop.f32.mrb[0].mxu0
        %v2037 = vadd.f32 %v1800, %v2036
        %v2038 = vpop.f32.mrb[0].mxu0
        %v2039 = vpop.f32.mrb[0].mxu0
        %v2040 = vadd.f32 %v1800, %v2039
        %v2041 = vpop.f32.mrb[0].mxu0
        %2042 = vdwg.mxu0
        %2043 = vmatprep.subr.bf16.mxu0 0
        %2044 = vmatpush1.bf16.msra.mxu0 %v1914
        %2045 = vmatprep.subr.bf16.mxu0 0
        %2046 = vmatpush1.bf16.msra.mxu0 %v1915
        %2047 = vmatprep.subr.bf16.mxu0 0
        %2048 = vmatpush1.bf16.msra.mxu0 %v1916
        %2049 = vmatprep.subr.bf16.mxu0 0
        %2050 = vmatpush1.bf16.msra.mxu0 %v1917
        %2051 = vmatprep.subr.bf16.mxu0 0
        %2052 = vmatpush1.bf16.msra.mxu0 %v1918
        %2053 = vmatprep.subr.bf16.mxu0 0
        %2054 = vmatpush1.bf16.msra.mxu0 %v1919
        %2055 = vmatprep.subr.bf16.mxu0 0
        %2056 = vmatpush1.bf16.msra.mxu0 %v1920
        %2057 = vmatprep.subr.bf16.mxu0 0
        %2058 = vmatpush1.bf16.msra.mxu0 %v1921
        %2059 = vmatprep.subr.bf16.mxu0 0
        %2060 = vmatpush1.bf16.msra.mxu0 0
        %2061 = vmatprep.subr.bf16.mxu0 0
        %2062 = vmatpush1.bf16.msra.mxu0 0
        %2063 = vmatprep.subr.bf16.mxu0 0
        %2064 = vmatpush1.bf16.msra.mxu0 0
        %2065 = vmatprep.subr.bf16.mxu0 0
        %2066 = vmatpush1.bf16.msra.mxu0 0
        %2067 = vmatprep.subr.bf16.mxu0 0
        %2068 = vmatpush1.bf16.msra.mxu0 0
        %2069 = vmatprep.subr.bf16.mxu0 0
        %2070 = vmatpush1.bf16.msra.mxu0 0
        %2071 = vmatprep.subr.bf16.mxu0 0
        %2072 = vmatpush1.bf16.msra.mxu0 0
        %2073 = vmatprep.subr.bf16.mxu0 0
        %2074 = vmatpush1.bf16.msra.mxu0 0
        %2075 = vmatprep.mubr.bf16.mxu0 0
        %2076 = vmatmul.mubr.bf16.gmra.mrb[0].mxu0 %v1774
        %v2077 = vpop.f32.mrb[0].mxu0
        %v2078 = vadd.f32 %v1981, %v2077
        %v2079 = vpop.f32.mrb[0].mxu0
        %v2080 = vpop.f32.mrb[0].mxu0
        %v2081 = vadd.f32 %v1984, %v2080
        %v2082 = vpop.f32.mrb[0].mxu0
        %2083 = vmatprep.mubr.bf16.mxu0 0
        %2084 = vmatmul.mubr.bf16.gmra.mrb[0].mxu0 %v1777
        %v2085 = vpop.f32.mrb[0].mxu0
        %v2086 = vadd.f32 %v1989, %v2085
        %v2087 = vpop.f32.mrb[0].mxu0
        %v2088 = vpop.f32.mrb[0].mxu0
        %v2089 = vadd.f32 %v1992, %v2088
        %v2090 = vpop.f32.mrb[0].mxu0
        %2091 = vmatprep.mubr.bf16.mxu0 0
        %2092 = vmatmul.mubr.bf16.gmra.mrb[0].mxu0 %v1780
        %v2093 = vpop.f32.mrb[0].mxu0
        %v2094 = vadd.f32 %v1997, %v2093
        %v2095 = vpop.f32.mrb[0].mxu0
        %v2096 = vpop.f32.mrb[0].mxu0
        %v2097 = vadd.f32 %v2000, %v2096
        %v2098 = vpop.f32.mrb[0].mxu0
        %2099 = vmatprep.mubr.bf16.mxu0 0
        %2100 = vmatmul.mubr.bf16.gmra.mrb[0].mxu0 %v1783
        %v2101 = vpop.f32.mrb[0].mxu0
        %v2102 = vadd.f32 %v2005, %v2101
        %v2103 = vpop.f32.mrb[0].mxu0
        %v2104 = vpop.f32.mrb[0].mxu0
        %v2105 = vadd.f32 %v2008, %v2104
        %v2106 = vpop.f32.mrb[0].mxu0
        %2107 = vmatprep.mubr.bf16.mxu0 0
        %2108 = vmatmul.mubr.bf16.gmra.mrb[0].mxu0 %v1786
        %v2109 = vpop.f32.mrb[0].mxu0
        %v2110 = vadd.f32 %v2013, %v2109
        %v2111 = vpop.f32.mrb[0].mxu0
        %v2112 = vpop.f32.mrb[0].mxu0
        %v2113 = vadd.f32 %v2016, %v2112
        %v2114 = vpop.f32.mrb[0].mxu0
        %2115 = vmatprep.mubr.bf16.mxu0 0
        %2116 = vmatmul.mubr.bf16.gmra.mrb[0].mxu0 %v1789
        %v2117 = vpop.f32.mrb[0].mxu0
        %v2118 = vadd.f32 %v2021, %v2117
        %v2119 = vpop.f32.mrb[0].mxu0
        %v2120 = vpop.f32.mrb[0].mxu0
        %v2121 = vadd.f32 %v2024, %v2120
        %v2122 = vpop.f32.mrb[0].mxu0
        %2123 = vmatprep.mubr.bf16.mxu0 0
        %2124 = vmatmul.mubr.bf16.gmra.mrb[0].mxu0 %v1792
        %v2125 = vpop.f32.mrb[0].mxu0
        %v2126 = vadd.f32 %v2029, %v2125
        %v2127 = vpop.f32.mrb[0].mxu0
        %v2128 = vpop.f32.mrb[0].mxu0
        %v2129 = vadd.f32 %v2032, %v2128
        %v2130 = vpop.f32.mrb[0].mxu0
        %2131 = vmatprep.mubr.bf16.mxu0 0
        %2132 = vmatmul.mubr.bf16.gmra.mrb[0].mxu0 %v1795
        %v2133 = vpop.f32.mrb[0].mxu0
        %v2134 = vadd.f32 %v2037, %v2133
        %v2135 = vpop.f32.mrb[0].mxu0
        %v2136 = vpop.f32.mrb[0].mxu0
        %v2137 = vadd.f32 %v2040, %v2136
        %v2138 = vpop.f32.mrb[0].mxu0
        %2139 = vdwg.mxu0
        %v2140 = vld [vmem:[%s806] sm:$0xff]
        %v2141 = vld [vmem:[%s806 + $0x8] sm:$0xff]
        %v2142 = vld [vmem:[%s806 + $0x10] sm:$0xff]
        %v2143 = vld [vmem:[%s806 + $0x18] sm:$0xff]
        %v2144 = vld [vmem:[%s806 + $0x20] sm:$0xff]
        %v2145 = vld [vmem:[%s806 + $0x28] sm:$0xff]
        %v2146 = vld [vmem:[%s806 + $0x30] sm:$0xff]
        %v2147 = vld [vmem:[%s806 + $0x38] sm:$0xff]
        %v2148 = vld [vmem:[%s806 + $0x40] sm:$0xff]
        %v2149 = vld [vmem:[%s806 + $0x48] sm:$0xff]
        %v2150 = vld [vmem:[%s806 + $0x50] sm:$0xff]
        %v2151 = vld [vmem:[%s806 + $0x58] sm:$0xff]
        %v2152 = vld [vmem:[%s806 + $0x60] sm:$0xff]
        %v2153 = vld [vmem:[%s806 + $0x68] sm:$0xff]
        %v2154 = vld [vmem:[%s806 + $0x70] sm:$0xff]
        %v2155 = vld [vmem:[%s806 + $0x78] sm:$0xff]
        %s2156 = smul.u32 %s56, 8
        %s2157 = smul.addr %s2156, 4
        %s2158 = scalar_lea.vmem [#allocation13], %s2157
        %v2159 = vld [vmem:[%s2158] sm:$0xf]
        %v2160 = vld [vmem:[%s2158 + $0x4] sm:$0xf]
        %v2161 = vld [vmem:[%s2158 + $0x8] sm:$0xf]
        %v2162 = vld [vmem:[%s2158 + $0xc] sm:$0xf]
        %v2163 = vld [vmem:[%s2158 + $0x10] sm:$0xf]
        %v2164 = vld [vmem:[%s2158 + $0x14] sm:$0xf]
        %v2165 = vld [vmem:[%s2158 + $0x18] sm:$0xf]
        %v2166 = vld [vmem:[%s2158 + $0x1c] sm:$0xf]
        %s2167 = scalar_lea.vmem [#allocation14], %s56
        %v2168 = vld [vmem:[%s2167] sm:$0x1]
        %v2169 = vand.u32 2147483647, %v2140
        %v2170 = vand.u32 2147483647, %v2141
        %v2171 = vand.u32 2147483647, %v2142
        %v2172 = vand.u32 2147483647, %v2143
        %v2173 = vand.u32 2147483647, %v2144
        %v2174 = vand.u32 2147483647, %v2145
        %v2175 = vand.u32 2147483647, %v2146
        %v2176 = vand.u32 2147483647, %v2147
        %v2177 = vand.u32 2147483647, %v2148
        %v2178 = vand.u32 2147483647, %v2149
        %v2179 = vand.u32 2147483647, %v2150
        %v2180 = vand.u32 2147483647, %v2151
        %v2181 = vand.u32 2147483647, %v2152
        %v2182 = vand.u32 2147483647, %v2153
        %v2183 = vand.u32 2147483647, %v2154
        %v2184 = vand.u32 2147483647, %v2155
        %v2185 = vsub.f32 0.0, %v2169
        %v2186 = vsub.f32 0.0, %v2170
        %v2187 = vsub.f32 0.0, %v2171
        %v2188 = vsub.f32 0.0, %v2172
        %v2189 = vsub.f32 0.0, %v2173
        %v2190 = vsub.f32 0.0, %v2174
        %v2191 = vsub.f32 0.0, %v2175
        %v2192 = vsub.f32 0.0, %v2176
        %v2193 = vsub.f32 0.0, %v2177
        %v2194 = vsub.f32 0.0, %v2178
        %v2195 = vsub.f32 0.0, %v2179
        %v2196 = vsub.f32 0.0, %v2180
        %v2197 = vsub.f32 0.0, %v2181
        %v2198 = vsub.f32 0.0, %v2182
        %v2199 = vsub.f32 0.0, %v2183
        %v2200 = vsub.f32 0.0, %v2184
        %v2201 = vmul.f32 %v2185, 1.442695
        %v2202 = vpow.pop %v2201
        %v2203 = vmul.f32 %v2186, 1.442695
        %v2204 = vpow.pop %v2203
        %v2205 = vmul.f32 %v2187, 1.442695
        %v2206 = vpow.pop %v2205
        %v2207 = vmul.f32 %v2188, 1.442695
        %v2208 = vpow.pop %v2207
        %v2209 = vmul.f32 %v2189, 1.442695
        %v2210 = vpow.pop %v2209
        %v2211 = vmul.f32 %v2190, 1.442695
        %v2212 = vpow.pop %v2211
        %v2213 = vmul.f32 %v2191, 1.442695
        %v2214 = vpow.pop %v2213
        %v2215 = vmul.f32 %v2192, 1.442695
        %v2216 = vpow.pop %v2215
        %v2217 = vmul.f32 %v2193, 1.442695
        %v2218 = vpow.pop %v2217
        %v2219 = vmul.f32 %v2194, 1.442695
        %v2220 = vpow.pop %v2219
        %v2221 = vmul.f32 %v2195, 1.442695
        %v2222 = vpow.pop %v2221
        %v2223 = vmul.f32 %v2196, 1.442695
        %v2224 = vpow.pop %v2223
        %v2225 = vmul.f32 %v2197, 1.442695
        %v2226 = vpow.pop %v2225
        %v2227 = vmul.f32 %v2198, 1.442695
        %v2228 = vpow.pop %v2227
        %v2229 = vmul.f32 %v2199, 1.442695
        %v2230 = vpow.pop %v2229
        %v2231 = vmul.f32 %v2200, 1.442695
        %v2232 = vpow.pop %v2231
        %v2233 = vsub.f32 %v2202, 1.0
        %v2234 = vsub.f32 %v2204, 1.0
        %v2235 = vsub.f32 %v2206, 1.0
        %v2236 = vsub.f32 %v2208, 1.0
        %v2237 = vsub.f32 %v2210, 1.0
        %v2238 = vsub.f32 %v2212, 1.0
        %v2239 = vsub.f32 %v2214, 1.0
        %v2240 = vsub.f32 %v2216, 1.0
        %v2241 = vsub.f32 %v2218, 1.0
        %v2242 = vsub.f32 %v2220, 1.0
        %v2243 = vsub.f32 %v2222, 1.0
        %v2244 = vsub.f32 %v2224, 1.0
        %v2245 = vsub.f32 %v2226, 1.0
        %v2246 = vsub.f32 %v2228, 1.0
        %v2247 = vsub.f32 %v2230, 1.0
        %v2248 = vsub.f32 %v2232, 1.0
        %vm2249 = vcmp.gt.f32.partialorder %v2140, 0.0
        %vm2250 = vcmp.gt.f32.partialorder %v2141, 0.0
        %vm2251 = vcmp.gt.f32.partialorder %v2142, 0.0
        %vm2252 = vcmp.gt.f32.partialorder %v2143, 0.0
        %vm2253 = vcmp.gt.f32.partialorder %v2144, 0.0
        %vm2254 = vcmp.gt.f32.partialorder %v2145, 0.0
        %vm2255 = vcmp.gt.f32.partialorder %v2146, 0.0
        %vm2256 = vcmp.gt.f32.partialorder %v2147, 0.0
        %vm2257 = vcmp.gt.f32.partialorder %v2148, 0.0
        %vm2258 = vcmp.gt.f32.partialorder %v2149, 0.0
        %vm2259 = vcmp.gt.f32.partialorder %v2150, 0.0
        %vm2260 = vcmp.gt.f32.partialorder %v2151, 0.0
        %vm2261 = vcmp.gt.f32.partialorder %v2152, 0.0
        %vm2262 = vcmp.gt.f32.partialorder %v2153, 0.0
        %vm2263 = vcmp.gt.f32.partialorder %v2154, 0.0
        %vm2264 = vcmp.gt.f32.partialorder %v2155, 0.0
        %v2265 = vsel %vm2249, %v2140, %v2233
        %v2266 = vsel %vm2250, %v2141, %v2234
        %v2267 = vsel %vm2251, %v2142, %v2235
        %v2268 = vsel %vm2252, %v2143, %v2236
        %v2269 = vsel %vm2253, %v2144, %v2237
        %v2270 = vsel %vm2254, %v2145, %v2238
        %v2271 = vsel %vm2255, %v2146, %v2239
        %v2272 = vsel %vm2256, %v2147, %v2240
        %v2273 = vsel %vm2257, %v2148, %v2241
        %v2274 = vsel %vm2258, %v2149, %v2242
        %v2275 = vsel %vm2259, %v2150, %v2243
        %v2276 = vsel %vm2260, %v2151, %v2244
        %v2277 = vsel %vm2261, %v2152, %v2245
        %v2278 = vsel %vm2262, %v2153, %v2246
        %v2279 = vsel %vm2263, %v2154, %v2247
        %v2280 = vsel %vm2264, %v2155, %v2248
        %v2281 = vsub.f32 0.0, %v2140
        %v2282 = vsub.f32 0.0, %v2141
        %v2283 = vsub.f32 0.0, %v2142
        %v2284 = vsub.f32 0.0, %v2143
        %v2285 = vsub.f32 0.0, %v2144
        %v2286 = vsub.f32 0.0, %v2145
        %v2287 = vsub.f32 0.0, %v2146
        %v2288 = vsub.f32 0.0, %v2147
        %v2289 = vsub.f32 0.0, %v2148
        %v2290 = vsub.f32 0.0, %v2149
        %v2291 = vsub.f32 0.0, %v2150
        %v2292 = vsub.f32 0.0, %v2151
        %v2293 = vsub.f32 0.0, %v2152
        %v2294 = vsub.f32 0.0, %v2153
        %v2295 = vsub.f32 0.0, %v2154
        %v2296 = vsub.f32 0.0, %v2155
        %v2297 = vsel %vm2249, %v2233, %v2281
        %v2298 = vsel %vm2250, %v2234, %v2282
        %v2299 = vsel %vm2251, %v2235, %v2283
        %v2300 = vsel %vm2252, %v2236, %v2284
        %v2301 = vsel %vm2253, %v2237, %v2285
        %v2302 = vsel %vm2254, %v2238, %v2286
        %v2303 = vsel %vm2255, %v2239, %v2287
        %v2304 = vsel %vm2256, %v2240, %v2288
        %v2305 = vsel %vm2257, %v2241, %v2289
        %v2306 = vsel %vm2258, %v2242, %v2290
        %v2307 = vsel %vm2259, %v2243, %v2291
        %v2308 = vsel %vm2260, %v2244, %v2292
        %v2309 = vsel %vm2261, %v2245, %v2293
        %v2310 = vsel %vm2262, %v2246, %v2294
        %v2311 = vsel %vm2263, %v2247, %v2295
        %v2312 = vsel %vm2264, %v2248, %v2296
        %2329 = vrot.lane.b32.xlu0 %v2297, 32
        %v2330 = vpop.permute.xlu0 %2329
        %2331 = vrot.lane.b32.xlu0 %v2298, 32
        %v2332 = vpop.permute.xlu0 %2331
        %2333 = vrot.lane.b32.xlu0 %v2299, 32
        %v2334 = vpop.permute.xlu0 %2333
        %2335 = vrot.lane.b32.xlu0 %v2300, 32
        %v2336 = vpop.permute.xlu0 %2335
        %2337 = vrot.lane.b32.xlu0 %v2301, 32
        %v2338 = vpop.permute.xlu0 %2337
        %2339 = vrot.lane.b32.xlu0 %v2302, 32
        %v2340 = vpop.permute.xlu0 %2339
        %2341 = vrot.lane.b32.xlu0 %v2303, 32
        %v2342 = vpop.permute.xlu0 %2341
        %2343 = vrot.lane.b32.xlu0 %v2304, 32
        %v2344 = vpop.permute.xlu0 %2343
        %2345 = vrot.lane.b32.xlu0 %v2305, 32
        %v2346 = vpop.permute.xlu0 %2345
        %2347 = vrot.lane.b32.xlu0 %v2306, 32
        %v2348 = vpop.permute.xlu0 %2347
        %2349 = vrot.lane.b32.xlu0 %v2307, 32
        %v2350 = vpop.permute.xlu0 %2349
        %2351 = vrot.lane.b32.xlu0 %v2308, 32
        %v2352 = vpop.permute.xlu0 %2351
        %2353 = vrot.lane.b32.xlu0 %v2309, 32
        %v2354 = vpop.permute.xlu0 %2353
        %2355 = vrot.lane.b32.xlu0 %v2310, 32
        %v2356 = vpop.permute.xlu0 %2355
        %2357 = vrot.lane.b32.xlu0 %v2311, 32
        %v2358 = vpop.permute.xlu0 %2357
        %2359 = vrot.lane.b32.xlu0 %v2312, 32
        %v2360 = vpop.permute.xlu0 %2359
        %v2377 = vsel %vm1311, %v2265, %v2330
        %v2378 = vsel %vm1311, %v2266, %v2332
        %v2379 = vsel %vm1311, %v2267, %v2334
        %v2380 = vsel %vm1311, %v2268, %v2336
        %v2381 = vsel %vm1311, %v2269, %v2338
        %v2382 = vsel %vm1311, %v2270, %v2340
        %v2383 = vsel %vm1311, %v2271, %v2342
        %v2384 = vsel %vm1311, %v2272, %v2344
        %v2385 = vsel %vm1311, %v2273, %v2346
        %v2386 = vsel %vm1311, %v2274, %v2348
        %v2387 = vsel %vm1311, %v2275, %v2350
        %v2388 = vsel %vm1311, %v2276, %v2352
        %v2389 = vsel %vm1311, %v2277, %v2354
        %v2390 = vsel %vm1311, %v2278, %v2356
        %v2391 = vsel %vm1311, %v2279, %v2358
        %v2392 = vsel %vm1311, %v2280, %v2360
        %v2393 = vpack.c.bf16 %v2378, %v2377
        %v2394 = vpack.c.bf16 %v2380, %v2379
        %v2395 = vpack.c.bf16 %v2382, %v2381
        %v2396 = vpack.c.bf16 %v2384, %v2383
        %v2397 = vpack.c.bf16 %v2386, %v2385
        %v2398 = vpack.c.bf16 %v2388, %v2387
        %v2399 = vpack.c.bf16 %v2390, %v2389
        %v2400 = vpack.c.bf16 %v2392, %v2391
        %v2402 = vlaneseq
        %v2403 = vshrl.u32 %v2402, 7
        %v2404 = vsub.s32 0, %v2403
        %v2405 = vrot.slane %v2168, %v2404
        %v2415 = vunpack.c.l.b16 %v2159
        %v2416 = vunpack.c.l.b16 %v2160
        %v2417 = vunpack.c.l.b16 %v2161
        %v2418 = vunpack.c.l.b16 %v2162
        %v2419 = vunpack.c.l.b16 %v2163
        %v2420 = vunpack.c.l.b16 %v2164
        %v2421 = vunpack.c.l.b16 %v2165
        %v2422 = vunpack.c.l.b16 %v2166
        %v2423 = vpack.c.b16 %v2416, %v2415
        %v2424 = vpack.c.b16 %v2418, %v2417
        %v2425 = vpack.c.b16 %v2420, %v2419
        %v2426 = vpack.c.b16 %v2422, %v2421
        %v2432 = vsel %vm1724, %v2393, 0
        %v2435 = vsel %vm1724, %v2394, 0
        %v2438 = vsel %vm1724, %v2395, 0
        %v2441 = vsel %vm1724, %v2396, 0
        %v2444 = vsel %vm1724, %v2397, 0
        %v2447 = vsel %vm1724, %v2398, 0
        %v2450 = vsel %vm1724, %v2399, 0
        %v2453 = vsel %vm1724, %v2400, 0
        %2455 = vmatprep.subr.bf16.mxu0 0
        %2456 = vmatpush1.bf16.msra.mxu0 %v2423
        %2457 = vmatprep.subr.bf16.mxu0 0
        %2458 = vmatpush1.bf16.msra.mxu0 %v2424
        %2459 = vmatprep.subr.bf16.mxu0 0
        %2460 = vmatpush1.bf16.msra.mxu0 %v2425
        %2461 = vmatprep.subr.bf16.mxu0 0
        %2462 = vmatpush1.bf16.msra.mxu0 %v2426
        %2463 = vmatprep.subr.bf16.mxu0 0
        %2464 = vmatpush1.bf16.msra.mxu0 0
        %2465 = vmatprep.subr.bf16.mxu0 0
        %2466 = vmatpush1.bf16.msra.mxu0 0
        %2467 = vmatprep.subr.bf16.mxu0 0
        %2468 = vmatpush1.bf16.msra.mxu0 0
        %2469 = vmatprep.subr.bf16.mxu0 0
        %2470 = vmatpush1.bf16.msra.mxu0 0
        %2471 = vmatprep.subr.bf16.mxu0 0
        %2472 = vmatpush1.bf16.msra.mxu0 0
        %2473 = vmatprep.subr.bf16.mxu0 0
        %2474 = vmatpush1.bf16.msra.mxu0 0
        %2475 = vmatprep.subr.bf16.mxu0 0
        %2476 = vmatpush1.bf16.msra.mxu0 0
        %2477 = vmatprep.subr.bf16.mxu0 0
        %2478 = vmatpush1.bf16.msra.mxu0 0
        %2479 = vmatprep.subr.bf16.mxu0 0
        %2480 = vmatpush1.bf16.msra.mxu0 0
        %2481 = vmatprep.subr.bf16.mxu0 0
        %2482 = vmatpush1.bf16.msra.mxu0 0
        %2483 = vmatprep.subr.bf16.mxu0 0
        %2484 = vmatpush1.bf16.msra.mxu0 0
        %2485 = vmatprep.subr.bf16.mxu0 0
        %2486 = vmatpush1.bf16.msra.mxu0 0
        %2487 = vmatprep.mubr.bf16.mxu0 0
        %2488 = vmatmul.mubr.bf16.gmra.mrb[0].mxu0 %v2432
        %v2489 = vpop.f32.mrb[0].mxu0
        %v2490 = vadd.f32 %v2405, %v2489
        %v2491 = vpop.f32.mrb[0].mxu0
        %v2492 = vpop.f32.mrb[0].mxu0
        %v2493 = vadd.f32 %v2405, %v2492
        %v2494 = vpop.f32.mrb[0].mxu0
        %2495 = vmatprep.mubr.bf16.mxu0 0
        %2496 = vmatmul.mubr.bf16.gmra.mrb[0].mxu0 %v2435
        %v2497 = vpop.f32.mrb[0].mxu0
        %v2498 = vadd.f32 %v2405, %v2497
        %v2499 = vpop.f32.mrb[0].mxu0
        %v2500 = vpop.f32.mrb[0].mxu0
        %v2501 = vadd.f32 %v2405, %v2500
        %v2502 = vpop.f32.mrb[0].mxu0
        %2503 = vmatprep.mubr.bf16.mxu0 0
        %2504 = vmatmul.mubr.bf16.gmra.mrb[0].mxu0 %v2438
        %v2505 = vpop.f32.mrb[0].mxu0
        %v2506 = vadd.f32 %v2405, %v2505
        %v2507 = vpop.f32.mrb[0].mxu0
        %v2508 = vpop.f32.mrb[0].mxu0
        %v2509 = vadd.f32 %v2405, %v2508
        %v2510 = vpop.f32.mrb[0].mxu0
        %2511 = vmatprep.mubr.bf16.mxu0 0
        %2512 = vmatmul.mubr.bf16.gmra.mrb[0].mxu0 %v2441
        %v2513 = vpop.f32.mrb[0].mxu0
        %v2514 = vadd.f32 %v2405, %v2513
        %v2515 = vpop.f32.mrb[0].mxu0
        %v2516 = vpop.f32.mrb[0].mxu0
        %v2517 = vadd.f32 %v2405, %v2516
        %v2518 = vpop.f32.mrb[0].mxu0
        %2519 = vmatprep.mubr.bf16.mxu0 0
        %2520 = vmatmul.mubr.bf16.gmra.mrb[0].mxu0 %v2444
        %v2521 = vpop.f32.mrb[0].mxu0
        %v2522 = vadd.f32 %v2405, %v2521
        %v2523 = vpop.f32.mrb[0].mxu0
        %v2524 = vpop.f32.mrb[0].mxu0
        %v2525 = vadd.f32 %v2405, %v2524
        %v2526 = vpop.f32.mrb[0].mxu0
        %2527 = vmatprep.mubr.bf16.mxu0 0
        %2528 = vmatmul.mubr.bf16.gmra.mrb[0].mxu0 %v2447
        %v2529 = vpop.f32.mrb[0].mxu0
        %v2530 = vadd.f32 %v2405, %v2529
        %v2531 = vpop.f32.mrb[0].mxu0
        %v2532 = vpop.f32.mrb[0].mxu0
        %v2533 = vadd.f32 %v2405, %v2532
        %v2534 = vpop.f32.mrb[0].mxu0
        %2535 = vmatprep.mubr.bf16.mxu0 0
        %2536 = vmatmul.mubr.bf16.gmra.mrb[0].mxu0 %v2450
        %v2537 = vpop.f32.mrb[0].mxu0
        %v2538 = vadd.f32 %v2405, %v2537
        %v2539 = vpop.f32.mrb[0].mxu0
        %v2540 = vpop.f32.mrb[0].mxu0
        %v2541 = vadd.f32 %v2405, %v2540
        %v2542 = vpop.f32.mrb[0].mxu0
        %2543 = vmatprep.mubr.bf16.mxu0 0
        %2544 = vmatmul.mubr.bf16.gmra.mrb[0].mxu0 %v2453
        %v2545 = vpop.f32.mrb[0].mxu0
        %v2546 = vadd.f32 %v2405, %v2545
        %v2547 = vpop.f32.mrb[0].mxu0
        %v2548 = vpop.f32.mrb[0].mxu0
        %v2549 = vadd.f32 %v2405, %v2548
        %v2550 = vpop.f32.mrb[0].mxu0
        %2551 = vdwg.mxu0
        %v2552 = vadd.f32 %v2078, %v2490
        %v2553 = vadd.f32 %v2081, %v2493
        %v2554 = vadd.f32 %v2086, %v2498
        %v2555 = vadd.f32 %v2089, %v2501
        %v2556 = vadd.f32 %v2094, %v2506
        %v2557 = vadd.f32 %v2097, %v2509
        %v2558 = vadd.f32 %v2102, %v2514
        %v2559 = vadd.f32 %v2105, %v2517
        %v2560 = vadd.f32 %v2110, %v2522
        %v2561 = vadd.f32 %v2113, %v2525
        %v2562 = vadd.f32 %v2118, %v2530
        %v2563 = vadd.f32 %v2121, %v2533
        %v2564 = vadd.f32 %v2126, %v2538
        %v2565 = vadd.f32 %v2129, %v2541
        %v2566 = vadd.f32 %v2134, %v2546
        %v2567 = vadd.f32 %v2137, %v2549
        %s2568 = smul.addr %s1050, 4
        %s2569 = scalar_lea.vmem [#allocation16], %s2568
        %v2570 = vld [vmem:[%s2569] sm:$0xf]
        %v2571 = vld [vmem:[%s2569 + $0x4] sm:$0xf]
        %v2572 = vld [vmem:[%s2569 + $0x8] sm:$0xf]
        %v2573 = vld [vmem:[%s2569 + $0xc] sm:$0xf]
        %v2574 = vld [vmem:[%s2569 + $0x10] sm:$0xf]
        %v2575 = vld [vmem:[%s2569 + $0x14] sm:$0xf]
        %v2576 = vld [vmem:[%s2569 + $0x18] sm:$0xf]
        %v2577 = vld [vmem:[%s2569 + $0x1c] sm:$0xf]
        %v2578 = vld [vmem:[%s2569 + $0x20] sm:$0xf]
        %v2579 = vld [vmem:[%s2569 + $0x24] sm:$0xf]
        %v2580 = vld [vmem:[%s2569 + $0x28] sm:$0xf]
        %v2581 = vld [vmem:[%s2569 + $0x2c] sm:$0xf]
        %v2582 = vld [vmem:[%s2569 + $0x30] sm:$0xf]
        %v2583 = vld [vmem:[%s2569 + $0x34] sm:$0xf]
        %v2584 = vld [vmem:[%s2569 + $0x38] sm:$0xf]
        %v2585 = vld [vmem:[%s2569 + $0x3c] sm:$0xf]
        %v2586 = vld [vmem:[%s2569 + $0x40] sm:$0xf]
        %v2587 = vld [vmem:[%s2569 + $0x44] sm:$0xf]
        %v2588 = vld [vmem:[%s2569 + $0x48] sm:$0xf]
        %v2589 = vld [vmem:[%s2569 + $0x4c] sm:$0xf]
        %v2590 = vld [vmem:[%s2569 + $0x50] sm:$0xf]
        %v2591 = vld [vmem:[%s2569 + $0x54] sm:$0xf]
        %v2592 = vld [vmem:[%s2569 + $0x58] sm:$0xf]
        %v2593 = vld [vmem:[%s2569 + $0x5c] sm:$0xf]
        %v2594 = vld [vmem:[%s2569 + $0x60] sm:$0xf]
        %v2595 = vld [vmem:[%s2569 + $0x64] sm:$0xf]
        %v2596 = vld [vmem:[%s2569 + $0x68] sm:$0xf]
        %v2597 = vld [vmem:[%s2569 + $0x6c] sm:$0xf]
        %v2598 = vld [vmem:[%s2569 + $0x70] sm:$0xf]
        %v2599 = vld [vmem:[%s2569 + $0x74] sm:$0xf]
        %v2600 = vld [vmem:[%s2569 + $0x78] sm:$0xf]
        %v2601 = vld [vmem:[%s2569 + $0x7c] sm:$0xf]
        %v2602 = vld [vmem:[%s2569 + $0x80] sm:$0xf]
        %v2603 = vld [vmem:[%s2569 + $0x84] sm:$0xf]
        %v2604 = vld [vmem:[%s2569 + $0x88] sm:$0xf]
        %v2605 = vld [vmem:[%s2569 + $0x8c] sm:$0xf]
        %v2606 = vld [vmem:[%s2569 + $0x90] sm:$0xf]
        %v2607 = vld [vmem:[%s2569 + $0x94] sm:$0xf]
        %v2608 = vld [vmem:[%s2569 + $0x98] sm:$0xf]
        %v2609 = vld [vmem:[%s2569 + $0x9c] sm:$0xf]
        %v2610 = vld [vmem:[%s2569 + $0xa0] sm:$0xf]
        %v2611 = vld [vmem:[%s2569 + $0xa4] sm:$0xf]
        %v2612 = vld [vmem:[%s2569 + $0xa8] sm:$0xf]
        %v2613 = vld [vmem:[%s2569 + $0xac] sm:$0xf]
        %v2614 = vld [vmem:[%s2569 + $0xb0] sm:$0xf]
        %v2615 = vld [vmem:[%s2569 + $0xb4] sm:$0xf]
        %v2616 = vld [vmem:[%s2569 + $0xb8] sm:$0xf]
        %v2617 = vld [vmem:[%s2569 + $0xbc] sm:$0xf]
        %s2618 = scalar_lea.vmem [#allocation17], %s56
        %v2619 = vld [vmem:[%s2618] sm:$0x1]
        %v2620 = vand.u32 2147483647, %v2552
        %v2621 = vand.u32 2147483647, %v2553
        %v2622 = vand.u32 2147483647, %v2554
        %v2623 = vand.u32 2147483647, %v2555
        %v2624 = vand.u32 2147483647, %v2556
        %v2625 = vand.u32 2147483647, %v2557
        %v2626 = vand.u32 2147483647, %v2558
        %v2627 = vand.u32 2147483647, %v2559
        %v2628 = vand.u32 2147483647, %v2560
        %v2629 = vand.u32 2147483647, %v2561
        %v2630 = vand.u32 2147483647, %v2562
        %v2631 = vand.u32 2147483647, %v2563
        %v2632 = vand.u32 2147483647, %v2564
        %v2633 = vand.u32 2147483647, %v2565
        %v2634 = vand.u32 2147483647, %v2566
        %v2635 = vand.u32 2147483647, %v2567
        %v2636 = vsub.f32 0.0, %v2620
        %v2637 = vsub.f32 0.0, %v2621
        %v2638 = vsub.f32 0.0, %v2622
        %v2639 = vsub.f32 0.0, %v2623
        %v2640 = vsub.f32 0.0, %v2624
        %v2641 = vsub.f32 0.0, %v2625
        %v2642 = vsub.f32 0.0, %v2626
        %v2643 = vsub.f32 0.0, %v2627
        %v2644 = vsub.f32 0.0, %v2628
        %v2645 = vsub.f32 0.0, %v2629
        %v2646 = vsub.f32 0.0, %v2630
        %v2647 = vsub.f32 0.0, %v2631
        %v2648 = vsub.f32 0.0, %v2632
        %v2649 = vsub.f32 0.0, %v2633
        %v2650 = vsub.f32 0.0, %v2634
        %v2651 = vsub.f32 0.0, %v2635
        %v2652 = vmul.f32 %v2636, 1.442695
        %v2653 = vpow.pop %v2652
        %v2654 = vmul.f32 %v2637, 1.442695
        %v2655 = vpow.pop %v2654
        %v2656 = vmul.f32 %v2638, 1.442695
        %v2657 = vpow.pop %v2656
        %v2658 = vmul.f32 %v2639, 1.442695
        %v2659 = vpow.pop %v2658
        %v2660 = vmul.f32 %v2640, 1.442695
        %v2661 = vpow.pop %v2660
        %v2662 = vmul.f32 %v2641, 1.442695
        %v2663 = vpow.pop %v2662
        %v2664 = vmul.f32 %v2642, 1.442695
        %v2665 = vpow.pop %v2664
        %v2666 = vmul.f32 %v2643, 1.442695
        %v2667 = vpow.pop %v2666
        %v2668 = vmul.f32 %v2644, 1.442695
        %v2669 = vpow.pop %v2668
        %v2670 = vmul.f32 %v2645, 1.442695
        %v2671 = vpow.pop %v2670
        %v2672 = vmul.f32 %v2646, 1.442695
        %v2673 = vpow.pop %v2672
        %v2674 = vmul.f32 %v2647, 1.442695
        %v2675 = vpow.pop %v2674
        %v2676 = vmul.f32 %v2648, 1.442695
        %v2677 = vpow.pop %v2676
        %v2678 = vmul.f32 %v2649, 1.442695
        %v2679 = vpow.pop %v2678
        %v2680 = vmul.f32 %v2650, 1.442695
        %v2681 = vpow.pop %v2680
        %v2682 = vmul.f32 %v2651, 1.442695
        %v2683 = vpow.pop %v2682
        %v2684 = vsub.f32 %v2653, 1.0
        %v2685 = vsub.f32 %v2655, 1.0
        %v2686 = vsub.f32 %v2657, 1.0
        %v2687 = vsub.f32 %v2659, 1.0
        %v2688 = vsub.f32 %v2661, 1.0
        %v2689 = vsub.f32 %v2663, 1.0
        %v2690 = vsub.f32 %v2665, 1.0
        %v2691 = vsub.f32 %v2667, 1.0
        %v2692 = vsub.f32 %v2669, 1.0
        %v2693 = vsub.f32 %v2671, 1.0
        %v2694 = vsub.f32 %v2673, 1.0
        %v2695 = vsub.f32 %v2675, 1.0
        %v2696 = vsub.f32 %v2677, 1.0
        %v2697 = vsub.f32 %v2679, 1.0
        %v2698 = vsub.f32 %v2681, 1.0
        %v2699 = vsub.f32 %v2683, 1.0
        %vm2700 = vcmp.gt.f32.partialorder %v2552, 0.0
        %vm2701 = vcmp.gt.f32.partialorder %v2553, 0.0
        %vm2702 = vcmp.gt.f32.partialorder %v2554, 0.0
        %vm2703 = vcmp.gt.f32.partialorder %v2555, 0.0
        %vm2704 = vcmp.gt.f32.partialorder %v2556, 0.0
        %vm2705 = vcmp.gt.f32.partialorder %v2557, 0.0
        %vm2706 = vcmp.gt.f32.partialorder %v2558, 0.0
        %vm2707 = vcmp.gt.f32.partialorder %v2559, 0.0
        %vm2708 = vcmp.gt.f32.partialorder %v2560, 0.0
        %vm2709 = vcmp.gt.f32.partialorder %v2561, 0.0
        %vm2710 = vcmp.gt.f32.partialorder %v2562, 0.0
        %vm2711 = vcmp.gt.f32.partialorder %v2563, 0.0
        %vm2712 = vcmp.gt.f32.partialorder %v2564, 0.0
        %vm2713 = vcmp.gt.f32.partialorder %v2565, 0.0
        %vm2714 = vcmp.gt.f32.partialorder %v2566, 0.0
        %vm2715 = vcmp.gt.f32.partialorder %v2567, 0.0
        %v2716 = vsel %vm2700, %v2552, %v2684
        %v2717 = vsel %vm2701, %v2553, %v2685
        %v2718 = vsel %vm2702, %v2554, %v2686
        %v2719 = vsel %vm2703, %v2555, %v2687
        %v2720 = vsel %vm2704, %v2556, %v2688
        %v2721 = vsel %vm2705, %v2557, %v2689
        %v2722 = vsel %vm2706, %v2558, %v2690
        %v2723 = vsel %vm2707, %v2559, %v2691
        %v2724 = vsel %vm2708, %v2560, %v2692
        %v2725 = vsel %vm2709, %v2561, %v2693
        %v2726 = vsel %vm2710, %v2562, %v2694
        %v2727 = vsel %vm2711, %v2563, %v2695
        %v2728 = vsel %vm2712, %v2564, %v2696
        %v2729 = vsel %vm2713, %v2565, %v2697
        %v2730 = vsel %vm2714, %v2566, %v2698
        %v2731 = vsel %vm2715, %v2567, %v2699
        %v2732 = vsub.f32 0.0, %v2552
        %v2733 = vsub.f32 0.0, %v2553
        %v2734 = vsub.f32 0.0, %v2554
        %v2735 = vsub.f32 0.0, %v2555
        %v2736 = vsub.f32 0.0, %v2556
        %v2737 = vsub.f32 0.0, %v2557
        %v2738 = vsub.f32 0.0, %v2558
        %v2739 = vsub.f32 0.0, %v2559
        %v2740 = vsub.f32 0.0, %v2560
        %v2741 = vsub.f32 0.0, %v2561
        %v2742 = vsub.f32 0.0, %v2562
        %v2743 = vsub.f32 0.0, %v2563
        %v2744 = vsub.f32 0.0, %v2564
        %v2745 = vsub.f32 0.0, %v2565
        %v2746 = vsub.f32 0.0, %v2566
        %v2747 = vsub.f32 0.0, %v2567
        %v2748 = vsel %vm2700, %v2684, %v2732
        %v2749 = vsel %vm2701, %v2685, %v2733
        %v2750 = vsel %vm2702, %v2686, %v2734
        %v2751 = vsel %vm2703, %v2687, %v2735
        %v2752 = vsel %vm2704, %v2688, %v2736
        %v2753 = vsel %vm2705, %v2689, %v2737
        %v2754 = vsel %vm2706, %v2690, %v2738
        %v2755 = vsel %vm2707, %v2691, %v2739
        %v2756 = vsel %vm2708, %v2692, %v2740
        %v2757 = vsel %vm2709, %v2693, %v2741
        %v2758 = vsel %vm2710, %v2694, %v2742
        %v2759 = vsel %vm2711, %v2695, %v2743
        %v2760 = vsel %vm2712, %v2696, %v2744
        %v2761 = vsel %vm2713, %v2697, %v2745
        %v2762 = vsel %vm2714, %v2698, %v2746
        %v2763 = vsel %vm2715, %v2699, %v2747
        %2780 = vrot.lane.b32.xlu0 %v2748, 32
        %v2781 = vpop.permute.xlu0 %2780
        %2782 = vrot.lane.b32.xlu0 %v2749, 32
        %v2783 = vpop.permute.xlu0 %2782
        %2784 = vrot.lane.b32.xlu0 %v2750, 32
        %v2785 = vpop.permute.xlu0 %2784
        %2786 = vrot.lane.b32.xlu0 %v2751, 32
        %v2787 = vpop.permute.xlu0 %2786
        %2788 = vrot.lane.b32.xlu0 %v2752, 32
        %v2789 = vpop.permute.xlu0 %2788
        %2790 = vrot.lane.b32.xlu0 %v2753, 32
        %v2791 = vpop.permute.xlu0 %2790
        %2792 = vrot.lane.b32.xlu0 %v2754, 32
        %v2793 = vpop.permute.xlu0 %2792
        %2794 = vrot.lane.b32.xlu0 %v2755, 32
        %v2795 = vpop.permute.xlu0 %2794
        %2796 = vrot.lane.b32.xlu0 %v2756, 32
        %v2797 = vpop.permute.xlu0 %2796
        %2798 = vrot.lane.b32.xlu0 %v2757, 32
        %v2799 = vpop.permute.xlu0 %2798
        %2800 = vrot.lane.b32.xlu0 %v2758, 32
        %v2801 = vpop.permute.xlu0 %2800
        %2802 = vrot.lane.b32.xlu0 %v2759, 32
        %v2803 = vpop.permute.xlu0 %2802
        %2804 = vrot.lane.b32.xlu0 %v2760, 32
        %v2805 = vpop.permute.xlu0 %2804
        %2806 = vrot.lane.b32.xlu0 %v2761, 32
        %v2807 = vpop.permute.xlu0 %2806
        %2808 = vrot.lane.b32.xlu0 %v2762, 32
        %v2809 = vpop.permute.xlu0 %2808
        %2810 = vrot.lane.b32.xlu0 %v2763, 32
        %v2811 = vpop.permute.xlu0 %2810
        %v2828 = vsel %vm1311, %v2716, %v2781
        %v2829 = vsel %vm1311, %v2717, %v2783
        %v2830 = vsel %vm1311, %v2718, %v2785
        %v2831 = vsel %vm1311, %v2719, %v2787
        %v2832 = vsel %vm1311, %v2720, %v2789
        %v2833 = vsel %vm1311, %v2721, %v2791
        %v2834 = vsel %vm1311, %v2722, %v2793
        %v2835 = vsel %vm1311, %v2723, %v2795
        %v2836 = vsel %vm1311, %v2724, %v2797
        %v2837 = vsel %vm1311, %v2725, %v2799
        %v2838 = vsel %vm1311, %v2726, %v2801
        %v2839 = vsel %vm1311, %v2727, %v2803
        %v2840 = vsel %vm1311, %v2728, %v2805
        %v2841 = vsel %vm1311, %v2729, %v2807
        %v2842 = vsel %vm1311, %v2730, %v2809
        %v2843 = vsel %vm1311, %v2731, %v2811
        %v2860 = vrot.slane %v2828, 7
        %v2861 = vrot.slane %v2829, 7
        %v2862 = vrot.slane %v2830, 7
        %v2863 = vrot.slane %v2831, 7
        %v2864 = vrot.slane %v2832, 7
        %v2865 = vrot.slane %v2833, 7
        %v2866 = vrot.slane %v2834, 7
        %v2867 = vrot.slane %v2835, 7
        %v2868 = vrot.slane %v2836, 7
        %v2869 = vrot.slane %v2837, 7
        %v2870 = vrot.slane %v2838, 7
        %v2871 = vrot.slane %v2839, 7
        %v2872 = vrot.slane %v2840, 7
        %v2873 = vrot.slane %v2841, 7
        %v2874 = vrot.slane %v2842, 7
        %v2875 = vrot.slane %v2843, 7
        %v2892 = vsel %vm1379, 0.0, %v2860
        %v2893 = vsel %vm1379, 0.0, %v2861
        %v2894 = vsel %vm1379, 0.0, %v2862
        %v2895 = vsel %vm1379, 0.0, %v2863
        %v2896 = vsel %vm1379, 0.0, %v2864
        %v2897 = vsel %vm1379, 0.0, %v2865
        %v2898 = vsel %vm1379, 0.0, %v2866
        %v2899 = vsel %vm1379, 0.0, %v2867
        %v2900 = vsel %vm1379, 0.0, %v2868
        %v2901 = vsel %vm1379, 0.0, %v2869
        %v2902 = vsel %vm1379, 0.0, %v2870
        %v2903 = vsel %vm1379, 0.0, %v2871
        %v2904 = vsel %vm1379, 0.0, %v2872
        %v2905 = vsel %vm1379, 0.0, %v2873
        %v2906 = vsel %vm1379, 0.0, %v2874
        %v2907 = vsel %vm1379, 0.0, %v2875
        %v2908 = vsel %vm1379, %v2860, 0.0
        %v2909 = vsel %vm1379, %v2861, 0.0
        %v2910 = vsel %vm1379, %v2862, 0.0
        %v2911 = vsel %vm1379, %v2863, 0.0
        %v2912 = vsel %vm1379, %v2864, 0.0
        %v2913 = vsel %vm1379, %v2865, 0.0
        %v2914 = vsel %vm1379, %v2866, 0.0
        %v2915 = vsel %vm1379, %v2867, 0.0
        %v2916 = vsel %vm1379, %v2868, 0.0
        %v2917 = vsel %vm1379, %v2869, 0.0
        %v2918 = vsel %vm1379, %v2870, 0.0
        %v2919 = vsel %vm1379, %v2871, 0.0
        %v2920 = vsel %vm1379, %v2872, 0.0
        %v2921 = vsel %vm1379, %v2873, 0.0
        %v2922 = vsel %vm1379, %v2874, 0.0
        %v2923 = vsel %vm1379, %v2875, 0.0
        %v2952 = vrot.slane %v2892, 1
        %v2953 = vrot.slane %v2908, 1
        %v2954 = vsel %vm1444, %v2952, %v2953
        %v2955 = vrot.slane %v2893, 1
        %v2956 = vrot.slane %v2909, 1
        %v2957 = vsel %vm1444, %v2955, %v2956
        %v2958 = vrot.slane %v2894, 1
        %v2959 = vrot.slane %v2910, 1
        %v2960 = vsel %vm1444, %v2958, %v2959
        %v2961 = vrot.slane %v2895, 1
        %v2962 = vrot.slane %v2911, 1
        %v2963 = vsel %vm1444, %v2961, %v2962
        %v2964 = vrot.slane %v2896, 1
        %v2965 = vrot.slane %v2912, 1
        %v2966 = vsel %vm1444, %v2964, %v2965
        %v2967 = vrot.slane %v2897, 1
        %v2968 = vrot.slane %v2913, 1
        %v2969 = vsel %vm1444, %v2967, %v2968
        %v2970 = vrot.slane %v2898, 1
        %v2971 = vrot.slane %v2914, 1
        %v2972 = vsel %vm1444, %v2970, %v2971
        %v2973 = vrot.slane %v2900, 1
        %v2974 = vrot.slane %v2916, 1
        %v2975 = vsel %vm1444, %v2973, %v2974
        %v2976 = vrot.slane %v2901, 1
        %v2977 = vrot.slane %v2917, 1
        %v2978 = vsel %vm1444, %v2976, %v2977
        %v2979 = vrot.slane %v2902, 1
        %v2980 = vrot.slane %v2918, 1
        %v2981 = vsel %vm1444, %v2979, %v2980
        %v2982 = vrot.slane %v2903, 1
        %v2983 = vrot.slane %v2919, 1
        %v2984 = vsel %vm1444, %v2982, %v2983
        %v2985 = vrot.slane %v2904, 1
        %v2986 = vrot.slane %v2920, 1
        %v2987 = vsel %vm1444, %v2985, %v2986
        %v2988 = vrot.slane %v2905, 1
        %v2989 = vrot.slane %v2921, 1
        %v2990 = vsel %vm1444, %v2988, %v2989
        %v2991 = vrot.slane %v2906, 1
        %v2992 = vrot.slane %v2922, 1
        %v2993 = vsel %vm1444, %v2991, %v2992
        %2994 = vrot.lane.b32.xlu0 %v2954, 64
        %v2995 = vpop.permute.xlu0 %2994
        %2996 = vrot.lane.b32.xlu0 %v2957, 64
        %v2997 = vpop.permute.xlu0 %2996
        %2998 = vrot.lane.b32.xlu0 %v2960, 64
        %v2999 = vpop.permute.xlu0 %2998
        %3000 = vrot.lane.b32.xlu0 %v2963, 64
        %v3001 = vpop.permute.xlu0 %3000
        %3002 = vrot.lane.b32.xlu0 %v2966, 64
        %v3003 = vpop.permute.xlu0 %3002
        %3004 = vrot.lane.b32.xlu0 %v2969, 64
        %v3005 = vpop.permute.xlu0 %3004
        %3006 = vrot.lane.b32.xlu0 %v2972, 64
        %v3007 = vpop.permute.xlu0 %3006
        %3008 = vrot.lane.b32.xlu0 %v2975, 64
        %v3009 = vpop.permute.xlu0 %3008
        %3010 = vrot.lane.b32.xlu0 %v2978, 64
        %v3011 = vpop.permute.xlu0 %3010
        %3012 = vrot.lane.b32.xlu0 %v2981, 64
        %v3013 = vpop.permute.xlu0 %3012
        %3014 = vrot.lane.b32.xlu0 %v2984, 64
        %v3015 = vpop.permute.xlu0 %3014
        %3016 = vrot.lane.b32.xlu0 %v2987, 64
        %v3017 = vpop.permute.xlu0 %3016
        %3018 = vrot.lane.b32.xlu0 %v2990, 64
        %v3019 = vpop.permute.xlu0 %3018
        %3020 = vrot.lane.b32.xlu0 %v2993, 64
        %v3021 = vpop.permute.xlu0 %3020
        %v3036 = vrot.slane %v2892, 2
        %v3037 = vrot.slane %v2908, 2
        %v3038 = vsel %vm1535, %v3036, %v3037
        %v3039 = vrot.slane %v2893, 2
        %v3040 = vrot.slane %v2909, 2
        %v3041 = vsel %vm1535, %v3039, %v3040
        %v3042 = vrot.slane %v2894, 2
        %v3043 = vrot.slane %v2910, 2
        %v3044 = vsel %vm1535, %v3042, %v3043
        %v3045 = vrot.slane %v2895, 2
        %v3046 = vrot.slane %v2911, 2
        %v3047 = vsel %vm1535, %v3045, %v3046
        %v3048 = vrot.slane %v2896, 2
        %v3049 = vrot.slane %v2912, 2
        %v3050 = vsel %vm1535, %v3048, %v3049
        %v3051 = vrot.slane %v2897, 2
        %v3052 = vrot.slane %v2913, 2
        %v3053 = vsel %vm1535, %v3051, %v3052
        %v3054 = vrot.slane %v2898, 2
        %v3055 = vrot.slane %v2914, 2
        %v3056 = vsel %vm1535, %v3054, %v3055
        %v3057 = vrot.slane %v2900, 2
        %v3058 = vrot.slane %v2916, 2
        %v3059 = vsel %vm1535, %v3057, %v3058
        %v3060 = vrot.slane %v2901, 2
        %v3061 = vrot.slane %v2917, 2
        %v3062 = vsel %vm1535, %v3060, %v3061
        %v3063 = vrot.slane %v2902, 2
        %v3064 = vrot.slane %v2918, 2
        %v3065 = vsel %vm1535, %v3063, %v3064
        %v3066 = vrot.slane %v2903, 2
        %v3067 = vrot.slane %v2919, 2
        %v3068 = vsel %vm1535, %v3066, %v3067
        %v3069 = vrot.slane %v2904, 2
        %v3070 = vrot.slane %v2920, 2
        %v3071 = vsel %vm1535, %v3069, %v3070
        %v3072 = vrot.slane %v2905, 2
        %v3073 = vrot.slane %v2921, 2
        %v3074 = vsel %vm1535, %v3072, %v3073
        %v3075 = vrot.slane %v2906, 2
        %v3076 = vrot.slane %v2922, 2
        %v3077 = vsel %vm1535, %v3075, %v3076
        %3094 = vrot.lane.b32.xlu0 %v2892, 64
        %v3095 = vpop.permute.xlu0 %3094
        %3096 = vrot.lane.b32.xlu0 %v2893, 64
        %v3097 = vpop.permute.xlu0 %3096
        %3098 = vrot.lane.b32.xlu0 %v2894, 64
        %v3099 = vpop.permute.xlu0 %3098
        %3100 = vrot.lane.b32.xlu0 %v2895, 64
        %v3101 = vpop.permute.xlu0 %3100
        %3102 = vrot.lane.b32.xlu0 %v2896, 64
        %v3103 = vpop.permute.xlu0 %3102
        %3104 = vrot.lane.b32.xlu0 %v2897, 64
        %v3105 = vpop.permute.xlu0 %3104
        %3106 = vrot.lane.b32.xlu0 %v2898, 64
        %v3107 = vpop.permute.xlu0 %3106
        %3108 = vrot.lane.b32.xlu0 %v2899, 64
        %v3109 = vpop.permute.xlu0 %3108
        %3110 = vrot.lane.b32.xlu0 %v2900, 64
        %v3111 = vpop.permute.xlu0 %3110
        %3112 = vrot.lane.b32.xlu0 %v2901, 64
        %v3113 = vpop.permute.xlu0 %3112
        %3114 = vrot.lane.b32.xlu0 %v2902, 64
        %v3115 = vpop.permute.xlu0 %3114
        %3116 = vrot.lane.b32.xlu0 %v2903, 64
        %v3117 = vpop.permute.xlu0 %3116
        %3118 = vrot.lane.b32.xlu0 %v2904, 64
        %v3119 = vpop.permute.xlu0 %3118
        %3120 = vrot.lane.b32.xlu0 %v2905, 64
        %v3121 = vpop.permute.xlu0 %3120
        %3122 = vrot.lane.b32.xlu0 %v2906, 64
        %v3123 = vpop.permute.xlu0 %3122
        %3124 = vrot.lane.b32.xlu0 %v2907, 64
        %v3125 = vpop.permute.xlu0 %3124
        %v3144 = vrot.slane %v2899, 1
        %v3145 = vrot.slane %v2915, 1
        %v3146 = vsel %vm1444, %v3144, %v3145
        %v3147 = vrot.slane %v2907, 1
        %v3148 = vrot.slane %v2923, 1
        %v3149 = vsel %vm1444, %v3147, %v3148
        %v3166 = vrot.slane %v2899, 2
        %v3167 = vrot.slane %v2915, 2
        %v3168 = vsel %vm1535, %v3166, %v3167
        %v3169 = vrot.slane %v2907, 2
        %v3170 = vrot.slane %v2923, 2
        %v3171 = vsel %vm1535, %v3169, %v3170
        %3172 = vrot.lane.b32.xlu0 %v3038, 64
        %v3173 = vpop.permute.xlu0 %3172
        %3174 = vrot.lane.b32.xlu0 %v3041, 64
        %v3175 = vpop.permute.xlu0 %3174
        %3176 = vrot.lane.b32.xlu0 %v3044, 64
        %v3177 = vpop.permute.xlu0 %3176
        %3178 = vrot.lane.b32.xlu0 %v3047, 64
        %v3179 = vpop.permute.xlu0 %3178
        %3180 = vrot.lane.b32.xlu0 %v3050, 64
        %v3181 = vpop.permute.xlu0 %3180
        %3182 = vrot.lane.b32.xlu0 %v3053, 64
        %v3183 = vpop.permute.xlu0 %3182
        %3184 = vrot.lane.b32.xlu0 %v3056, 64
        %v3185 = vpop.permute.xlu0 %3184
        %3186 = vrot.lane.b32.xlu0 %v3168, 64
        %v3187 = vpop.permute.xlu0 %3186
        %3188 = vrot.lane.b32.xlu0 %v3059, 64
        %v3189 = vpop.permute.xlu0 %3188
        %3190 = vrot.lane.b32.xlu0 %v3062, 64
        %v3191 = vpop.permute.xlu0 %3190
        %3192 = vrot.lane.b32.xlu0 %v3065, 64
        %v3193 = vpop.permute.xlu0 %3192
        %3194 = vrot.lane.b32.xlu0 %v3068, 64
        %v3195 = vpop.permute.xlu0 %3194
        %3196 = vrot.lane.b32.xlu0 %v3071, 64
        %v3197 = vpop.permute.xlu0 %3196
        %3198 = vrot.lane.b32.xlu0 %v3074, 64
        %v3199 = vpop.permute.xlu0 %3198
        %3200 = vrot.lane.b32.xlu0 %v3077, 64
        %v3201 = vpop.permute.xlu0 %3200
        %3202 = vrot.lane.b32.xlu0 %v3171, 64
        %v3203 = vpop.permute.xlu0 %3202
        %v3220 = vsel %vm1724, %v2892, %v2995
        %v3221 = vsel %vm1724, %v2893, %v2997
        %v3222 = vsel %vm1724, %v2894, %v2999
        %v3223 = vsel %vm1724, %v2895, %v3001
        %v3224 = vsel %vm1724, %v2896, %v3003
        %v3225 = vsel %vm1724, %v2897, %v3005
        %v3226 = vsel %vm1724, %v2898, %v3007
        %v3227 = vsel %vm1724, %v2900, %v3009
        %v3228 = vsel %vm1724, %v2901, %v3011
        %v3229 = vsel %vm1724, %v2902, %v3013
        %v3230 = vsel %vm1724, %v2903, %v3015
        %v3231 = vsel %vm1724, %v2904, %v3017
        %v3232 = vsel %vm1724, %v2905, %v3019
        %v3233 = vsel %vm1724, %v2906, %v3021
        %v3234 = vsel %vm1724, %v1538, %v3095
        %v3235 = vsel %vm1724, %v3038, %v3097
        %v3236 = vsel %vm1724, %v3041, %v3099
        %v3237 = vsel %vm1724, %v3044, %v3101
        %v3238 = vsel %vm1724, %v3047, %v3103
        %v3239 = vsel %vm1724, %v3050, %v3105
        %v3240 = vsel %vm1724, %v3053, %v3107
        %v3241 = vsel %vm1724, %v3056, %v3109
        %v3242 = vsel %vm1724, %v1538, %v3111
        %v3243 = vsel %vm1724, %v3059, %v3113
        %v3244 = vsel %vm1724, %v3062, %v3115
        %v3245 = vsel %vm1724, %v3065, %v3117
        %v3246 = vsel %vm1724, %v3068, %v3119
        %v3247 = vsel %vm1724, %v3071, %v3121
        %v3248 = vsel %vm1724, %v3074, %v3123
        %v3249 = vsel %vm1724, %v3077, %v3125
        %v3250 = vsel %vm1724, %v2954, %v3173
        %v3251 = vsel %vm1724, %v2957, %v3175
        %v3252 = vsel %vm1724, %v2960, %v3177
        %v3253 = vsel %vm1724, %v2963, %v3179
        %v3254 = vsel %vm1724, %v2966, %v3181
        %v3255 = vsel %vm1724, %v2969, %v3183
        %v3256 = vsel %vm1724, %v2972, %v3185
        %v3257 = vsel %vm1724, %v3146, %v3187
        %v3258 = vsel %vm1724, %v2975, %v3189
        %v3259 = vsel %vm1724, %v2978, %v3191
        %v3260 = vsel %vm1724, %v2981, %v3193
        %v3261 = vsel %vm1724, %v2984, %v3195
        %v3262 = vsel %vm1724, %v2987, %v3197
        %v3263 = vsel %vm1724, %v2990, %v3199
        %v3264 = vsel %vm1724, %v2993, %v3201
        %v3265 = vsel %vm1724, %v3149, %v3203
        %v3266 = vpack.c.bf16 %v3220, %v1725
        %v3267 = vpack.c.bf16 %v3235, %v3234
        %v3268 = vpack.c.bf16 %v3251, %v3250
        %v3269 = vpack.c.bf16 %v3222, %v3221
        %v3270 = vpack.c.bf16 %v3237, %v3236
        %v3271 = vpack.c.bf16 %v3253, %v3252
        %v3272 = vpack.c.bf16 %v3224, %v3223
        %v3273 = vpack.c.bf16 %v3239, %v3238
        %v3274 = vpack.c.bf16 %v3255, %v3254
        %v3275 = vpack.c.bf16 %v3226, %v3225
        %v3276 = vpack.c.bf16 %v3241, %v3240
        %v3277 = vpack.c.bf16 %v3257, %v3256
        %v3278 = vpack.c.bf16 %v3227, %v1725
        %v3279 = vpack.c.bf16 %v3243, %v3242
        %v3280 = vpack.c.bf16 %v3259, %v3258
        %v3281 = vpack.c.bf16 %v3229, %v3228
        %v3282 = vpack.c.bf16 %v3245, %v3244
        %v3283 = vpack.c.bf16 %v3261, %v3260
        %v3284 = vpack.c.bf16 %v3231, %v3230
        %v3285 = vpack.c.bf16 %v3247, %v3246
        %v3286 = vpack.c.bf16 %v3263, %v3262
        %v3287 = vpack.c.bf16 %v3233, %v3232
        %v3288 = vpack.c.bf16 %v3249, %v3248
        %v3289 = vpack.c.bf16 %v3265, %v3264
        %v3291 = vlaneseq
        %v3292 = vshrl.u32 %v3291, 7
        %v3293 = vsub.s32 0, %v3292
        %v3294 = vrot.slane %v2619, %v3293
        %v3344 = vunpack.c.l.b16 %v2570
        %v3345 = vunpack.c.l.b16 %v2571
        %v3346 = vunpack.c.l.b16 %v2572
        %v3347 = vunpack.c.l.b16 %v2573
        %v3348 = vunpack.c.l.b16 %v2574
        %v3349 = vunpack.c.l.b16 %v2575
        %v3350 = vunpack.c.l.b16 %v2576
        %v3351 = vunpack.c.l.b16 %v2577
        %v3352 = vunpack.c.l.b16 %v2578
        %v3353 = vunpack.c.l.b16 %v2579
        %v3354 = vunpack.c.l.b16 %v2580
        %v3355 = vunpack.c.l.b16 %v2581
        %v3356 = vunpack.c.l.b16 %v2582
        %v3357 = vunpack.c.l.b16 %v2583
        %v3358 = vunpack.c.l.b16 %v2584
        %v3359 = vunpack.c.l.b16 %v2585
        %v3360 = vunpack.c.l.b16 %v2586
        %v3361 = vunpack.c.l.b16 %v2587
        %v3362 = vunpack.c.l.b16 %v2588
        %v3363 = vunpack.c.l.b16 %v2589
        %v3364 = vunpack.c.l.b16 %v2590
        %v3365 = vunpack.c.l.b16 %v2591
        %v3366 = vunpack.c.l.b16 %v2592
        %v3367 = vunpack.c.l.b16 %v2593
        %v3368 = vunpack.c.l.b16 %v2594
        %v3369 = vunpack.c.l.b16 %v2595
        %v3370 = vunpack.c.l.b16 %v2596
        %v3371 = vunpack.c.l.b16 %v2597
        %v3372 = vunpack.c.l.b16 %v2598
        %v3373 = vunpack.c.l.b16 %v2599
        %v3374 = vunpack.c.l.b16 %v2600
        %v3375 = vunpack.c.l.b16 %v2601
        %v3376 = vunpack.c.l.b16 %v2602
        %v3377 = vunpack.c.l.b16 %v2603
        %v3378 = vunpack.c.l.b16 %v2604
        %v3379 = vunpack.c.l.b16 %v2605
        %v3380 = vunpack.c.l.b16 %v2606
        %v3381 = vunpack.c.l.b16 %v2607
        %v3382 = vunpack.c.l.b16 %v2608
        %v3383 = vunpack.c.l.b16 %v2609
        %v3384 = vunpack.c.l.b16 %v2610
        %v3385 = vunpack.c.l.b16 %v2611
        %v3386 = vunpack.c.l.b16 %v2612
        %v3387 = vunpack.c.l.b16 %v2613
        %v3388 = vunpack.c.l.b16 %v2614
        %v3389 = vunpack.c.l.b16 %v2615
        %v3390 = vunpack.c.l.b16 %v2616
        %v3391 = vunpack.c.l.b16 %v2617
        %v3392 = vpack.c.b16 %v3345, %v3344
        %v3393 = vpack.c.b16 %v3347, %v3346
        %v3394 = vpack.c.b16 %v3349, %v3348
        %v3395 = vpack.c.b16 %v3351, %v3350
        %v3396 = vpack.c.b16 %v3353, %v3352
        %v3397 = vpack.c.b16 %v3355, %v3354
        %v3398 = vpack.c.b16 %v3357, %v3356
        %v3399 = vpack.c.b16 %v3359, %v3358
        %v3400 = vpack.c.b16 %v3361, %v3360
        %v3401 = vpack.c.b16 %v3363, %v3362
        %v3402 = vpack.c.b16 %v3365, %v3364
        %v3403 = vpack.c.b16 %v3367, %v3366
        %v3404 = vpack.c.b16 %v3369, %v3368
        %v3405 = vpack.c.b16 %v3371, %v3370
        %v3406 = vpack.c.b16 %v3373, %v3372
        %v3407 = vpack.c.b16 %v3375, %v3374
        %v3408 = vpack.c.b16 %v3377, %v3376
        %v3409 = vpack.c.b16 %v3379, %v3378
        %v3410 = vpack.c.b16 %v3381, %v3380
        %v3411 = vpack.c.b16 %v3383, %v3382
        %v3412 = vpack.c.b16 %v3385, %v3384
        %v3413 = vpack.c.b16 %v3387, %v3386
        %v3414 = vpack.c.b16 %v3389, %v3388
        %v3415 = vpack.c.b16 %v3391, %v3390
        %3440 = vmatprep.subr.bf16.mxu0 0
        %3441 = vmatpush1.bf16.msra.mxu0 %v3392
        %3442 = vmatprep.subr.bf16.mxu0 0
        %3443 = vmatpush1.bf16.msra.mxu0 %v3393
        %3444 = vmatprep.subr.bf16.mxu0 0
        %3445 = vmatpush1.bf16.msra.mxu0 %v3394
        %3446 = vmatprep.subr.bf16.mxu0 0
        %3447 = vmatpush1.bf16.msra.mxu0 %v3395
        %3448 = vmatprep.subr.bf16.mxu0 0
        %3449 = vmatpush1.bf16.msra.mxu0 %v3396
        %3450 = vmatprep.subr.bf16.mxu0 0
        %3451 = vmatpush1.bf16.msra.mxu0 %v3397
        %3452 = vmatprep.subr.bf16.mxu0 0
        %3453 = vmatpush1.bf16.msra.mxu0 %v3398
        %3454 = vmatprep.subr.bf16.mxu0 0
        %3455 = vmatpush1.bf16.msra.mxu0 %v3399
        %3456 = vmatprep.subr.bf16.mxu0 0
        %3457 = vmatpush1.bf16.msra.mxu0 %v3400
        %3458 = vmatprep.subr.bf16.mxu0 0
        %3459 = vmatpush1.bf16.msra.mxu0 %v3401
        %3460 = vmatprep.subr.bf16.mxu0 0
        %3461 = vmatpush1.bf16.msra.mxu0 %v3402
        %3462 = vmatprep.subr.bf16.mxu0 0
        %3463 = vmatpush1.bf16.msra.mxu0 %v3403
        %3464 = vmatprep.subr.bf16.mxu0 0
        %3465 = vmatpush1.bf16.msra.mxu0 %v3404
        %3466 = vmatprep.subr.bf16.mxu0 0
        %3467 = vmatpush1.bf16.msra.mxu0 %v3405
        %3468 = vmatprep.subr.bf16.mxu0 0
        %3469 = vmatpush1.bf16.msra.mxu0 %v3406
        %3470 = vmatprep.subr.bf16.mxu0 0
        %3471 = vmatpush1.bf16.msra.mxu0 %v3407
        %3472 = vmatprep.mubr.bf16.mxu0 %v3267
        %3473 = vmatmul.mubr.bf16.gmra.mrb[0].mxu0 %v3266
        %v3474 = vpop.f32.mrb[0].mxu0
        %v3475 = vadd.f32 %v3294, %v3474
        %v3476 = vpop.f32.mrb[0].mxu0
        %v3477 = vpop.f32.mrb[0].mxu0
        %v3478 = vadd.f32 %v3294, %v3477
        %v3479 = vpop.f32.mrb[0].mxu0
        %3480 = vmatprep.mubr.bf16.mxu0 %v3270
        %3481 = vmatmul.mubr.bf16.gmra.mrb[0].mxu0 %v3269
        %v3482 = vpop.f32.mrb[0].mxu0
        %v3483 = vadd.f32 %v3294, %v3482
        %v3484 = vpop.f32.mrb[0].mxu0
        %v3485 = vpop.f32.mrb[0].mxu0
        %v3486 = vadd.f32 %v3294, %v3485
        %v3487 = vpop.f32.mrb[0].mxu0
        %3488 = vmatprep.mubr.bf16.mxu0 %v3273
        %3489 = vmatmul.mubr.bf16.gmra.mrb[0].mxu0 %v3272
        %v3490 = vpop.f32.mrb[0].mxu0
        %v3491 = vadd.f32 %v3294, %v3490
        %v3492 = vpop.f32.mrb[0].mxu0
        %v3493 = vpop.f32.mrb[0].mxu0
        %v3494 = vadd.f32 %v3294, %v3493
        %v3495 = vpop.f32.mrb[0].mxu0
        %3496 = vmatprep.mubr.bf16.mxu0 %v3276
        %3497 = vmatmul.mubr.bf16.gmra.mrb[0].mxu0 %v3275
        %v3498 = vpop.f32.mrb[0].mxu0
        %v3499 = vadd.f32 %v3294, %v3498
        %v3500 = vpop.f32.mrb[0].mxu0
        %v3501 = vpop.f32.mrb[0].mxu0
        %v3502 = vadd.f32 %v3294, %v3501
        %v3503 = vpop.f32.mrb[0].mxu0
        %3504 = vmatprep.mubr.bf16.mxu0 %v3279
        %3505 = vmatmul.mubr.bf16.gmra.mrb[0].mxu0 %v3278
        %v3506 = vpop.f32.mrb[0].mxu0
        %v3507 = vadd.f32 %v3294, %v3506
        %v3508 = vpop.f32.mrb[0].mxu0
        %v3509 = vpop.f32.mrb[0].mxu0
        %v3510 = vadd.f32 %v3294, %v3509
        %v3511 = vpop.f32.mrb[0].mxu0
        %3512 = vmatprep.mubr.bf16.mxu0 %v3282
        %3513 = vmatmul.mubr.bf16.gmra.mrb[0].mxu0 %v3281
        %v3514 = vpop.f32.mrb[0].mxu0
        %v3515 = vadd.f32 %v3294, %v3514
        %v3516 = vpop.f32.mrb[0].mxu0
        %v3517 = vpop.f32.mrb[0].mxu0
        %v3518 = vadd.f32 %v3294, %v3517
        %v3519 = vpop.f32.mrb[0].mxu0
        %3520 = vmatprep.mubr.bf16.mxu0 %v3285
        %3521 = vmatmul.mubr.bf16.gmra.mrb[0].mxu0 %v3284
        %v3522 = vpop.f32.mrb[0].mxu0
        %v3523 = vadd.f32 %v3294, %v3522
        %v3524 = vpop.f32.mrb[0].mxu0
        %v3525 = vpop.f32.mrb[0].mxu0
        %v3526 = vadd.f32 %v3294, %v3525
        %v3527 = vpop.f32.mrb[0].mxu0
        %3528 = vmatprep.mubr.bf16.mxu0 %v3288
        %3529 = vmatmul.mubr.bf16.gmra.mrb[0].mxu0 %v3287
        %v3530 = vpop.f32.mrb[0].mxu0
        %v3531 = vadd.f32 %v3294, %v3530
        %v3532 = vpop.f32.mrb[0].mxu0
        %v3533 = vpop.f32.mrb[0].mxu0
        %v3534 = vadd.f32 %v3294, %v3533
        %v3535 = vpop.f32.mrb[0].mxu0
        %3536 = vdwg.mxu0
        %3537 = vmatprep.subr.bf16.mxu0 0
        %3538 = vmatpush1.bf16.msra.mxu0 %v3408
        %3539 = vmatprep.subr.bf16.mxu0 0
        %3540 = vmatpush1.bf16.msra.mxu0 %v3409
        %3541 = vmatprep.subr.bf16.mxu0 0
        %3542 = vmatpush1.bf16.msra.mxu0 %v3410
        %3543 = vmatprep.subr.bf16.mxu0 0
        %3544 = vmatpush1.bf16.msra.mxu0 %v3411
        %3545 = vmatprep.subr.bf16.mxu0 0
        %3546 = vmatpush1.bf16.msra.mxu0 %v3412
        %3547 = vmatprep.subr.bf16.mxu0 0
        %3548 = vmatpush1.bf16.msra.mxu0 %v3413
        %3549 = vmatprep.subr.bf16.mxu0 0
        %3550 = vmatpush1.bf16.msra.mxu0 %v3414
        %3551 = vmatprep.subr.bf16.mxu0 0
        %3552 = vmatpush1.bf16.msra.mxu0 %v3415
        %3553 = vmatprep.subr.bf16.mxu0 0
        %3554 = vmatpush1.bf16.msra.mxu0 0
        %3555 = vmatprep.subr.bf16.mxu0 0
        %3556 = vmatpush1.bf16.msra.mxu0 0
        %3557 = vmatprep.subr.bf16.mxu0 0
        %3558 = vmatpush1.bf16.msra.mxu0 0
        %3559 = vmatprep.subr.bf16.mxu0 0
        %3560 = vmatpush1.bf16.msra.mxu0 0
        %3561 = vmatprep.subr.bf16.mxu0 0
        %3562 = vmatpush1.bf16.msra.mxu0 0
        %3563 = vmatprep.subr.bf16.mxu0 0
        %3564 = vmatpush1.bf16.msra.mxu0 0
        %3565 = vmatprep.subr.bf16.mxu0 0
        %3566 = vmatpush1.bf16.msra.mxu0 0
        %3567 = vmatprep.subr.bf16.mxu0 0
        %3568 = vmatpush1.bf16.msra.mxu0 0
        %3569 = vmatprep.mubr.bf16.mxu0 0
        %3570 = vmatmul.mubr.bf16.gmra.mrb[0].mxu0 %v3268
        %v3571 = vpop.f32.mrb[0].mxu0
        %v3572 = vadd.f32 %v3475, %v3571
        %v3573 = vpop.f32.mrb[0].mxu0
        %v3574 = vpop.f32.mrb[0].mxu0
        %v3575 = vadd.f32 %v3478, %v3574
        %v3576 = vpop.f32.mrb[0].mxu0
        %3577 = vmatprep.mubr.bf16.mxu0 0
        %3578 = vmatmul.mubr.bf16.gmra.mrb[0].mxu0 %v3271
        %v3579 = vpop.f32.mrb[0].mxu0
        %v3580 = vadd.f32 %v3483, %v3579
        %v3581 = vpop.f32.mrb[0].mxu0
        %v3582 = vpop.f32.mrb[0].mxu0
        %v3583 = vadd.f32 %v3486, %v3582
        %v3584 = vpop.f32.mrb[0].mxu0
        %3585 = vmatprep.mubr.bf16.mxu0 0
        %3586 = vmatmul.mubr.bf16.gmra.mrb[0].mxu0 %v3274
        %v3587 = vpop.f32.mrb[0].mxu0
        %v3588 = vadd.f32 %v3491, %v3587
        %v3589 = vpop.f32.mrb[0].mxu0
        %v3590 = vpop.f32.mrb[0].mxu0
        %v3591 = vadd.f32 %v3494, %v3590
        %v3592 = vpop.f32.mrb[0].mxu0
        %3593 = vmatprep.mubr.bf16.mxu0 0
        %3594 = vmatmul.mubr.bf16.gmra.mrb[0].mxu0 %v3277
        %v3595 = vpop.f32.mrb[0].mxu0
        %v3596 = vadd.f32 %v3499, %v3595
        %v3597 = vpop.f32.mrb[0].mxu0
        %v3598 = vpop.f32.mrb[0].mxu0
        %v3599 = vadd.f32 %v3502, %v3598
        %v3600 = vpop.f32.mrb[0].mxu0
        %3601 = vmatprep.mubr.bf16.mxu0 0
        %3602 = vmatmul.mubr.bf16.gmra.mrb[0].mxu0 %v3280
        %v3603 = vpop.f32.mrb[0].mxu0
        %v3604 = vadd.f32 %v3507, %v3603
        %v3605 = vpop.f32.mrb[0].mxu0
        %v3606 = vpop.f32.mrb[0].mxu0
        %v3607 = vadd.f32 %v3510, %v3606
        %v3608 = vpop.f32.mrb[0].mxu0
        %3609 = vmatprep.mubr.bf16.mxu0 0
        %3610 = vmatmul.mubr.bf16.gmra.mrb[0].mxu0 %v3283
        %v3611 = vpop.f32.mrb[0].mxu0
        %v3612 = vadd.f32 %v3515, %v3611
        %v3613 = vpop.f32.mrb[0].mxu0
        %v3614 = vpop.f32.mrb[0].mxu0
        %v3615 = vadd.f32 %v3518, %v3614
        %v3616 = vpop.f32.mrb[0].mxu0
        %3617 = vmatprep.mubr.bf16.mxu0 0
        %3618 = vmatmul.mubr.bf16.gmra.mrb[0].mxu0 %v3286
        %v3619 = vpop.f32.mrb[0].mxu0
        %v3620 = vadd.f32 %v3523, %v3619
        %v3621 = vpop.f32.mrb[0].mxu0
        %v3622 = vpop.f32.mrb[0].mxu0
        %v3623 = vadd.f32 %v3526, %v3622
        %v3624 = vpop.f32.mrb[0].mxu0
        %3625 = vmatprep.mubr.bf16.mxu0 0
        %3626 = vmatmul.mubr.bf16.gmra.mrb[0].mxu0 %v3289
        %v3627 = vpop.f32.mrb[0].mxu0
        %v3628 = vadd.f32 %v3531, %v3627
        %v3629 = vpop.f32.mrb[0].mxu0
        %v3630 = vpop.f32.mrb[0].mxu0
        %v3631 = vadd.f32 %v3534, %v3630
        %v3632 = vpop.f32.mrb[0].mxu0
        %3633 = vdwg.mxu0
        %v3634 = vmul.f32 %v3572, 0.5
        %v3635 = vmul.f32 %v3575, 0.5
        %v3636 = vmul.f32 %v3580, 0.5
        %v3637 = vmul.f32 %v3583, 0.5
        %v3638 = vmul.f32 %v3588, 0.5
        %v3639 = vmul.f32 %v3591, 0.5
        %v3640 = vmul.f32 %v3596, 0.5
        %v3641 = vmul.f32 %v3599, 0.5
        %v3642 = vmul.f32 %v3604, 0.5
        %v3643 = vmul.f32 %v3607, 0.5
        %v3644 = vmul.f32 %v3612, 0.5
        %v3645 = vmul.f32 %v3615, 0.5
        %v3646 = vmul.f32 %v3620, 0.5
        %v3647 = vmul.f32 %v3623, 0.5
        %v3648 = vmul.f32 %v3628, 0.5
        %v3649 = vmul.f32 %v3631, 0.5
        %v3650 = vtanh.pop %v3634
        %v3651 = vtanh.pop %v3635
        %v3652 = vtanh.pop %v3636
        %v3653 = vtanh.pop %v3637
        %v3654 = vtanh.pop %v3638
        %v3655 = vtanh.pop %v3639
        %v3656 = vtanh.pop %v3640
        %v3657 = vtanh.pop %v3641
        %v3658 = vtanh.pop %v3642
        %v3659 = vtanh.pop %v3643
        %v3660 = vtanh.pop %v3644
        %v3661 = vtanh.pop %v3645
        %v3662 = vtanh.pop %v3646
        %v3663 = vtanh.pop %v3647
        %v3664 = vtanh.pop %v3648
        %v3665 = vtanh.pop %v3649
        %v3666 = vadd.f32 %v3650, 1.0
        %v3667 = vadd.f32 %v3651, 1.0
        %v3668 = vadd.f32 %v3652, 1.0
        %v3669 = vadd.f32 %v3653, 1.0
        %v3670 = vadd.f32 %v3654, 1.0
        %v3671 = vadd.f32 %v3655, 1.0
        %v3672 = vadd.f32 %v3656, 1.0
        %v3673 = vadd.f32 %v3657, 1.0
        %v3674 = vadd.f32 %v3658, 1.0
        %v3675 = vadd.f32 %v3659, 1.0
        %v3676 = vadd.f32 %v3660, 1.0
        %v3677 = vadd.f32 %v3661, 1.0
        %v3678 = vadd.f32 %v3662, 1.0
        %v3679 = vadd.f32 %v3663, 1.0
        %v3680 = vadd.f32 %v3664, 1.0
        %v3681 = vadd.f32 %v3665, 1.0
        %v3682 = vmul.f32 %v3666, 0.5
        %v3683 = vmul.f32 %v3667, 0.5
        %v3684 = vmul.f32 %v3668, 0.5
        %v3685 = vmul.f32 %v3669, 0.5
        %v3686 = vmul.f32 %v3670, 0.5
        %v3687 = vmul.f32 %v3671, 0.5
        %v3688 = vmul.f32 %v3672, 0.5
        %v3689 = vmul.f32 %v3673, 0.5
        %v3690 = vmul.f32 %v3674, 0.5
        %v3691 = vmul.f32 %v3675, 0.5
        %v3692 = vmul.f32 %v3676, 0.5
        %v3693 = vmul.f32 %v3677, 0.5
        %v3694 = vmul.f32 %v3678, 0.5
        %v3695 = vmul.f32 %v3679, 0.5
        %v3696 = vmul.f32 %v3680, 0.5
        %v3697 = vmul.f32 %v3681, 0.5
        %3714 = vrot.lane.b32.xlu0 %v3682, 96
        %v3715 = vpop.permute.xlu0 %3714
        %3716 = vrot.lane.b32.xlu0 %v3683, 96
        %v3717 = vpop.permute.xlu0 %3716
        %3718 = vrot.lane.b32.xlu0 %v3684, 96
        %v3719 = vpop.permute.xlu0 %3718
        %3720 = vrot.lane.b32.xlu0 %v3685, 96
        %v3721 = vpop.permute.xlu0 %3720
        %3722 = vrot.lane.b32.xlu0 %v3686, 96
        %v3723 = vpop.permute.xlu0 %3722
        %3724 = vrot.lane.b32.xlu0 %v3687, 96
        %v3725 = vpop.permute.xlu0 %3724
        %3726 = vrot.lane.b32.xlu0 %v3688, 96
        %v3727 = vpop.permute.xlu0 %3726
        %3728 = vrot.lane.b32.xlu0 %v3689, 96
        %v3729 = vpop.permute.xlu0 %3728
        %3730 = vrot.lane.b32.xlu0 %v3690, 96
        %v3731 = vpop.permute.xlu0 %3730
        %3732 = vrot.lane.b32.xlu0 %v3691, 96
        %v3733 = vpop.permute.xlu0 %3732
        %3734 = vrot.lane.b32.xlu0 %v3692, 96
        %v3735 = vpop.permute.xlu0 %3734
        %3736 = vrot.lane.b32.xlu0 %v3693, 96
        %v3737 = vpop.permute.xlu0 %3736
        %3738 = vrot.lane.b32.xlu0 %v3694, 96
        %v3739 = vpop.permute.xlu0 %3738
        %3740 = vrot.lane.b32.xlu0 %v3695, 96
        %v3741 = vpop.permute.xlu0 %3740
        %3742 = vrot.lane.b32.xlu0 %v3696, 96
        %v3743 = vpop.permute.xlu0 %3742
        %3744 = vrot.lane.b32.xlu0 %v3697, 96
        %v3745 = vpop.permute.xlu0 %3744
        %v3762 = vmul.f32 %v3572, %v3715
        %v3763 = vmul.f32 %v3575, %v3717
        %v3764 = vmul.f32 %v3580, %v3719
        %v3765 = vmul.f32 %v3583, %v3721
        %v3766 = vmul.f32 %v3588, %v3723
        %v3767 = vmul.f32 %v3591, %v3725
        %v3768 = vmul.f32 %v3596, %v3727
        %v3769 = vmul.f32 %v3599, %v3729
        %v3770 = vmul.f32 %v3604, %v3731
        %v3771 = vmul.f32 %v3607, %v3733
        %v3772 = vmul.f32 %v3612, %v3735
        %v3773 = vmul.f32 %v3615, %v3737
        %v3774 = vmul.f32 %v3620, %v3739
        %v3775 = vmul.f32 %v3623, %v3741
        %v3776 = vmul.f32 %v3628, %v3743
        %v3777 = vmul.f32 %v3631, %v3745
        %v3778 = vadd.f32 %v1018, %v3762
        %v3779 = vadd.f32 %v1019, %v3763
        %v3780 = vadd.f32 %v1020, %v3764
        %v3781 = vadd.f32 %v1021, %v3765
        %v3782 = vadd.f32 %v1022, %v3766
        %v3783 = vadd.f32 %v1023, %v3767
        %v3784 = vadd.f32 %v1024, %v3768
        %v3785 = vadd.f32 %v1025, %v3769
        %v3786 = vadd.f32 %v1026, %v3770
        %v3787 = vadd.f32 %v1027, %v3771
        %v3788 = vadd.f32 %v1028, %v3772
        %v3789 = vadd.f32 %v1029, %v3773
        %v3790 = vadd.f32 %v1030, %v3774
        %v3791 = vadd.f32 %v1031, %v3775
        %v3792 = vadd.f32 %v1032, %v3776
        %v3793 = vadd.f32 %v1033, %v3777
        %s3794 = smul.u32 %s56, 32
        %s3795 = smul.addr %s3794, 4
        %s3796 = scalar_lea.vmem [#allocation19], %s3795
        %v3797 = vld [vmem:[%s3796] sm:$0xf]
        %v3798 = vld [vmem:[%s3796 + $0x4] sm:$0xf]
        %v3799 = vld [vmem:[%s3796 + $0x8] sm:$0xf]
        %v3800 = vld [vmem:[%s3796 + $0xc] sm:$0xf]
        %v3801 = vld [vmem:[%s3796 + $0x10] sm:$0xf]
        %v3802 = vld [vmem:[%s3796 + $0x14] sm:$0xf]
        %v3803 = vld [vmem:[%s3796 + $0x18] sm:$0xf]
        %v3804 = vld [vmem:[%s3796 + $0x1c] sm:$0xf]
        %v3805 = vld [vmem:[%s3796 + $0x20] sm:$0xf]
        %v3806 = vld [vmem:[%s3796 + $0x24] sm:$0xf]
        %v3807 = vld [vmem:[%s3796 + $0x28] sm:$0xf]
        %v3808 = vld [vmem:[%s3796 + $0x2c] sm:$0xf]
        %v3809 = vld [vmem:[%s3796 + $0x30] sm:$0xf]
        %v3810 = vld [vmem:[%s3796 + $0x34] sm:$0xf]
        %v3811 = vld [vmem:[%s3796 + $0x38] sm:$0xf]
        %v3812 = vld [vmem:[%s3796 + $0x3c] sm:$0xf]
        %v3813 = vld [vmem:[%s3796 + $0x40] sm:$0xf]
        %v3814 = vld [vmem:[%s3796 + $0x44] sm:$0xf]
        %v3815 = vld [vmem:[%s3796 + $0x48] sm:$0xf]
        %v3816 = vld [vmem:[%s3796 + $0x4c] sm:$0xf]
        %v3817 = vld [vmem:[%s3796 + $0x50] sm:$0xf]
        %v3818 = vld [vmem:[%s3796 + $0x54] sm:$0xf]
        %v3819 = vld [vmem:[%s3796 + $0x58] sm:$0xf]
        %v3820 = vld [vmem:[%s3796 + $0x5c] sm:$0xf]
        %v3821 = vld [vmem:[%s3796 + $0x60] sm:$0xf]
        %v3822 = vld [vmem:[%s3796 + $0x64] sm:$0xf]
        %v3823 = vld [vmem:[%s3796 + $0x68] sm:$0xf]
        %v3824 = vld [vmem:[%s3796 + $0x6c] sm:$0xf]
        %v3825 = vld [vmem:[%s3796 + $0x70] sm:$0xf]
        %v3826 = vld [vmem:[%s3796 + $0x74] sm:$0xf]
        %v3827 = vld [vmem:[%s3796 + $0x78] sm:$0xf]
        %v3828 = vld [vmem:[%s3796 + $0x7c] sm:$0xf]
        %s3829 = scalar_lea.vmem [#allocation20], %s56
        %v3830 = vld [vmem:[%s3829] sm:$0x1]
        %v3831 = vand.u32 2147483647, %v1034
        %v3832 = vand.u32 2147483647, %v1035
        %v3833 = vand.u32 2147483647, %v1036
        %v3834 = vand.u32 2147483647, %v1037
        %v3835 = vand.u32 2147483647, %v1038
        %v3836 = vand.u32 2147483647, %v1039
        %v3837 = vand.u32 2147483647, %v1040
        %v3838 = vand.u32 2147483647, %v1041
        %v3839 = vand.u32 2147483647, %v1042
        %v3840 = vand.u32 2147483647, %v1043
        %v3841 = vand.u32 2147483647, %v1044
        %v3842 = vand.u32 2147483647, %v1045
        %v3843 = vand.u32 2147483647, %v1046
        %v3844 = vand.u32 2147483647, %v1047
        %v3845 = vand.u32 2147483647, %v1048
        %v3846 = vand.u32 2147483647, %v1049
        %v3847 = vsub.f32 0.0, %v3831
        %v3848 = vsub.f32 0.0, %v3832
        %v3849 = vsub.f32 0.0, %v3833
        %v3850 = vsub.f32 0.0, %v3834
        %v3851 = vsub.f32 0.0, %v3835
        %v3852 = vsub.f32 0.0, %v3836
        %v3853 = vsub.f32 0.0, %v3837
        %v3854 = vsub.f32 0.0, %v3838
        %v3855 = vsub.f32 0.0, %v3839
        %v3856 = vsub.f32 0.0, %v3840
        %v3857 = vsub.f32 0.0, %v3841
        %v3858 = vsub.f32 0.0, %v3842
        %v3859 = vsub.f32 0.0, %v3843
        %v3860 = vsub.f32 0.0, %v3844
        %v3861 = vsub.f32 0.0, %v3845
        %v3862 = vsub.f32 0.0, %v3846
        %v3863 = vmul.f32 %v3847, 1.442695
        %v3864 = vpow.pop %v3863
        %v3865 = vmul.f32 %v3848, 1.442695
        %v3866 = vpow.pop %v3865
        %v3867 = vmul.f32 %v3849, 1.442695
        %v3868 = vpow.pop %v3867
        %v3869 = vmul.f32 %v3850, 1.442695
        %v3870 = vpow.pop %v3869
        %v3871 = vmul.f32 %v3851, 1.442695
        %v3872 = vpow.pop %v3871
        %v3873 = vmul.f32 %v3852, 1.442695
        %v3874 = vpow.pop %v3873
        %v3875 = vmul.f32 %v3853, 1.442695
        %v3876 = vpow.pop %v3875
        %v3877 = vmul.f32 %v3854, 1.442695
        %v3878 = vpow.pop %v3877
        %v3879 = vmul.f32 %v3855, 1.442695
        %v3880 = vpow.pop %v3879
        %v3881 = vmul.f32 %v3856, 1.442695
        %v3882 = vpow.pop %v3881
        %v3883 = vmul.f32 %v3857, 1.442695
        %v3884 = vpow.pop %v3883
        %v3885 = vmul.f32 %v3858, 1.442695
        %v3886 = vpow.pop %v3885
        %v3887 = vmul.f32 %v3859, 1.442695
        %v3888 = vpow.pop %v3887
        %v3889 = vmul.f32 %v3860, 1.442695
        %v3890 = vpow.pop %v3889
        %v3891 = vmul.f32 %v3861, 1.442695
        %v3892 = vpow.pop %v3891
        %v3893 = vmul.f32 %v3862, 1.442695
        %v3894 = vpow.pop %v3893
        %v3895 = vsub.f32 %v3864, 1.0
        %v3896 = vsub.f32 %v3866, 1.0
        %v3897 = vsub.f32 %v3868, 1.0
        %v3898 = vsub.f32 %v3870, 1.0
        %v3899 = vsub.f32 %v3872, 1.0
        %v3900 = vsub.f32 %v3874, 1.0
        %v3901 = vsub.f32 %v3876, 1.0
        %v3902 = vsub.f32 %v3878, 1.0
        %v3903 = vsub.f32 %v3880, 1.0
        %v3904 = vsub.f32 %v3882, 1.0
        %v3905 = vsub.f32 %v3884, 1.0
        %v3906 = vsub.f32 %v3886, 1.0
        %v3907 = vsub.f32 %v3888, 1.0
        %v3908 = vsub.f32 %v3890, 1.0
        %v3909 = vsub.f32 %v3892, 1.0
        %v3910 = vsub.f32 %v3894, 1.0
        %vm3911 = vcmp.gt.f32.partialorder %v1034, 0.0
        %vm3912 = vcmp.gt.f32.partialorder %v1035, 0.0
        %vm3913 = vcmp.gt.f32.partialorder %v1036, 0.0
        %vm3914 = vcmp.gt.f32.partialorder %v1037, 0.0
        %vm3915 = vcmp.gt.f32.partialorder %v1038, 0.0
        %vm3916 = vcmp.gt.f32.partialorder %v1039, 0.0
        %vm3917 = vcmp.gt.f32.partialorder %v1040, 0.0
        %vm3918 = vcmp.gt.f32.partialorder %v1041, 0.0
        %vm3919 = vcmp.gt.f32.partialorder %v1042, 0.0
        %vm3920 = vcmp.gt.f32.partialorder %v1043, 0.0
        %vm3921 = vcmp.gt.f32.partialorder %v1044, 0.0
        %vm3922 = vcmp.gt.f32.partialorder %v1045, 0.0
        %vm3923 = vcmp.gt.f32.partialorder %v1046, 0.0
        %vm3924 = vcmp.gt.f32.partialorder %v1047, 0.0
        %vm3925 = vcmp.gt.f32.partialorder %v1048, 0.0
        %vm3926 = vcmp.gt.f32.partialorder %v1049, 0.0
        %v3927 = vsel %vm3911, %v1034, %v3895
        %v3928 = vsel %vm3912, %v1035, %v3896
        %v3929 = vsel %vm3913, %v1036, %v3897
        %v3930 = vsel %vm3914, %v1037, %v3898
        %v3931 = vsel %vm3915, %v1038, %v3899
        %v3932 = vsel %vm3916, %v1039, %v3900
        %v3933 = vsel %vm3917, %v1040, %v3901
        %v3934 = vsel %vm3918, %v1041, %v3902
        %v3935 = vsel %vm3919, %v1042, %v3903
        %v3936 = vsel %vm3920, %v1043, %v3904
        %v3937 = vsel %vm3921, %v1044, %v3905
        %v3938 = vsel %vm3922, %v1045, %v3906
        %v3939 = vsel %vm3923, %v1046, %v3907
        %v3940 = vsel %vm3924, %v1047, %v3908
        %v3941 = vsel %vm3925, %v1048, %v3909
        %v3942 = vsel %vm3926, %v1049, %v3910
        %v3943 = vsub.f32 0.0, %v1034
        %v3944 = vsub.f32 0.0, %v1035
        %v3945 = vsub.f32 0.0, %v1036
        %v3946 = vsub.f32 0.0, %v1037
        %v3947 = vsub.f32 0.0, %v1038
        %v3948 = vsub.f32 0.0, %v1039
        %v3949 = vsub.f32 0.0, %v1040
        %v3950 = vsub.f32 0.0, %v1041
        %v3951 = vsub.f32 0.0, %v1042
        %v3952 = vsub.f32 0.0, %v1043
        %v3953 = vsub.f32 0.0, %v1044
        %v3954 = vsub.f32 0.0, %v1045
        %v3955 = vsub.f32 0.0, %v1046
        %v3956 = vsub.f32 0.0, %v1047
        %v3957 = vsub.f32 0.0, %v1048
        %v3958 = vsub.f32 0.0, %v1049
        %v3959 = vsel %vm3911, %v3895, %v3943
        %v3960 = vsel %vm3912, %v3896, %v3944
        %v3961 = vsel %vm3913, %v3897, %v3945
        %v3962 = vsel %vm3914, %v3898, %v3946
        %v3963 = vsel %vm3915, %v3899, %v3947
        %v3964 = vsel %vm3916, %v3900, %v3948
        %v3965 = vsel %vm3917, %v3901, %v3949
        %v3966 = vsel %vm3918, %v3902, %v3950
        %v3967 = vsel %vm3919, %v3903, %v3951
        %v3968 = vsel %vm3920, %v3904, %v3952
        %v3969 = vsel %vm3921, %v3905, %v3953
        %v3970 = vsel %vm3922, %v3906, %v3954
        %v3971 = vsel %vm3923, %v3907, %v3955
        %v3972 = vsel %vm3924, %v3908, %v3956
        %v3973 = vsel %vm3925, %v3909, %v3957
        %v3974 = vsel %vm3926, %v3910, %v3958
        %3991 = vrot.lane.b32.xlu0 %v3959, 32
        %v3992 = vpop.permute.xlu0 %3991
        %3993 = vrot.lane.b32.xlu0 %v3960, 32
        %v3994 = vpop.permute.xlu0 %3993
        %3995 = vrot.lane.b32.xlu0 %v3961, 32
        %v3996 = vpop.permute.xlu0 %3995
        %3997 = vrot.lane.b32.xlu0 %v3962, 32
        %v3998 = vpop.permute.xlu0 %3997
        %3999 = vrot.lane.b32.xlu0 %v3963, 32
        %v4000 = vpop.permute.xlu0 %3999
        %4001 = vrot.lane.b32.xlu0 %v3964, 32
        %v4002 = vpop.permute.xlu0 %4001
        %4003 = vrot.lane.b32.xlu0 %v3965, 32
        %v4004 = vpop.permute.xlu0 %4003
        %4005 = vrot.lane.b32.xlu0 %v3966, 32
        %v4006 = vpop.permute.xlu0 %4005
        %4007 = vrot.lane.b32.xlu0 %v3967, 32
        %v4008 = vpop.permute.xlu0 %4007
        %4009 = vrot.lane.b32.xlu0 %v3968, 32
        %v4010 = vpop.permute.xlu0 %4009
        %4011 = vrot.lane.b32.xlu0 %v3969, 32
        %v4012 = vpop.permute.xlu0 %4011
        %4013 = vrot.lane.b32.xlu0 %v3970, 32
        %v4014 = vpop.permute.xlu0 %4013
        %4015 = vrot.lane.b32.xlu0 %v3971, 32
        %v4016 = vpop.permute.xlu0 %4015
        %4017 = vrot.lane.b32.xlu0 %v3972, 32
        %v4018 = vpop.permute.xlu0 %4017
        %4019 = vrot.lane.b32.xlu0 %v3973, 32
        %v4020 = vpop.permute.xlu0 %4019
        %4021 = vrot.lane.b32.xlu0 %v3974, 32
        %v4022 = vpop.permute.xlu0 %4021
        %v4039 = vsel %vm1311, %v3927, %v3992
        %v4040 = vsel %vm1311, %v3928, %v3994
        %v4041 = vsel %vm1311, %v3929, %v3996
        %v4042 = vsel %vm1311, %v3930, %v3998
        %v4043 = vsel %vm1311, %v3931, %v4000
        %v4044 = vsel %vm1311, %v3932, %v4002
        %v4045 = vsel %vm1311, %v3933, %v4004
        %v4046 = vsel %vm1311, %v3934, %v4006
        %v4047 = vsel %vm1311, %v3935, %v4008
        %v4048 = vsel %vm1311, %v3936, %v4010
        %v4049 = vsel %vm1311, %v3937, %v4012
        %v4050 = vsel %vm1311, %v3938, %v4014
        %v4051 = vsel %vm1311, %v3939, %v4016
        %v4052 = vsel %vm1311, %v3940, %v4018
        %v4053 = vsel %vm1311, %v3941, %v4020
        %v4054 = vsel %vm1311, %v3942, %v4022
        %v4071 = vrot.slane %v4039, 7
        %v4072 = vrot.slane %v4040, 7
        %v4073 = vrot.slane %v4041, 7
        %v4074 = vrot.slane %v4042, 7
        %v4075 = vrot.slane %v4043, 7
        %v4076 = vrot.slane %v4044, 7
        %v4077 = vrot.slane %v4045, 7
        %v4078 = vrot.slane %v4046, 7
        %v4079 = vrot.slane %v4047, 7
        %v4080 = vrot.slane %v4048, 7
        %v4081 = vrot.slane %v4049, 7
        %v4082 = vrot.slane %v4050, 7
        %v4083 = vrot.slane %v4051, 7
        %v4084 = vrot.slane %v4052, 7
        %v4085 = vrot.slane %v4053, 7
        %v4086 = vrot.slane %v4054, 7
        %v4103 = vsel %vm1379, 0.0, %v4071
        %v4104 = vsel %vm1379, 0.0, %v4072
        %v4105 = vsel %vm1379, 0.0, %v4073
        %v4106 = vsel %vm1379, 0.0, %v4074
        %v4107 = vsel %vm1379, 0.0, %v4075
        %v4108 = vsel %vm1379, 0.0, %v4076
        %v4109 = vsel %vm1379, 0.0, %v4077
        %v4110 = vsel %vm1379, 0.0, %v4078
        %v4111 = vsel %vm1379, 0.0, %v4079
        %v4112 = vsel %vm1379, 0.0, %v4080
        %v4113 = vsel %vm1379, 0.0, %v4081
        %v4114 = vsel %vm1379, 0.0, %v4082
        %v4115 = vsel %vm1379, 0.0, %v4083
        %v4116 = vsel %vm1379, 0.0, %v4084
        %v4117 = vsel %vm1379, 0.0, %v4085
        %v4118 = vsel %vm1379, 0.0, %v4086
        %v4133 = vrot.slane %v1345, 1
        %v4134 = vsel %vm1444, %v1445, %v4133
        %v4135 = vrot.slane %v4103, 1
        %v4136 = vrot.slane %v4071, 1
        %v4137 = vsel %vm1444, %v4135, %v4136
        %v4138 = vrot.slane %v4104, 1
        %v4139 = vrot.slane %v4072, 1
        %v4140 = vsel %vm1444, %v4138, %v4139
        %v4141 = vrot.slane %v4105, 1
        %v4142 = vrot.slane %v4073, 1
        %v4143 = vsel %vm1444, %v4141, %v4142
        %v4144 = vrot.slane %v4106, 1
        %v4145 = vrot.slane %v4074, 1
        %v4146 = vsel %vm1444, %v4144, %v4145
        %v4147 = vrot.slane %v4107, 1
        %v4148 = vrot.slane %v4075, 1
        %v4149 = vsel %vm1444, %v4147, %v4148
        %v4150 = vrot.slane %v4108, 1
        %v4151 = vrot.slane %v4076, 1
        %v4152 = vsel %vm1444, %v4150, %v4151
        %v4153 = vrot.slane %v4109, 1
        %v4154 = vrot.slane %v4077, 1
        %v4155 = vsel %vm1444, %v4153, %v4154
        %v4156 = vrot.slane %v4111, 1
        %v4157 = vrot.slane %v4079, 1
        %v4158 = vsel %vm1444, %v4156, %v4157
        %v4159 = vrot.slane %v4112, 1
        %v4160 = vrot.slane %v4080, 1
        %v4161 = vsel %vm1444, %v4159, %v4160
        %v4162 = vrot.slane %v4113, 1
        %v4163 = vrot.slane %v4081, 1
        %v4164 = vsel %vm1444, %v4162, %v4163
        %v4165 = vrot.slane %v4114, 1
        %v4166 = vrot.slane %v4082, 1
        %v4167 = vsel %vm1444, %v4165, %v4166
        %v4168 = vrot.slane %v4115, 1
        %v4169 = vrot.slane %v4083, 1
        %v4170 = vsel %vm1444, %v4168, %v4169
        %v4171 = vrot.slane %v4116, 1
        %v4172 = vrot.slane %v4084, 1
        %v4173 = vsel %vm1444, %v4171, %v4172
        %v4174 = vrot.slane %v4117, 1
        %v4175 = vrot.slane %v4085, 1
        %v4176 = vsel %vm1444, %v4174, %v4175
        %4177 = vrot.lane.b32.xlu0 %v4134, 64
        %v4178 = vpop.permute.xlu0 %4177
        %4179 = vrot.lane.b32.xlu0 %v4137, 64
        %v4180 = vpop.permute.xlu0 %4179
        %4181 = vrot.lane.b32.xlu0 %v4140, 64
        %v4182 = vpop.permute.xlu0 %4181
        %4183 = vrot.lane.b32.xlu0 %v4143, 64
        %v4184 = vpop.permute.xlu0 %4183
        %4185 = vrot.lane.b32.xlu0 %v4146, 64
        %v4186 = vpop.permute.xlu0 %4185
        %4187 = vrot.lane.b32.xlu0 %v4149, 64
        %v4188 = vpop.permute.xlu0 %4187
        %4189 = vrot.lane.b32.xlu0 %v4152, 64
        %v4190 = vpop.permute.xlu0 %4189
        %4191 = vrot.lane.b32.xlu0 %v4155, 64
        %v4192 = vpop.permute.xlu0 %4191
        %4193 = vrot.lane.b32.xlu0 %v4158, 64
        %v4194 = vpop.permute.xlu0 %4193
        %4195 = vrot.lane.b32.xlu0 %v4161, 64
        %v4196 = vpop.permute.xlu0 %4195
        %4197 = vrot.lane.b32.xlu0 %v4164, 64
        %v4198 = vpop.permute.xlu0 %4197
        %4199 = vrot.lane.b32.xlu0 %v4167, 64
        %v4200 = vpop.permute.xlu0 %4199
        %4201 = vrot.lane.b32.xlu0 %v4170, 64
        %v4202 = vpop.permute.xlu0 %4201
        %4203 = vrot.lane.b32.xlu0 %v4173, 64
        %v4204 = vpop.permute.xlu0 %4203
        %4205 = vrot.lane.b32.xlu0 %v4176, 64
        %v4206 = vpop.permute.xlu0 %4205
        %v4224 = vrot.slane %v4110, 1
        %v4225 = vrot.slane %v4078, 1
        %v4226 = vsel %vm1444, %v4224, %v4225
        %v4227 = vrot.slane %v4118, 1
        %v4228 = vrot.slane %v4086, 1
        %v4229 = vsel %vm1444, %v4227, %v4228
        %4230 = vrot.lane.b32.xlu0 %v4226, 64
        %v4231 = vpop.permute.xlu0 %4230
        %4232 = vrot.lane.b32.xlu0 %v4229, 64
        %v4233 = vpop.permute.xlu0 %4232
        %v4236 = vsel %vm1724, %v1380, %v4178
        %v4237 = vsel %vm1724, %v4103, %v4180
        %v4238 = vsel %vm1724, %v4104, %v4182
        %v4239 = vsel %vm1724, %v4105, %v4184
        %v4240 = vsel %vm1724, %v4106, %v4186
        %v4241 = vsel %vm1724, %v4107, %v4188
        %v4242 = vsel %vm1724, %v4108, %v4190
        %v4243 = vsel %vm1724, %v4109, %v4192
        %v4244 = vsel %vm1724, %v4111, %v4194
        %v4245 = vsel %vm1724, %v4112, %v4196
        %v4246 = vsel %vm1724, %v4113, %v4198
        %v4247 = vsel %vm1724, %v4114, %v4200
        %v4248 = vsel %vm1724, %v4115, %v4202
        %v4249 = vsel %vm1724, %v4116, %v4204
        %v4250 = vsel %vm1724, %v4117, %v4206
        %v4251 = vsel %vm1724, %v4110, %v4231
        %v4252 = vsel %vm1724, %v4118, %v4233
        %v4253 = vpack.c.bf16 %v4237, %v4236
        %v4254 = vpack.c.bf16 %v4238, %v4237
        %v4255 = vpack.c.bf16 %v4239, %v4238
        %v4256 = vpack.c.bf16 %v4240, %v4239
        %v4257 = vpack.c.bf16 %v4241, %v4240
        %v4258 = vpack.c.bf16 %v4242, %v4241
        %v4259 = vpack.c.bf16 %v4243, %v4242
        %v4260 = vpack.c.bf16 %v4251, %v4243
        %v4261 = vpack.c.bf16 %v4244, %v4236
        %v4262 = vpack.c.bf16 %v4245, %v4244
        %v4263 = vpack.c.bf16 %v4246, %v4245
        %v4264 = vpack.c.bf16 %v4247, %v4246
        %v4265 = vpack.c.bf16 %v4248, %v4247
        %v4266 = vpack.c.bf16 %v4249, %v4248
        %v4267 = vpack.c.bf16 %v4250, %v4249
        %v4268 = vpack.c.bf16 %v4252, %v4250
        %v4270 = vlaneseq
        %v4271 = vshrl.u32 %v4270, 7
        %v4272 = vsub.s32 0, %v4271
        %v4273 = vrot.slane %v3830, %v4272
        %v4307 = vunpack.c.l.b16 %v3797
        %v4308 = vunpack.c.l.b16 %v3798
        %v4309 = vunpack.c.l.b16 %v3799
        %v4310 = vunpack.c.l.b16 %v3800
        %v4311 = vunpack.c.l.b16 %v3801
        %v4312 = vunpack.c.l.b16 %v3802
        %v4313 = vunpack.c.l.b16 %v3803
        %v4314 = vunpack.c.l.b16 %v3804
        %v4315 = vunpack.c.l.b16 %v3805
        %v4316 = vunpack.c.l.b16 %v3806
        %v4317 = vunpack.c.l.b16 %v3807
        %v4318 = vunpack.c.l.b16 %v3808
        %v4319 = vunpack.c.l.b16 %v3809
        %v4320 = vunpack.c.l.b16 %v3810
        %v4321 = vunpack.c.l.b16 %v3811
        %v4322 = vunpack.c.l.b16 %v3812
        %v4323 = vunpack.c.l.b16 %v3813
        %v4324 = vunpack.c.l.b16 %v3814
        %v4325 = vunpack.c.l.b16 %v3815
        %v4326 = vunpack.c.l.b16 %v3816
        %v4327 = vunpack.c.l.b16 %v3817
        %v4328 = vunpack.c.l.b16 %v3818
        %v4329 = vunpack.c.l.b16 %v3819
        %v4330 = vunpack.c.l.b16 %v3820
        %v4331 = vunpack.c.l.b16 %v3821
        %v4332 = vunpack.c.l.b16 %v3822
        %v4333 = vunpack.c.l.b16 %v3823
        %v4334 = vunpack.c.l.b16 %v3824
        %v4335 = vunpack.c.l.b16 %v3825
        %v4336 = vunpack.c.l.b16 %v3826
        %v4337 = vunpack.c.l.b16 %v3827
        %v4338 = vunpack.c.l.b16 %v3828
        %v4339 = vpack.c.b16 %v4308, %v4307
        %v4340 = vpack.c.b16 %v4310, %v4309
        %v4341 = vpack.c.b16 %v4312, %v4311
        %v4342 = vpack.c.b16 %v4314, %v4313
        %v4343 = vpack.c.b16 %v4316, %v4315
        %v4344 = vpack.c.b16 %v4318, %v4317
        %v4345 = vpack.c.b16 %v4320, %v4319
        %v4346 = vpack.c.b16 %v4322, %v4321
        %v4347 = vpack.c.b16 %v4324, %v4323
        %v4348 = vpack.c.b16 %v4326, %v4325
        %v4349 = vpack.c.b16 %v4328, %v4327
        %v4350 = vpack.c.b16 %v4330, %v4329
        %v4351 = vpack.c.b16 %v4332, %v4331
        %v4352 = vpack.c.b16 %v4334, %v4333
        %v4353 = vpack.c.b16 %v4336, %v4335
        %v4354 = vpack.c.b16 %v4338, %v4337
        %4371 = vmatprep.subr.bf16.mxu0 0
        %4372 = vmatpush1.bf16.msra.mxu0 %v4339
        %4373 = vmatprep.subr.bf16.mxu0 0
        %4374 = vmatpush1.bf16.msra.mxu0 %v4340
        %4375 = vmatprep.subr.bf16.mxu0 0
        %4376 = vmatpush1.bf16.msra.mxu0 %v4341
        %4377 = vmatprep.subr.bf16.mxu0 0
        %4378 = vmatpush1.bf16.msra.mxu0 %v4342
        %4379 = vmatprep.subr.bf16.mxu0 0
        %4380 = vmatpush1.bf16.msra.mxu0 %v4343
        %4381 = vmatprep.subr.bf16.mxu0 0
        %4382 = vmatpush1.bf16.msra.mxu0 %v4344
        %4383 = vmatprep.subr.bf16.mxu0 0
        %4384 = vmatpush1.bf16.msra.mxu0 %v4345
        %4385 = vmatprep.subr.bf16.mxu0 0
        %4386 = vmatpush1.bf16.msra.mxu0 %v4346
        %4387 = vmatprep.subr.bf16.mxu0 0
        %4388 = vmatpush1.bf16.msra.mxu0 %v4347
        %4389 = vmatprep.subr.bf16.mxu0 0
        %4390 = vmatpush1.bf16.msra.mxu0 %v4348
        %4391 = vmatprep.subr.bf16.mxu0 0
        %4392 = vmatpush1.bf16.msra.mxu0 %v4349
        %4393 = vmatprep.subr.bf16.mxu0 0
        %4394 = vmatpush1.bf16.msra.mxu0 %v4350
        %4395 = vmatprep.subr.bf16.mxu0 0
        %4396 = vmatpush1.bf16.msra.mxu0 %v4351
        %4397 = vmatprep.subr.bf16.mxu0 0
        %4398 = vmatpush1.bf16.msra.mxu0 %v4352
        %4399 = vmatprep.subr.bf16.mxu0 0
        %4400 = vmatpush1.bf16.msra.mxu0 %v4353
        %4401 = vmatprep.subr.bf16.mxu0 0
        %4402 = vmatpush1.bf16.msra.mxu0 %v4354
        %4403 = vmatprep.mubr.bf16.mxu0 %v4254
        %4404 = vmatmul.mubr.bf16.gmra.mrb[0].mxu0 %v4253
        %v4405 = vpop.f32.mrb[0].mxu0
        %v4406 = vadd.f32 %v4273, %v4405
        %v4407 = vpop.f32.mrb[0].mxu0
        %v4408 = vpop.f32.mrb[0].mxu0
        %v4409 = vadd.f32 %v4273, %v4408
        %v4410 = vpop.f32.mrb[0].mxu0
        %4411 = vmatprep.mubr.bf16.mxu0 %v4256
        %4412 = vmatmul.mubr.bf16.gmra.mrb[0].mxu0 %v4255
        %v4413 = vpop.f32.mrb[0].mxu0
        %v4414 = vadd.f32 %v4273, %v4413
        %v4415 = vpop.f32.mrb[0].mxu0
        %v4416 = vpop.f32.mrb[0].mxu0
        %v4417 = vadd.f32 %v4273, %v4416
        %v4418 = vpop.f32.mrb[0].mxu0
        %4419 = vmatprep.mubr.bf16.mxu0 %v4258
        %4420 = vmatmul.mubr.bf16.gmra.mrb[0].mxu0 %v4257
        %v4421 = vpop.f32.mrb[0].mxu0
        %v4422 = vadd.f32 %v4273, %v4421
        %v4423 = vpop.f32.mrb[0].mxu0
        %v4424 = vpop.f32.mrb[0].mxu0
        %v4425 = vadd.f32 %v4273, %v4424
        %v4426 = vpop.f32.mrb[0].mxu0
        %4427 = vmatprep.mubr.bf16.mxu0 %v4260
        %4428 = vmatmul.mubr.bf16.gmra.mrb[0].mxu0 %v4259
        %v4429 = vpop.f32.mrb[0].mxu0
        %v4430 = vadd.f32 %v4273, %v4429
        %v4431 = vpop.f32.mrb[0].mxu0
        %v4432 = vpop.f32.mrb[0].mxu0
        %v4433 = vadd.f32 %v4273, %v4432
        %v4434 = vpop.f32.mrb[0].mxu0
        %4435 = vmatprep.mubr.bf16.mxu0 %v4262
        %4436 = vmatmul.mubr.bf16.gmra.mrb[0].mxu0 %v4261
        %v4437 = vpop.f32.mrb[0].mxu0
        %v4438 = vadd.f32 %v4273, %v4437
        %v4439 = vpop.f32.mrb[0].mxu0
        %v4440 = vpop.f32.mrb[0].mxu0
        %v4441 = vadd.f32 %v4273, %v4440
        %v4442 = vpop.f32.mrb[0].mxu0
        %4443 = vmatprep.mubr.bf16.mxu0 %v4264
        %4444 = vmatmul.mubr.bf16.gmra.mrb[0].mxu0 %v4263
        %v4445 = vpop.f32.mrb[0].mxu0
        %v4446 = vadd.f32 %v4273, %v4445
        %v4447 = vpop.f32.mrb[0].mxu0
        %v4448 = vpop.f32.mrb[0].mxu0
        %v4449 = vadd.f32 %v4273, %v4448
        %v4450 = vpop.f32.mrb[0].mxu0
        %4451 = vmatprep.mubr.bf16.mxu0 %v4266
        %4452 = vmatmul.mubr.bf16.gmra.mrb[0].mxu0 %v4265
        %v4453 = vpop.f32.mrb[0].mxu0
        %v4454 = vadd.f32 %v4273, %v4453
        %v4455 = vpop.f32.mrb[0].mxu0
        %v4456 = vpop.f32.mrb[0].mxu0
        %v4457 = vadd.f32 %v4273, %v4456
        %v4458 = vpop.f32.mrb[0].mxu0
        %4459 = vmatprep.mubr.bf16.mxu0 %v4268
        %4460 = vmatmul.mubr.bf16.gmra.mrb[0].mxu0 %v4267
        %v4461 = vpop.f32.mrb[0].mxu0
        %v4462 = vadd.f32 %v4273, %v4461
        %v4463 = vpop.f32.mrb[0].mxu0
        %v4464 = vpop.f32.mrb[0].mxu0
        %v4465 = vadd.f32 %v4273, %v4464
        %v4466 = vpop.f32.mrb[0].mxu0
        %4467 = vdwg.mxu0
        %s4468 = smul.addr %s2156, 4
        %s4469 = scalar_lea.vmem [#allocation22], %s4468
        %v4470 = vld [vmem:[%s4469] sm:$0xf]
        %v4471 = vld [vmem:[%s4469 + $0x4] sm:$0xf]
        %v4472 = vld [vmem:[%s4469 + $0x8] sm:$0xf]
        %v4473 = vld [vmem:[%s4469 + $0xc] sm:$0xf]
        %v4474 = vld [vmem:[%s4469 + $0x10] sm:$0xf]
        %v4475 = vld [vmem:[%s4469 + $0x14] sm:$0xf]
        %v4476 = vld [vmem:[%s4469 + $0x18] sm:$0xf]
        %v4477 = vld [vmem:[%s4469 + $0x1c] sm:$0xf]
        %v4478 = vand.u32 2147483647, %v3778
        %v4479 = vand.u32 2147483647, %v3779
        %v4480 = vand.u32 2147483647, %v3780
        %v4481 = vand.u32 2147483647, %v3781
        %v4482 = vand.u32 2147483647, %v3782
        %v4483 = vand.u32 2147483647, %v3783
        %v4484 = vand.u32 2147483647, %v3784
        %v4485 = vand.u32 2147483647, %v3785
        %v4486 = vand.u32 2147483647, %v3786
        %v4487 = vand.u32 2147483647, %v3787
        %v4488 = vand.u32 2147483647, %v3788
        %v4489 = vand.u32 2147483647, %v3789
        %v4490 = vand.u32 2147483647, %v3790
        %v4491 = vand.u32 2147483647, %v3791
        %v4492 = vand.u32 2147483647, %v3792
        %v4493 = vand.u32 2147483647, %v3793
        %v4494 = vsub.f32 0.0, %v4478
        %v4495 = vsub.f32 0.0, %v4479
        %v4496 = vsub.f32 0.0, %v4480
        %v4497 = vsub.f32 0.0, %v4481
        %v4498 = vsub.f32 0.0, %v4482
        %v4499 = vsub.f32 0.0, %v4483
        %v4500 = vsub.f32 0.0, %v4484
        %v4501 = vsub.f32 0.0, %v4485
        %v4502 = vsub.f32 0.0, %v4486
        %v4503 = vsub.f32 0.0, %v4487
        %v4504 = vsub.f32 0.0, %v4488
        %v4505 = vsub.f32 0.0, %v4489
        %v4506 = vsub.f32 0.0, %v4490
        %v4507 = vsub.f32 0.0, %v4491
        %v4508 = vsub.f32 0.0, %v4492
        %v4509 = vsub.f32 0.0, %v4493
        %v4510 = vmul.f32 %v4494, 1.442695
        %v4511 = vpow.pop %v4510
        %v4512 = vmul.f32 %v4495, 1.442695
        %v4513 = vpow.pop %v4512
        %v4514 = vmul.f32 %v4496, 1.442695
        %v4515 = vpow.pop %v4514
        %v4516 = vmul.f32 %v4497, 1.442695
        %v4517 = vpow.pop %v4516
        %v4518 = vmul.f32 %v4498, 1.442695
        %v4519 = vpow.pop %v4518
        %v4520 = vmul.f32 %v4499, 1.442695
        %v4521 = vpow.pop %v4520
        %v4522 = vmul.f32 %v4500, 1.442695
        %v4523 = vpow.pop %v4522
        %v4524 = vmul.f32 %v4501, 1.442695
        %v4525 = vpow.pop %v4524
        %v4526 = vmul.f32 %v4502, 1.442695
        %v4527 = vpow.pop %v4526
        %v4528 = vmul.f32 %v4503, 1.442695
        %v4529 = vpow.pop %v4528
        %v4530 = vmul.f32 %v4504, 1.442695
        %v4531 = vpow.pop %v4530
        %v4532 = vmul.f32 %v4505, 1.442695
        %v4533 = vpow.pop %v4532
        %v4534 = vmul.f32 %v4506, 1.442695
        %v4535 = vpow.pop %v4534
        %v4536 = vmul.f32 %v4507, 1.442695
        %v4537 = vpow.pop %v4536
        %v4538 = vmul.f32 %v4508, 1.442695
        %v4539 = vpow.pop %v4538
        %v4540 = vmul.f32 %v4509, 1.442695
        %v4541 = vpow.pop %v4540
        %v4542 = vsub.f32 %v4511, 1.0
        %v4543 = vsub.f32 %v4513, 1.0
        %v4544 = vsub.f32 %v4515, 1.0
        %v4545 = vsub.f32 %v4517, 1.0
        %v4546 = vsub.f32 %v4519, 1.0
        %v4547 = vsub.f32 %v4521, 1.0
        %v4548 = vsub.f32 %v4523, 1.0
        %v4549 = vsub.f32 %v4525, 1.0
        %v4550 = vsub.f32 %v4527, 1.0
        %v4551 = vsub.f32 %v4529, 1.0
        %v4552 = vsub.f32 %v4531, 1.0
        %v4553 = vsub.f32 %v4533, 1.0
        %v4554 = vsub.f32 %v4535, 1.0
        %v4555 = vsub.f32 %v4537, 1.0
        %v4556 = vsub.f32 %v4539, 1.0
        %v4557 = vsub.f32 %v4541, 1.0
        %vm4558 = vcmp.gt.f32.partialorder %v3778, 0.0
        %vm4559 = vcmp.gt.f32.partialorder %v3779, 0.0
        %vm4560 = vcmp.gt.f32.partialorder %v3780, 0.0
        %vm4561 = vcmp.gt.f32.partialorder %v3781, 0.0
        %vm4562 = vcmp.gt.f32.partialorder %v3782, 0.0
        %vm4563 = vcmp.gt.f32.partialorder %v3783, 0.0
        %vm4564 = vcmp.gt.f32.partialorder %v3784, 0.0
        %vm4565 = vcmp.gt.f32.partialorder %v3785, 0.0
        %vm4566 = vcmp.gt.f32.partialorder %v3786, 0.0
        %vm4567 = vcmp.gt.f32.partialorder %v3787, 0.0
        %vm4568 = vcmp.gt.f32.partialorder %v3788, 0.0
        %vm4569 = vcmp.gt.f32.partialorder %v3789, 0.0
        %vm4570 = vcmp.gt.f32.partialorder %v3790, 0.0
        %vm4571 = vcmp.gt.f32.partialorder %v3791, 0.0
        %vm4572 = vcmp.gt.f32.partialorder %v3792, 0.0
        %vm4573 = vcmp.gt.f32.partialorder %v3793, 0.0
        %v4574 = vsel %vm4558, %v3778, %v4542
        %v4575 = vsel %vm4559, %v3779, %v4543
        %v4576 = vsel %vm4560, %v3780, %v4544
        %v4577 = vsel %vm4561, %v3781, %v4545
        %v4578 = vsel %vm4562, %v3782, %v4546
        %v4579 = vsel %vm4563, %v3783, %v4547
        %v4580 = vsel %vm4564, %v3784, %v4548
        %v4581 = vsel %vm4565, %v3785, %v4549
        %v4582 = vsel %vm4566, %v3786, %v4550
        %v4583 = vsel %vm4567, %v3787, %v4551
        %v4584 = vsel %vm4568, %v3788, %v4552
        %v4585 = vsel %vm4569, %v3789, %v4553
        %v4586 = vsel %vm4570, %v3790, %v4554
        %v4587 = vsel %vm4571, %v3791, %v4555
        %v4588 = vsel %vm4572, %v3792, %v4556
        %v4589 = vsel %vm4573, %v3793, %v4557
        %v4590 = vsub.f32 0.0, %v3778
        %v4591 = vsub.f32 0.0, %v3779
        %v4592 = vsub.f32 0.0, %v3780
        %v4593 = vsub.f32 0.0, %v3781
        %v4594 = vsub.f32 0.0, %v3782
        %v4595 = vsub.f32 0.0, %v3783
        %v4596 = vsub.f32 0.0, %v3784
        %v4597 = vsub.f32 0.0, %v3785
        %v4598 = vsub.f32 0.0, %v3786
        %v4599 = vsub.f32 0.0, %v3787
        %v4600 = vsub.f32 0.0, %v3788
        %v4601 = vsub.f32 0.0, %v3789
        %v4602 = vsub.f32 0.0, %v3790
        %v4603 = vsub.f32 0.0, %v3791
        %v4604 = vsub.f32 0.0, %v3792
        %v4605 = vsub.f32 0.0, %v3793
        %v4606 = vsel %vm4558, %v4542, %v4590
        %v4607 = vsel %vm4559, %v4543, %v4591
        %v4608 = vsel %vm4560, %v4544, %v4592
        %v4609 = vsel %vm4561, %v4545, %v4593
        %v4610 = vsel %vm4562, %v4546, %v4594
        %v4611 = vsel %vm4563, %v4547, %v4595
        %v4612 = vsel %vm4564, %v4548, %v4596
        %v4613 = vsel %vm4565, %v4549, %v4597
        %v4614 = vsel %vm4566, %v4550, %v4598
        %v4615 = vsel %vm4567, %v4551, %v4599
        %v4616 = vsel %vm4568, %v4552, %v4600
        %v4617 = vsel %vm4569, %v4553, %v4601
        %v4618 = vsel %vm4570, %v4554, %v4602
        %v4619 = vsel %vm4571, %v4555, %v4603
        %v4620 = vsel %vm4572, %v4556, %v4604
        %v4621 = vsel %vm4573, %v4557, %v4605
        %4638 = vrot.lane.b32.xlu0 %v4606, 32
        %v4639 = vpop.permute.xlu0 %4638
        %4640 = vrot.lane.b32.xlu0 %v4607, 32
        %v4641 = vpop.permute.xlu0 %4640
        %4642 = vrot.lane.b32.xlu0 %v4608, 32
        %v4643 = vpop.permute.xlu0 %4642
        %4644 = vrot.lane.b32.xlu0 %v4609, 32
        %v4645 = vpop.permute.xlu0 %4644
        %4646 = vrot.lane.b32.xlu0 %v4610, 32
        %v4647 = vpop.permute.xlu0 %4646
        %4648 = vrot.lane.b32.xlu0 %v4611, 32
        %v4649 = vpop.permute.xlu0 %4648
        %4650 = vrot.lane.b32.xlu0 %v4612, 32
        %v4651 = vpop.permute.xlu0 %4650
        %4652 = vrot.lane.b32.xlu0 %v4613, 32
        %v4653 = vpop.permute.xlu0 %4652
        %4654 = vrot.lane.b32.xlu0 %v4614, 32
        %v4655 = vpop.permute.xlu0 %4654
        %4656 = vrot.lane.b32.xlu0 %v4615, 32
        %v4657 = vpop.permute.xlu0 %4656
        %4658 = vrot.lane.b32.xlu0 %v4616, 32
        %v4659 = vpop.permute.xlu0 %4658
        %4660 = vrot.lane.b32.xlu0 %v4617, 32
        %v4661 = vpop.permute.xlu0 %4660
        %4662 = vrot.lane.b32.xlu0 %v4618, 32
        %v4663 = vpop.permute.xlu0 %4662
        %4664 = vrot.lane.b32.xlu0 %v4619, 32
        %v4665 = vpop.permute.xlu0 %4664
        %4666 = vrot.lane.b32.xlu0 %v4620, 32
        %v4667 = vpop.permute.xlu0 %4666
        %4668 = vrot.lane.b32.xlu0 %v4621, 32
        %v4669 = vpop.permute.xlu0 %4668
        %v4686 = vsel %vm1311, %v4574, %v4639
        %v4687 = vsel %vm1311, %v4575, %v4641
        %v4688 = vsel %vm1311, %v4576, %v4643
        %v4689 = vsel %vm1311, %v4577, %v4645
        %v4690 = vsel %vm1311, %v4578, %v4647
        %v4691 = vsel %vm1311, %v4579, %v4649
        %v4692 = vsel %vm1311, %v4580, %v4651
        %v4693 = vsel %vm1311, %v4581, %v4653
        %v4694 = vsel %vm1311, %v4582, %v4655
        %v4695 = vsel %vm1311, %v4583, %v4657
        %v4696 = vsel %vm1311, %v4584, %v4659
        %v4697 = vsel %vm1311, %v4585, %v4661
        %v4698 = vsel %vm1311, %v4586, %v4663
        %v4699 = vsel %vm1311, %v4587, %v4665
        %v4700 = vsel %vm1311, %v4588, %v4667
        %v4701 = vsel %vm1311, %v4589, %v4669
        %v4702 = vpack.c.bf16 %v4687, %v4686
        %v4703 = vpack.c.bf16 %v4689, %v4688
        %v4704 = vpack.c.bf16 %v4691, %v4690
        %v4705 = vpack.c.bf16 %v4693, %v4692
        %v4706 = vpack.c.bf16 %v4695, %v4694
        %v4707 = vpack.c.bf16 %v4697, %v4696
        %v4708 = vpack.c.bf16 %v4699, %v4698
        %v4709 = vpack.c.bf16 %v4701, %v4700
        %v4718 = vunpack.c.l.b16 %v4470
        %v4719 = vunpack.c.l.b16 %v4471
        %v4720 = vunpack.c.l.b16 %v4472
        %v4721 = vunpack.c.l.b16 %v4473
        %v4722 = vunpack.c.l.b16 %v4474
        %v4723 = vunpack.c.l.b16 %v4475
        %v4724 = vunpack.c.l.b16 %v4476
        %v4725 = vunpack.c.l.b16 %v4477
        %v4726 = vpack.c.b16 %v4719, %v4718
        %v4727 = vpack.c.b16 %v4721, %v4720
        %v4728 = vpack.c.b16 %v4723, %v4722
        %v4729 = vpack.c.b16 %v4725, %v4724
        %v4735 = vsel %vm1724, %v4702, 0
        %v4738 = vsel %vm1724, %v4703, 0
        %v4741 = vsel %vm1724, %v4704, 0
        %v4744 = vsel %vm1724, %v4705, 0
        %v4747 = vsel %vm1724, %v4706, 0
        %v4750 = vsel %vm1724, %v4707, 0
        %v4753 = vsel %vm1724, %v4708, 0
        %v4756 = vsel %vm1724, %v4709, 0
        %4758 = vmatprep.subr.bf16.mxu0 0
        %4759 = vmatpush1.bf16.msra.mxu0 %v4726
        %4760 = vmatprep.subr.bf16.mxu0 0
        %4761 = vmatpush1.bf16.msra.mxu0 %v4727
        %4762 = vmatprep.subr.bf16.mxu0 0
        %4763 = vmatpush1.bf16.msra.mxu0 %v4728
        %4764 = vmatprep.subr.bf16.mxu0 0
        %4765 = vmatpush1.bf16.msra.mxu0 %v4729
        %4766 = vmatprep.subr.bf16.mxu0 0
        %4767 = vmatpush1.bf16.msra.mxu0 0
        %4768 = vmatprep.subr.bf16.mxu0 0
        %4769 = vmatpush1.bf16.msra.mxu0 0
        %4770 = vmatprep.subr.bf16.mxu0 0
        %4771 = vmatpush1.bf16.msra.mxu0 0
        %4772 = vmatprep.subr.bf16.mxu0 0
        %4773 = vmatpush1.bf16.msra.mxu0 0
        %4774 = vmatprep.subr.bf16.mxu0 0
        %4775 = vmatpush1.bf16.msra.mxu0 0
        %4776 = vmatprep.subr.bf16.mxu0 0
        %4777 = vmatpush1.bf16.msra.mxu0 0
        %4778 = vmatprep.subr.bf16.mxu0 0
        %4779 = vmatpush1.bf16.msra.mxu0 0
        %4780 = vmatprep.subr.bf16.mxu0 0
        %4781 = vmatpush1.bf16.msra.mxu0 0
        %4782 = vmatprep.subr.bf16.mxu0 0
        %4783 = vmatpush1.bf16.msra.mxu0 0
        %4784 = vmatprep.subr.bf16.mxu0 0
        %4785 = vmatpush1.bf16.msra.mxu0 0
        %4786 = vmatprep.subr.bf16.mxu0 0
        %4787 = vmatpush1.bf16.msra.mxu0 0
        %4788 = vmatprep.subr.bf16.mxu0 0
        %4789 = vmatpush1.bf16.msra.mxu0 0
        %4790 = vmatprep.mubr.bf16.mxu0 0
        %4791 = vmatmul.mubr.bf16.gmra.mrb[0].mxu0 %v4735
        %v4792 = vpop.f32.mrb[0].mxu0
        %v4793 = vadd.f32 0.0, %v4792
        %v4794 = vpop.f32.mrb[0].mxu0
        %v4795 = vpop.f32.mrb[0].mxu0
        %v4796 = vadd.f32 0.0, %v4795
        %v4797 = vpop.f32.mrb[0].mxu0
        %4798 = vmatprep.mubr.bf16.mxu0 0
        %4799 = vmatmul.mubr.bf16.gmra.mrb[0].mxu0 %v4738
        %v4800 = vpop.f32.mrb[0].mxu0
        %v4801 = vadd.f32 0.0, %v4800
        %v4802 = vpop.f32.mrb[0].mxu0
        %v4803 = vpop.f32.mrb[0].mxu0
        %v4804 = vadd.f32 0.0, %v4803
        %v4805 = vpop.f32.mrb[0].mxu0
        %4806 = vmatprep.mubr.bf16.mxu0 0
        %4807 = vmatmul.mubr.bf16.gmra.mrb[0].mxu0 %v4741
        %v4808 = vpop.f32.mrb[0].mxu0
        %v4809 = vadd.f32 0.0, %v4808
        %v4810 = vpop.f32.mrb[0].mxu0
        %v4811 = vpop.f32.mrb[0].mxu0
        %v4812 = vadd.f32 0.0, %v4811
        %v4813 = vpop.f32.mrb[0].mxu0
        %4814 = vmatprep.mubr.bf16.mxu0 0
        %4815 = vmatmul.mubr.bf16.gmra.mrb[0].mxu0 %v4744
        %v4816 = vpop.f32.mrb[0].mxu0
        %v4817 = vadd.f32 0.0, %v4816
        %v4818 = vpop.f32.mrb[0].mxu0
        %v4819 = vpop.f32.mrb[0].mxu0
        %v4820 = vadd.f32 0.0, %v4819
        %v4821 = vpop.f32.mrb[0].mxu0
        %4822 = vmatprep.mubr.bf16.mxu0 0
        %4823 = vmatmul.mubr.bf16.gmra.mrb[0].mxu0 %v4747
        %v4824 = vpop.f32.mrb[0].mxu0
        %v4825 = vadd.f32 0.0, %v4824
        %v4826 = vpop.f32.mrb[0].mxu0
        %v4827 = vpop.f32.mrb[0].mxu0
        %v4828 = vadd.f32 0.0, %v4827
        %v4829 = vpop.f32.mrb[0].mxu0
        %4830 = vmatprep.mubr.bf16.mxu0 0
        %4831 = vmatmul.mubr.bf16.gmra.mrb[0].mxu0 %v4750
        %v4832 = vpop.f32.mrb[0].mxu0
        %v4833 = vadd.f32 0.0, %v4832
        %v4834 = vpop.f32.mrb[0].mxu0
        %v4835 = vpop.f32.mrb[0].mxu0
        %v4836 = vadd.f32 0.0, %v4835
        %v4837 = vpop.f32.mrb[0].mxu0
        %4838 = vmatprep.mubr.bf16.mxu0 0
        %4839 = vmatmul.mubr.bf16.gmra.mrb[0].mxu0 %v4753
        %v4840 = vpop.f32.mrb[0].mxu0
        %v4841 = vadd.f32 0.0, %v4840
        %v4842 = vpop.f32.mrb[0].mxu0
        %v4843 = vpop.f32.mrb[0].mxu0
        %v4844 = vadd.f32 0.0, %v4843
        %v4845 = vpop.f32.mrb[0].mxu0
        %4846 = vmatprep.mubr.bf16.mxu0 0
        %4847 = vmatmul.mubr.bf16.gmra.mrb[0].mxu0 %v4756
        %v4848 = vpop.f32.mrb[0].mxu0
        %v4849 = vadd.f32 0.0, %v4848
        %v4850 = vpop.f32.mrb[0].mxu0
        %v4851 = vpop.f32.mrb[0].mxu0
        %v4852 = vadd.f32 0.0, %v4851
        %v4853 = vpop.f32.mrb[0].mxu0
        %4854 = vdwg.mxu0
        %v4855 = vld [vmem:[%s815] sm:$0xff]
        %v4856 = vld [vmem:[%s815 + $0x8] sm:$0xff]
        %v4857 = vld [vmem:[%s815 + $0x10] sm:$0xff]
        %v4858 = vld [vmem:[%s815 + $0x18] sm:$0xff]
        %v4859 = vld [vmem:[%s815 + $0x20] sm:$0xff]
        %v4860 = vld [vmem:[%s815 + $0x28] sm:$0xff]
        %v4861 = vld [vmem:[%s815 + $0x30] sm:$0xff]
        %v4862 = vld [vmem:[%s815 + $0x38] sm:$0xff]
        %v4863 = vld [vmem:[%s815 + $0x40] sm:$0xff]
        %v4864 = vld [vmem:[%s815 + $0x48] sm:$0xff]
        %v4865 = vld [vmem:[%s815 + $0x50] sm:$0xff]
        %v4866 = vld [vmem:[%s815 + $0x58] sm:$0xff]
        %v4867 = vld [vmem:[%s815 + $0x60] sm:$0xff]
        %v4868 = vld [vmem:[%s815 + $0x68] sm:$0xff]
        %v4869 = vld [vmem:[%s815 + $0x70] sm:$0xff]
        %v4870 = vld [vmem:[%s815 + $0x78] sm:$0xff]
        %s4871 = smul.addr %s2156, 4
        %s4872 = scalar_lea.vmem [#allocation23], %s4871
        %v4873 = vld [vmem:[%s4872] sm:$0xf]
        %v4874 = vld [vmem:[%s4872 + $0x4] sm:$0xf]
        %v4875 = vld [vmem:[%s4872 + $0x8] sm:$0xf]
        %v4876 = vld [vmem:[%s4872 + $0xc] sm:$0xf]
        %v4877 = vld [vmem:[%s4872 + $0x10] sm:$0xf]
        %v4878 = vld [vmem:[%s4872 + $0x14] sm:$0xf]
        %v4879 = vld [vmem:[%s4872 + $0x18] sm:$0xf]
        %v4880 = vld [vmem:[%s4872 + $0x1c] sm:$0xf]
        %s4881 = scalar_lea.vmem [#allocation25], %s56
        %v4882 = vld [vmem:[%s4881] sm:$0x1]
        %v4883 = vand.u32 2147483647, %v4855
        %v4884 = vand.u32 2147483647, %v4856
        %v4885 = vand.u32 2147483647, %v4857
        %v4886 = vand.u32 2147483647, %v4858
        %v4887 = vand.u32 2147483647, %v4859
        %v4888 = vand.u32 2147483647, %v4860
        %v4889 = vand.u32 2147483647, %v4861
        %v4890 = vand.u32 2147483647, %v4862
        %v4891 = vand.u32 2147483647, %v4863
        %v4892 = vand.u32 2147483647, %v4864
        %v4893 = vand.u32 2147483647, %v4865
        %v4894 = vand.u32 2147483647, %v4866
        %v4895 = vand.u32 2147483647, %v4867
        %v4896 = vand.u32 2147483647, %v4868
        %v4897 = vand.u32 2147483647, %v4869
        %v4898 = vand.u32 2147483647, %v4870
        %v4899 = vsub.f32 0.0, %v4883
        %v4900 = vsub.f32 0.0, %v4884
        %v4901 = vsub.f32 0.0, %v4885
        %v4902 = vsub.f32 0.0, %v4886
        %v4903 = vsub.f32 0.0, %v4887
        %v4904 = vsub.f32 0.0, %v4888
        %v4905 = vsub.f32 0.0, %v4889
        %v4906 = vsub.f32 0.0, %v4890
        %v4907 = vsub.f32 0.0, %v4891
        %v4908 = vsub.f32 0.0, %v4892
        %v4909 = vsub.f32 0.0, %v4893
        %v4910 = vsub.f32 0.0, %v4894
        %v4911 = vsub.f32 0.0, %v4895
        %v4912 = vsub.f32 0.0, %v4896
        %v4913 = vsub.f32 0.0, %v4897
        %v4914 = vsub.f32 0.0, %v4898
        %v4915 = vmul.f32 %v4899, 1.442695
        %v4916 = vpow.pop %v4915
        %v4917 = vmul.f32 %v4900, 1.442695
        %v4918 = vpow.pop %v4917
        %v4919 = vmul.f32 %v4901, 1.442695
        %v4920 = vpow.pop %v4919
        %v4921 = vmul.f32 %v4902, 1.442695
        %v4922 = vpow.pop %v4921
        %v4923 = vmul.f32 %v4903, 1.442695
        %v4924 = vpow.pop %v4923
        %v4925 = vmul.f32 %v4904, 1.442695
        %v4926 = vpow.pop %v4925
        %v4927 = vmul.f32 %v4905, 1.442695
        %v4928 = vpow.pop %v4927
        %v4929 = vmul.f32 %v4906, 1.442695
        %v4930 = vpow.pop %v4929
        %v4931 = vmul.f32 %v4907, 1.442695
        %v4932 = vpow.pop %v4931
        %v4933 = vmul.f32 %v4908, 1.442695
        %v4934 = vpow.pop %v4933
        %v4935 = vmul.f32 %v4909, 1.442695
        %v4936 = vpow.pop %v4935
        %v4937 = vmul.f32 %v4910, 1.442695
        %v4938 = vpow.pop %v4937
        %v4939 = vmul.f32 %v4911, 1.442695
        %v4940 = vpow.pop %v4939
        %v4941 = vmul.f32 %v4912, 1.442695
        %v4942 = vpow.pop %v4941
        %v4943 = vmul.f32 %v4913, 1.442695
        %v4944 = vpow.pop %v4943
        %v4945 = vmul.f32 %v4914, 1.442695
        %v4946 = vpow.pop %v4945
        %v4947 = vsub.f32 %v4916, 1.0
        %v4948 = vsub.f32 %v4918, 1.0
        %v4949 = vsub.f32 %v4920, 1.0
        %v4950 = vsub.f32 %v4922, 1.0
        %v4951 = vsub.f32 %v4924, 1.0
        %v4952 = vsub.f32 %v4926, 1.0
        %v4953 = vsub.f32 %v4928, 1.0
        %v4954 = vsub.f32 %v4930, 1.0
        %v4955 = vsub.f32 %v4932, 1.0
        %v4956 = vsub.f32 %v4934, 1.0
        %v4957 = vsub.f32 %v4936, 1.0
        %v4958 = vsub.f32 %v4938, 1.0
        %v4959 = vsub.f32 %v4940, 1.0
        %v4960 = vsub.f32 %v4942, 1.0
        %v4961 = vsub.f32 %v4944, 1.0
        %v4962 = vsub.f32 %v4946, 1.0
        %vm4963 = vcmp.gt.f32.partialorder %v4855, 0.0
        %vm4964 = vcmp.gt.f32.partialorder %v4856, 0.0
        %vm4965 = vcmp.gt.f32.partialorder %v4857, 0.0
        %vm4966 = vcmp.gt.f32.partialorder %v4858, 0.0
        %vm4967 = vcmp.gt.f32.partialorder %v4859, 0.0
        %vm4968 = vcmp.gt.f32.partialorder %v4860, 0.0
        %vm4969 = vcmp.gt.f32.partialorder %v4861, 0.0
        %vm4970 = vcmp.gt.f32.partialorder %v4862, 0.0
        %vm4971 = vcmp.gt.f32.partialorder %v4863, 0.0
        %vm4972 = vcmp.gt.f32.partialorder %v4864, 0.0
        %vm4973 = vcmp.gt.f32.partialorder %v4865, 0.0
        %vm4974 = vcmp.gt.f32.partialorder %v4866, 0.0
        %vm4975 = vcmp.gt.f32.partialorder %v4867, 0.0
        %vm4976 = vcmp.gt.f32.partialorder %v4868, 0.0
        %vm4977 = vcmp.gt.f32.partialorder %v4869, 0.0
        %vm4978 = vcmp.gt.f32.partialorder %v4870, 0.0
        %v4979 = vsel %vm4963, %v4855, %v4947
        %v4980 = vsel %vm4964, %v4856, %v4948
        %v4981 = vsel %vm4965, %v4857, %v4949
        %v4982 = vsel %vm4966, %v4858, %v4950
        %v4983 = vsel %vm4967, %v4859, %v4951
        %v4984 = vsel %vm4968, %v4860, %v4952
        %v4985 = vsel %vm4969, %v4861, %v4953
        %v4986 = vsel %vm4970, %v4862, %v4954
        %v4987 = vsel %vm4971, %v4863, %v4955
        %v4988 = vsel %vm4972, %v4864, %v4956
        %v4989 = vsel %vm4973, %v4865, %v4957
        %v4990 = vsel %vm4974, %v4866, %v4958
        %v4991 = vsel %vm4975, %v4867, %v4959
        %v4992 = vsel %vm4976, %v4868, %v4960
        %v4993 = vsel %vm4977, %v4869, %v4961
        %v4994 = vsel %vm4978, %v4870, %v4962
        %v4995 = vsub.f32 0.0, %v4855
        %v4996 = vsub.f32 0.0, %v4856
        %v4997 = vsub.f32 0.0, %v4857
        %v4998 = vsub.f32 0.0, %v4858
        %v4999 = vsub.f32 0.0, %v4859
        %v5000 = vsub.f32 0.0, %v4860
        %v5001 = vsub.f32 0.0, %v4861
        %v5002 = vsub.f32 0.0, %v4862
        %v5003 = vsub.f32 0.0, %v4863
        %v5004 = vsub.f32 0.0, %v4864
        %v5005 = vsub.f32 0.0, %v4865
        %v5006 = vsub.f32 0.0, %v4866
        %v5007 = vsub.f32 0.0, %v4867
        %v5008 = vsub.f32 0.0, %v4868
        %v5009 = vsub.f32 0.0, %v4869
        %v5010 = vsub.f32 0.0, %v4870
        %v5011 = vsel %vm4963, %v4947, %v4995
        %v5012 = vsel %vm4964, %v4948, %v4996
        %v5013 = vsel %vm4965, %v4949, %v4997
        %v5014 = vsel %vm4966, %v4950, %v4998
        %v5015 = vsel %vm4967, %v4951, %v4999
        %v5016 = vsel %vm4968, %v4952, %v5000
        %v5017 = vsel %vm4969, %v4953, %v5001
        %v5018 = vsel %vm4970, %v4954, %v5002
        %v5019 = vsel %vm4971, %v4955, %v5003
        %v5020 = vsel %vm4972, %v4956, %v5004
        %v5021 = vsel %vm4973, %v4957, %v5005
        %v5022 = vsel %vm4974, %v4958, %v5006
        %v5023 = vsel %vm4975, %v4959, %v5007
        %v5024 = vsel %vm4976, %v4960, %v5008
        %v5025 = vsel %vm4977, %v4961, %v5009
        %v5026 = vsel %vm4978, %v4962, %v5010
        %5043 = vrot.lane.b32.xlu0 %v5011, 32
        %v5044 = vpop.permute.xlu0 %5043
        %5045 = vrot.lane.b32.xlu0 %v5012, 32
        %v5046 = vpop.permute.xlu0 %5045
        %5047 = vrot.lane.b32.xlu0 %v5013, 32
        %v5048 = vpop.permute.xlu0 %5047
        %5049 = vrot.lane.b32.xlu0 %v5014, 32
        %v5050 = vpop.permute.xlu0 %5049
        %5051 = vrot.lane.b32.xlu0 %v5015, 32
        %v5052 = vpop.permute.xlu0 %5051
        %5053 = vrot.lane.b32.xlu0 %v5016, 32
        %v5054 = vpop.permute.xlu0 %5053
        %5055 = vrot.lane.b32.xlu0 %v5017, 32
        %v5056 = vpop.permute.xlu0 %5055
        %5057 = vrot.lane.b32.xlu0 %v5018, 32
        %v5058 = vpop.permute.xlu0 %5057
        %5059 = vrot.lane.b32.xlu0 %v5019, 32
        %v5060 = vpop.permute.xlu0 %5059
        %5061 = vrot.lane.b32.xlu0 %v5020, 32
        %v5062 = vpop.permute.xlu0 %5061
        %5063 = vrot.lane.b32.xlu0 %v5021, 32
        %v5064 = vpop.permute.xlu0 %5063
        %5065 = vrot.lane.b32.xlu0 %v5022, 32
        %v5066 = vpop.permute.xlu0 %5065
        %5067 = vrot.lane.b32.xlu0 %v5023, 32
        %v5068 = vpop.permute.xlu0 %5067
        %5069 = vrot.lane.b32.xlu0 %v5024, 32
        %v5070 = vpop.permute.xlu0 %5069
        %5071 = vrot.lane.b32.xlu0 %v5025, 32
        %v5072 = vpop.permute.xlu0 %5071
        %5073 = vrot.lane.b32.xlu0 %v5026, 32
        %v5074 = vpop.permute.xlu0 %5073
        %v5091 = vsel %vm1311, %v4979, %v5044
        %v5092 = vsel %vm1311, %v4980, %v5046
        %v5093 = vsel %vm1311, %v4981, %v5048
        %v5094 = vsel %vm1311, %v4982, %v5050
        %v5095 = vsel %vm1311, %v4983, %v5052
        %v5096 = vsel %vm1311, %v4984, %v5054
        %v5097 = vsel %vm1311, %v4985, %v5056
        %v5098 = vsel %vm1311, %v4986, %v5058
        %v5099 = vsel %vm1311, %v4987, %v5060
        %v5100 = vsel %vm1311, %v4988, %v5062
        %v5101 = vsel %vm1311, %v4989, %v5064
        %v5102 = vsel %vm1311, %v4990, %v5066
        %v5103 = vsel %vm1311, %v4991, %v5068
        %v5104 = vsel %vm1311, %v4992, %v5070
        %v5105 = vsel %vm1311, %v4993, %v5072
        %v5106 = vsel %vm1311, %v4994, %v5074
        %v5107 = vpack.c.bf16 %v5092, %v5091
        %v5108 = vpack.c.bf16 %v5094, %v5093
        %v5109 = vpack.c.bf16 %v5096, %v5095
        %v5110 = vpack.c.bf16 %v5098, %v5097
        %v5111 = vpack.c.bf16 %v5100, %v5099
        %v5112 = vpack.c.bf16 %v5102, %v5101
        %v5113 = vpack.c.bf16 %v5104, %v5103
        %v5114 = vpack.c.bf16 %v5106, %v5105
        %v5116 = vlaneseq
        %v5117 = vshrl.u32 %v5116, 7
        %v5118 = vsub.s32 0, %v5117
        %v5119 = vrot.slane %v4882, %v5118
        %v5129 = vunpack.c.l.b16 %v4873
        %v5130 = vunpack.c.l.b16 %v4874
        %v5131 = vunpack.c.l.b16 %v4875
        %v5132 = vunpack.c.l.b16 %v4876
        %v5133 = vunpack.c.l.b16 %v4877
        %v5134 = vunpack.c.l.b16 %v4878
        %v5135 = vunpack.c.l.b16 %v4879
        %v5136 = vunpack.c.l.b16 %v4880
        %v5137 = vpack.c.b16 %v5130, %v5129
        %v5138 = vpack.c.b16 %v5132, %v5131
        %v5139 = vpack.c.b16 %v5134, %v5133
        %v5140 = vpack.c.b16 %v5136, %v5135
        %v5146 = vsel %vm1724, %v5107, 0
        %v5149 = vsel %vm1724, %v5108, 0
        %v5152 = vsel %vm1724, %v5109, 0
        %v5155 = vsel %vm1724, %v5110, 0
        %v5158 = vsel %vm1724, %v5111, 0
        %v5161 = vsel %vm1724, %v5112, 0
        %v5164 = vsel %vm1724, %v5113, 0
        %v5167 = vsel %vm1724, %v5114, 0
        %5169 = vmatprep.subr.bf16.mxu0 0
        %5170 = vmatpush1.bf16.msra.mxu0 %v5137
        %5171 = vmatprep.subr.bf16.mxu0 0
        %5172 = vmatpush1.bf16.msra.mxu0 %v5138
        %5173 = vmatprep.subr.bf16.mxu0 0
        %5174 = vmatpush1.bf16.msra.mxu0 %v5139
        %5175 = vmatprep.subr.bf16.mxu0 0
        %5176 = vmatpush1.bf16.msra.mxu0 %v5140
        %5177 = vmatprep.subr.bf16.mxu0 0
        %5178 = vmatpush1.bf16.msra.mxu0 0
        %5179 = vmatprep.subr.bf16.mxu0 0
        %5180 = vmatpush1.bf16.msra.mxu0 0
        %5181 = vmatprep.subr.bf16.mxu0 0
        %5182 = vmatpush1.bf16.msra.mxu0 0
        %5183 = vmatprep.subr.bf16.mxu0 0
        %5184 = vmatpush1.bf16.msra.mxu0 0
        %5185 = vmatprep.subr.bf16.mxu0 0
        %5186 = vmatpush1.bf16.msra.mxu0 0
        %5187 = vmatprep.subr.bf16.mxu0 0
        %5188 = vmatpush1.bf16.msra.mxu0 0
        %5189 = vmatprep.subr.bf16.mxu0 0
        %5190 = vmatpush1.bf16.msra.mxu0 0
        %5191 = vmatprep.subr.bf16.mxu0 0
        %5192 = vmatpush1.bf16.msra.mxu0 0
        %5193 = vmatprep.subr.bf16.mxu0 0
        %5194 = vmatpush1.bf16.msra.mxu0 0
        %5195 = vmatprep.subr.bf16.mxu0 0
        %5196 = vmatpush1.bf16.msra.mxu0 0
        %5197 = vmatprep.subr.bf16.mxu0 0
        %5198 = vmatpush1.bf16.msra.mxu0 0
        %5199 = vmatprep.subr.bf16.mxu0 0
        %5200 = vmatpush1.bf16.msra.mxu0 0
        %5201 = vmatprep.mubr.bf16.mxu0 0
        %5202 = vmatmul.mubr.bf16.gmra.mrb[0].mxu0 %v5146
        %v5203 = vpop.f32.mrb[0].mxu0
        %v5204 = vadd.f32 %v5119, %v5203
        %v5205 = vpop.f32.mrb[0].mxu0
        %v5206 = vpop.f32.mrb[0].mxu0
        %v5207 = vadd.f32 %v5119, %v5206
        %v5208 = vpop.f32.mrb[0].mxu0
        %5209 = vmatprep.mubr.bf16.mxu0 0
        %5210 = vmatmul.mubr.bf16.gmra.mrb[0].mxu0 %v5149
        %v5211 = vpop.f32.mrb[0].mxu0
        %v5212 = vadd.f32 %v5119, %v5211
        %v5213 = vpop.f32.mrb[0].mxu0
        %v5214 = vpop.f32.mrb[0].mxu0
        %v5215 = vadd.f32 %v5119, %v5214
        %v5216 = vpop.f32.mrb[0].mxu0
        %5217 = vmatprep.mubr.bf16.mxu0 0
        %5218 = vmatmul.mubr.bf16.gmra.mrb[0].mxu0 %v5152
        %v5219 = vpop.f32.mrb[0].mxu0
        %v5220 = vadd.f32 %v5119, %v5219
        %v5221 = vpop.f32.mrb[0].mxu0
        %v5222 = vpop.f32.mrb[0].mxu0
        %v5223 = vadd.f32 %v5119, %v5222
        %v5224 = vpop.f32.mrb[0].mxu0
        %5225 = vmatprep.mubr.bf16.mxu0 0
        %5226 = vmatmul.mubr.bf16.gmra.mrb[0].mxu0 %v5155
        %v5227 = vpop.f32.mrb[0].mxu0
        %v5228 = vadd.f32 %v5119, %v5227
        %v5229 = vpop.f32.mrb[0].mxu0
        %v5230 = vpop.f32.mrb[0].mxu0
        %v5231 = vadd.f32 %v5119, %v5230
        %v5232 = vpop.f32.mrb[0].mxu0
        %5233 = vmatprep.mubr.bf16.mxu0 0
        %5234 = vmatmul.mubr.bf16.gmra.mrb[0].mxu0 %v5158
        %v5235 = vpop.f32.mrb[0].mxu0
        %v5236 = vadd.f32 %v5119, %v5235
        %v5237 = vpop.f32.mrb[0].mxu0
        %v5238 = vpop.f32.mrb[0].mxu0
        %v5239 = vadd.f32 %v5119, %v5238
        %v5240 = vpop.f32.mrb[0].mxu0
        %5241 = vmatprep.mubr.bf16.mxu0 0
        %5242 = vmatmul.mubr.bf16.gmra.mrb[0].mxu0 %v5161
        %v5243 = vpop.f32.mrb[0].mxu0
        %v5244 = vadd.f32 %v5119, %v5243
        %v5245 = vpop.f32.mrb[0].mxu0
        %v5246 = vpop.f32.mrb[0].mxu0
        %v5247 = vadd.f32 %v5119, %v5246
        %v5248 = vpop.f32.mrb[0].mxu0
        %5249 = vmatprep.mubr.bf16.mxu0 0
        %5250 = vmatmul.mubr.bf16.gmra.mrb[0].mxu0 %v5164
        %v5251 = vpop.f32.mrb[0].mxu0
        %v5252 = vadd.f32 %v5119, %v5251
        %v5253 = vpop.f32.mrb[0].mxu0
        %v5254 = vpop.f32.mrb[0].mxu0
        %v5255 = vadd.f32 %v5119, %v5254
        %v5256 = vpop.f32.mrb[0].mxu0
        %5257 = vmatprep.mubr.bf16.mxu0 0
        %5258 = vmatmul.mubr.bf16.gmra.mrb[0].mxu0 %v5167
        %v5259 = vpop.f32.mrb[0].mxu0
        %v5260 = vadd.f32 %v5119, %v5259
        %v5261 = vpop.f32.mrb[0].mxu0
        %v5262 = vpop.f32.mrb[0].mxu0
        %v5263 = vadd.f32 %v5119, %v5262
        %v5264 = vpop.f32.mrb[0].mxu0
        %5265 = vdwg.mxu0
        %v5266 = vadd.f32 %v4793, %v5204
        %v5267 = vadd.f32 %v4796, %v5207
        %v5268 = vadd.f32 %v4801, %v5212
        %v5269 = vadd.f32 %v4804, %v5215
        %v5270 = vadd.f32 %v4809, %v5220
        %v5271 = vadd.f32 %v4812, %v5223
        %v5272 = vadd.f32 %v4817, %v5228
        %v5273 = vadd.f32 %v4820, %v5231
        %v5274 = vadd.f32 %v4825, %v5236
        %v5275 = vadd.f32 %v4828, %v5239
        %v5276 = vadd.f32 %v4833, %v5244
        %v5277 = vadd.f32 %v4836, %v5247
        %v5278 = vadd.f32 %v4841, %v5252
        %v5279 = vadd.f32 %v4844, %v5255
        %v5280 = vadd.f32 %v4849, %v5260
        %v5281 = vadd.f32 %v4852, %v5263
        %v5282 = vadd.f32 %v4406, %v5266
        %v5283 = vadd.f32 %v4409, %v5267
        %v5284 = vadd.f32 %v4414, %v5268
        %v5285 = vadd.f32 %v4417, %v5269
        %v5286 = vadd.f32 %v4422, %v5270
        %v5287 = vadd.f32 %v4425, %v5271
        %v5288 = vadd.f32 %v4430, %v5272
        %v5289 = vadd.f32 %v4433, %v5273
        %v5290 = vadd.f32 %v4438, %v5274
        %v5291 = vadd.f32 %v4441, %v5275
        %v5292 = vadd.f32 %v4446, %v5276
        %v5293 = vadd.f32 %v4449, %v5277
        %v5294 = vadd.f32 %v4454, %v5278
        %v5295 = vadd.f32 %v4457, %v5279
        %v5296 = vadd.f32 %v4462, %v5280
        %v5297 = vadd.f32 %v4465, %v5281
        %s5298 = smul.addr %s3794, 4
        %s5299 = scalar_lea.vmem [#allocation26], %s5298
        %v5300 = vld [vmem:[%s5299] sm:$0xf]
        %v5301 = vld [vmem:[%s5299 + $0x4] sm:$0xf]
        %v5302 = vld [vmem:[%s5299 + $0x8] sm:$0xf]
        %v5303 = vld [vmem:[%s5299 + $0xc] sm:$0xf]
        %v5304 = vld [vmem:[%s5299 + $0x10] sm:$0xf]
        %v5305 = vld [vmem:[%s5299 + $0x14] sm:$0xf]
        %v5306 = vld [vmem:[%s5299 + $0x18] sm:$0xf]
        %v5307 = vld [vmem:[%s5299 + $0x1c] sm:$0xf]
        %v5308 = vld [vmem:[%s5299 + $0x20] sm:$0xf]
        %v5309 = vld [vmem:[%s5299 + $0x24] sm:$0xf]
        %v5310 = vld [vmem:[%s5299 + $0x28] sm:$0xf]
        %v5311 = vld [vmem:[%s5299 + $0x2c] sm:$0xf]
        %v5312 = vld [vmem:[%s5299 + $0x30] sm:$0xf]
        %v5313 = vld [vmem:[%s5299 + $0x34] sm:$0xf]
        %v5314 = vld [vmem:[%s5299 + $0x38] sm:$0xf]
        %v5315 = vld [vmem:[%s5299 + $0x3c] sm:$0xf]
        %v5316 = vld [vmem:[%s5299 + $0x40] sm:$0xf]
        %v5317 = vld [vmem:[%s5299 + $0x44] sm:$0xf]
        %v5318 = vld [vmem:[%s5299 + $0x48] sm:$0xf]
        %v5319 = vld [vmem:[%s5299 + $0x4c] sm:$0xf]
        %v5320 = vld [vmem:[%s5299 + $0x50] sm:$0xf]
        %v5321 = vld [vmem:[%s5299 + $0x54] sm:$0xf]
        %v5322 = vld [vmem:[%s5299 + $0x58] sm:$0xf]
        %v5323 = vld [vmem:[%s5299 + $0x5c] sm:$0xf]
        %v5324 = vld [vmem:[%s5299 + $0x60] sm:$0xf]
        %v5325 = vld [vmem:[%s5299 + $0x64] sm:$0xf]
        %v5326 = vld [vmem:[%s5299 + $0x68] sm:$0xf]
        %v5327 = vld [vmem:[%s5299 + $0x6c] sm:$0xf]
        %v5328 = vld [vmem:[%s5299 + $0x70] sm:$0xf]
        %v5329 = vld [vmem:[%s5299 + $0x74] sm:$0xf]
        %v5330 = vld [vmem:[%s5299 + $0x78] sm:$0xf]
        %v5331 = vld [vmem:[%s5299 + $0x7c] sm:$0xf]
        %s5332 = scalar_lea.vmem [#allocation28], %s56
        %v5333 = vld [vmem:[%s5332] sm:$0x1]
        %v5334 = vand.u32 2147483647, %v5282
        %v5335 = vand.u32 2147483647, %v5283
        %v5336 = vand.u32 2147483647, %v5284
        %v5337 = vand.u32 2147483647, %v5285
        %v5338 = vand.u32 2147483647, %v5286
        %v5339 = vand.u32 2147483647, %v5287
        %v5340 = vand.u32 2147483647, %v5288
        %v5341 = vand.u32 2147483647, %v5289
        %v5342 = vand.u32 2147483647, %v5290
        %v5343 = vand.u32 2147483647, %v5291
        %v5344 = vand.u32 2147483647, %v5292
        %v5345 = vand.u32 2147483647, %v5293
        %v5346 = vand.u32 2147483647, %v5294
        %v5347 = vand.u32 2147483647, %v5295
        %v5348 = vand.u32 2147483647, %v5296
        %v5349 = vand.u32 2147483647, %v5297
        %v5350 = vsub.f32 0.0, %v5334
        %v5351 = vsub.f32 0.0, %v5335
        %v5352 = vsub.f32 0.0, %v5336
        %v5353 = vsub.f32 0.0, %v5337
        %v5354 = vsub.f32 0.0, %v5338
        %v5355 = vsub.f32 0.0, %v5339
        %v5356 = vsub.f32 0.0, %v5340
        %v5357 = vsub.f32 0.0, %v5341
        %v5358 = vsub.f32 0.0, %v5342
        %v5359 = vsub.f32 0.0, %v5343
        %v5360 = vsub.f32 0.0, %v5344
        %v5361 = vsub.f32 0.0, %v5345
        %v5362 = vsub.f32 0.0, %v5346
        %v5363 = vsub.f32 0.0, %v5347
        %v5364 = vsub.f32 0.0, %v5348
        %v5365 = vsub.f32 0.0, %v5349
        %v5366 = vmul.f32 %v5350, 1.442695
        %v5367 = vpow.pop %v5366
        %v5368 = vmul.f32 %v5351, 1.442695
        %v5369 = vpow.pop %v5368
        %v5370 = vmul.f32 %v5352, 1.442695
        %v5371 = vpow.pop %v5370
        %v5372 = vmul.f32 %v5353, 1.442695
        %v5373 = vpow.pop %v5372
        %v5374 = vmul.f32 %v5354, 1.442695
        %v5375 = vpow.pop %v5374
        %v5376 = vmul.f32 %v5355, 1.442695
        %v5377 = vpow.pop %v5376
        %v5378 = vmul.f32 %v5356, 1.442695
        %v5379 = vpow.pop %v5378
        %v5380 = vmul.f32 %v5357, 1.442695
        %v5381 = vpow.pop %v5380
        %v5382 = vmul.f32 %v5358, 1.442695
        %v5383 = vpow.pop %v5382
        %v5384 = vmul.f32 %v5359, 1.442695
        %v5385 = vpow.pop %v5384
        %v5386 = vmul.f32 %v5360, 1.442695
        %v5387 = vpow.pop %v5386
        %v5388 = vmul.f32 %v5361, 1.442695
        %v5389 = vpow.pop %v5388
        %v5390 = vmul.f32 %v5362, 1.442695
        %v5391 = vpow.pop %v5390
        %v5392 = vmul.f32 %v5363, 1.442695
        %v5393 = vpow.pop %v5392
        %v5394 = vmul.f32 %v5364, 1.442695
        %v5395 = vpow.pop %v5394
        %v5396 = vmul.f32 %v5365, 1.442695
        %v5397 = vpow.pop %v5396
        %v5398 = vsub.f32 %v5367, 1.0
        %v5399 = vsub.f32 %v5369, 1.0
        %v5400 = vsub.f32 %v5371, 1.0
        %v5401 = vsub.f32 %v5373, 1.0
        %v5402 = vsub.f32 %v5375, 1.0
        %v5403 = vsub.f32 %v5377, 1.0
        %v5404 = vsub.f32 %v5379, 1.0
        %v5405 = vsub.f32 %v5381, 1.0
        %v5406 = vsub.f32 %v5383, 1.0
        %v5407 = vsub.f32 %v5385, 1.0
        %v5408 = vsub.f32 %v5387, 1.0
        %v5409 = vsub.f32 %v5389, 1.0
        %v5410 = vsub.f32 %v5391, 1.0
        %v5411 = vsub.f32 %v5393, 1.0
        %v5412 = vsub.f32 %v5395, 1.0
        %v5413 = vsub.f32 %v5397, 1.0
        %vm5414 = vcmp.gt.f32.partialorder %v5282, 0.0
        %vm5415 = vcmp.gt.f32.partialorder %v5283, 0.0
        %vm5416 = vcmp.gt.f32.partialorder %v5284, 0.0
        %vm5417 = vcmp.gt.f32.partialorder %v5285, 0.0
        %vm5418 = vcmp.gt.f32.partialorder %v5286, 0.0
        %vm5419 = vcmp.gt.f32.partialorder %v5287, 0.0
        %vm5420 = vcmp.gt.f32.partialorder %v5288, 0.0
        %vm5421 = vcmp.gt.f32.partialorder %v5289, 0.0
        %vm5422 = vcmp.gt.f32.partialorder %v5290, 0.0
        %vm5423 = vcmp.gt.f32.partialorder %v5291, 0.0
        %vm5424 = vcmp.gt.f32.partialorder %v5292, 0.0
        %vm5425 = vcmp.gt.f32.partialorder %v5293, 0.0
        %vm5426 = vcmp.gt.f32.partialorder %v5294, 0.0
        %vm5427 = vcmp.gt.f32.partialorder %v5295, 0.0
        %vm5428 = vcmp.gt.f32.partialorder %v5296, 0.0
        %vm5429 = vcmp.gt.f32.partialorder %v5297, 0.0
        %v5430 = vsel %vm5414, %v5282, %v5398
        %v5431 = vsel %vm5415, %v5283, %v5399
        %v5432 = vsel %vm5416, %v5284, %v5400
        %v5433 = vsel %vm5417, %v5285, %v5401
        %v5434 = vsel %vm5418, %v5286, %v5402
        %v5435 = vsel %vm5419, %v5287, %v5403
        %v5436 = vsel %vm5420, %v5288, %v5404
        %v5437 = vsel %vm5421, %v5289, %v5405
        %v5438 = vsel %vm5422, %v5290, %v5406
        %v5439 = vsel %vm5423, %v5291, %v5407
        %v5440 = vsel %vm5424, %v5292, %v5408
        %v5441 = vsel %vm5425, %v5293, %v5409
        %v5442 = vsel %vm5426, %v5294, %v5410
        %v5443 = vsel %vm5427, %v5295, %v5411
        %v5444 = vsel %vm5428, %v5296, %v5412
        %v5445 = vsel %vm5429, %v5297, %v5413
        %v5446 = vsub.f32 0.0, %v5282
        %v5447 = vsub.f32 0.0, %v5283
        %v5448 = vsub.f32 0.0, %v5284
        %v5449 = vsub.f32 0.0, %v5285
        %v5450 = vsub.f32 0.0, %v5286
        %v5451 = vsub.f32 0.0, %v5287
        %v5452 = vsub.f32 0.0, %v5288
        %v5453 = vsub.f32 0.0, %v5289
        %v5454 = vsub.f32 0.0, %v5290
        %v5455 = vsub.f32 0.0, %v5291
        %v5456 = vsub.f32 0.0, %v5292
        %v5457 = vsub.f32 0.0, %v5293
        %v5458 = vsub.f32 0.0, %v5294
        %v5459 = vsub.f32 0.0, %v5295
        %v5460 = vsub.f32 0.0, %v5296
        %v5461 = vsub.f32 0.0, %v5297
        %v5462 = vsel %vm5414, %v5398, %v5446
        %v5463 = vsel %vm5415, %v5399, %v5447
        %v5464 = vsel %vm5416, %v5400, %v5448
        %v5465 = vsel %vm5417, %v5401, %v5449
        %v5466 = vsel %vm5418, %v5402, %v5450
        %v5467 = vsel %vm5419, %v5403, %v5451
        %v5468 = vsel %vm5420, %v5404, %v5452
        %v5469 = vsel %vm5421, %v5405, %v5453
        %v5470 = vsel %vm5422, %v5406, %v5454
        %v5471 = vsel %vm5423, %v5407, %v5455
        %v5472 = vsel %vm5424, %v5408, %v5456
        %v5473 = vsel %vm5425, %v5409, %v5457
        %v5474 = vsel %vm5426, %v5410, %v5458
        %v5475 = vsel %vm5427, %v5411, %v5459
        %v5476 = vsel %vm5428, %v5412, %v5460
        %v5477 = vsel %vm5429, %v5413, %v5461
        %5494 = vrot.lane.b32.xlu0 %v5462, 32
        %v5495 = vpop.permute.xlu0 %5494
        %5496 = vrot.lane.b32.xlu0 %v5463, 32
        %v5497 = vpop.permute.xlu0 %5496
        %5498 = vrot.lane.b32.xlu0 %v5464, 32
        %v5499 = vpop.permute.xlu0 %5498
        %5500 = vrot.lane.b32.xlu0 %v5465, 32
        %v5501 = vpop.permute.xlu0 %5500
        %5502 = vrot.lane.b32.xlu0 %v5466, 32
        %v5503 = vpop.permute.xlu0 %5502
        %5504 = vrot.lane.b32.xlu0 %v5467, 32
        %v5505 = vpop.permute.xlu0 %5504
        %5506 = vrot.lane.b32.xlu0 %v5468, 32
        %v5507 = vpop.permute.xlu0 %5506
        %5508 = vrot.lane.b32.xlu0 %v5469, 32
        %v5509 = vpop.permute.xlu0 %5508
        %5510 = vrot.lane.b32.xlu0 %v5470, 32
        %v5511 = vpop.permute.xlu0 %5510
        %5512 = vrot.lane.b32.xlu0 %v5471, 32
        %v5513 = vpop.permute.xlu0 %5512
        %5514 = vrot.lane.b32.xlu0 %v5472, 32
        %v5515 = vpop.permute.xlu0 %5514
        %5516 = vrot.lane.b32.xlu0 %v5473, 32
        %v5517 = vpop.permute.xlu0 %5516
        %5518 = vrot.lane.b32.xlu0 %v5474, 32
        %v5519 = vpop.permute.xlu0 %5518
        %5520 = vrot.lane.b32.xlu0 %v5475, 32
        %v5521 = vpop.permute.xlu0 %5520
        %5522 = vrot.lane.b32.xlu0 %v5476, 32
        %v5523 = vpop.permute.xlu0 %5522
        %5524 = vrot.lane.b32.xlu0 %v5477, 32
        %v5525 = vpop.permute.xlu0 %5524
        %v5542 = vsel %vm1311, %v5430, %v5495
        %v5543 = vsel %vm1311, %v5431, %v5497
        %v5544 = vsel %vm1311, %v5432, %v5499
        %v5545 = vsel %vm1311, %v5433, %v5501
        %v5546 = vsel %vm1311, %v5434, %v5503
        %v5547 = vsel %vm1311, %v5435, %v5505
        %v5548 = vsel %vm1311, %v5436, %v5507
        %v5549 = vsel %vm1311, %v5437, %v5509
        %v5550 = vsel %vm1311, %v5438, %v5511
        %v5551 = vsel %vm1311, %v5439, %v5513
        %v5552 = vsel %vm1311, %v5440, %v5515
        %v5553 = vsel %vm1311, %v5441, %v5517
        %v5554 = vsel %vm1311, %v5442, %v5519
        %v5555 = vsel %vm1311, %v5443, %v5521
        %v5556 = vsel %vm1311, %v5444, %v5523
        %v5557 = vsel %vm1311, %v5445, %v5525
        %v5574 = vrot.slane %v5542, 7
        %v5575 = vrot.slane %v5543, 7
        %v5576 = vrot.slane %v5544, 7
        %v5577 = vrot.slane %v5545, 7
        %v5578 = vrot.slane %v5546, 7
        %v5579 = vrot.slane %v5547, 7
        %v5580 = vrot.slane %v5548, 7
        %v5581 = vrot.slane %v5549, 7
        %v5582 = vrot.slane %v5550, 7
        %v5583 = vrot.slane %v5551, 7
        %v5584 = vrot.slane %v5552, 7
        %v5585 = vrot.slane %v5553, 7
        %v5586 = vrot.slane %v5554, 7
        %v5587 = vrot.slane %v5555, 7
        %v5588 = vrot.slane %v5556, 7
        %v5589 = vrot.slane %v5557, 7
        %v5606 = vsel %vm1379, 0.0, %v5574
        %v5607 = vsel %vm1379, 0.0, %v5575
        %v5608 = vsel %vm1379, 0.0, %v5576
        %v5609 = vsel %vm1379, 0.0, %v5577
        %v5610 = vsel %vm1379, 0.0, %v5578
        %v5611 = vsel %vm1379, 0.0, %v5579
        %v5612 = vsel %vm1379, 0.0, %v5580
        %v5613 = vsel %vm1379, 0.0, %v5581
        %v5614 = vsel %vm1379, 0.0, %v5582
        %v5615 = vsel %vm1379, 0.0, %v5583
        %v5616 = vsel %vm1379, 0.0, %v5584
        %v5617 = vsel %vm1379, 0.0, %v5585
        %v5618 = vsel %vm1379, 0.0, %v5586
        %v5619 = vsel %vm1379, 0.0, %v5587
        %v5620 = vsel %vm1379, 0.0, %v5588
        %v5621 = vsel %vm1379, 0.0, %v5589
        %v5636 = vrot.slane %v5606, 1
        %v5637 = vrot.slane %v5574, 1
        %v5638 = vsel %vm1444, %v5636, %v5637
        %v5639 = vrot.slane %v5607, 1
        %v5640 = vrot.slane %v5575, 1
        %v5641 = vsel %vm1444, %v5639, %v5640
        %v5642 = vrot.slane %v5608, 1
        %v5643 = vrot.slane %v5576, 1
        %v5644 = vsel %vm1444, %v5642, %v5643
        %v5645 = vrot.slane %v5609, 1
        %v5646 = vrot.slane %v5577, 1
        %v5647 = vsel %vm1444, %v5645, %v5646
        %v5648 = vrot.slane %v5610, 1
        %v5649 = vrot.slane %v5578, 1
        %v5650 = vsel %vm1444, %v5648, %v5649
        %v5651 = vrot.slane %v5611, 1
        %v5652 = vrot.slane %v5579, 1
        %v5653 = vsel %vm1444, %v5651, %v5652
        %v5654 = vrot.slane %v5612, 1
        %v5655 = vrot.slane %v5580, 1
        %v5656 = vsel %vm1444, %v5654, %v5655
        %v5657 = vrot.slane %v5614, 1
        %v5658 = vrot.slane %v5582, 1
        %v5659 = vsel %vm1444, %v5657, %v5658
        %v5660 = vrot.slane %v5615, 1
        %v5661 = vrot.slane %v5583, 1
        %v5662 = vsel %vm1444, %v5660, %v5661
        %v5663 = vrot.slane %v5616, 1
        %v5664 = vrot.slane %v5584, 1
        %v5665 = vsel %vm1444, %v5663, %v5664
        %v5666 = vrot.slane %v5617, 1
        %v5667 = vrot.slane %v5585, 1
        %v5668 = vsel %vm1444, %v5666, %v5667
        %v5669 = vrot.slane %v5618, 1
        %v5670 = vrot.slane %v5586, 1
        %v5671 = vsel %vm1444, %v5669, %v5670
        %v5672 = vrot.slane %v5619, 1
        %v5673 = vrot.slane %v5587, 1
        %v5674 = vsel %vm1444, %v5672, %v5673
        %v5675 = vrot.slane %v5620, 1
        %v5676 = vrot.slane %v5588, 1
        %v5677 = vsel %vm1444, %v5675, %v5676
        %5678 = vrot.lane.b32.xlu0 %v5638, 64
        %v5679 = vpop.permute.xlu0 %5678
        %5680 = vrot.lane.b32.xlu0 %v5641, 64
        %v5681 = vpop.permute.xlu0 %5680
        %5682 = vrot.lane.b32.xlu0 %v5644, 64
        %v5683 = vpop.permute.xlu0 %5682
        %5684 = vrot.lane.b32.xlu0 %v5647, 64
        %v5685 = vpop.permute.xlu0 %5684
        %5686 = vrot.lane.b32.xlu0 %v5650, 64
        %v5687 = vpop.permute.xlu0 %5686
        %5688 = vrot.lane.b32.xlu0 %v5653, 64
        %v5689 = vpop.permute.xlu0 %5688
        %5690 = vrot.lane.b32.xlu0 %v5656, 64
        %v5691 = vpop.permute.xlu0 %5690
        %5692 = vrot.lane.b32.xlu0 %v5659, 64
        %v5693 = vpop.permute.xlu0 %5692
        %5694 = vrot.lane.b32.xlu0 %v5662, 64
        %v5695 = vpop.permute.xlu0 %5694
        %5696 = vrot.lane.b32.xlu0 %v5665, 64
        %v5697 = vpop.permute.xlu0 %5696
        %5698 = vrot.lane.b32.xlu0 %v5668, 64
        %v5699 = vpop.permute.xlu0 %5698
        %5700 = vrot.lane.b32.xlu0 %v5671, 64
        %v5701 = vpop.permute.xlu0 %5700
        %5702 = vrot.lane.b32.xlu0 %v5674, 64
        %v5703 = vpop.permute.xlu0 %5702
        %5704 = vrot.lane.b32.xlu0 %v5677, 64
        %v5705 = vpop.permute.xlu0 %5704
        %v5722 = vrot.slane %v5613, 1
        %v5723 = vrot.slane %v5581, 1
        %v5724 = vsel %vm1444, %v5722, %v5723
        %v5725 = vrot.slane %v5621, 1
        %v5726 = vrot.slane %v5589, 1
        %v5727 = vsel %vm1444, %v5725, %v5726
        %5728 = vrot.lane.b32.xlu0 %v5724, 64
        %v5729 = vpop.permute.xlu0 %5728
        %5730 = vrot.lane.b32.xlu0 %v5727, 64
        %v5731 = vpop.permute.xlu0 %5730
        %v5734 = vsel %vm1724, %v5606, %v5679
        %v5735 = vsel %vm1724, %v5607, %v5681
        %v5736 = vsel %vm1724, %v5608, %v5683
        %v5737 = vsel %vm1724, %v5609, %v5685
        %v5738 = vsel %vm1724, %v5610, %v5687
        %v5739 = vsel %vm1724, %v5611, %v5689
        %v5740 = vsel %vm1724, %v5612, %v5691
        %v5741 = vsel %vm1724, %v5614, %v5693
        %v5742 = vsel %vm1724, %v5615, %v5695
        %v5743 = vsel %vm1724, %v5616, %v5697
        %v5744 = vsel %vm1724, %v5617, %v5699
        %v5745 = vsel %vm1724, %v5618, %v5701
        %v5746 = vsel %vm1724, %v5619, %v5703
        %v5747 = vsel %vm1724, %v5620, %v5705
        %v5748 = vsel %vm1724, %v5613, %v5729
        %v5749 = vsel %vm1724, %v5621, %v5731
        %v5750 = vpack.c.bf16 %v5734, %v4236
        %v5751 = vpack.c.bf16 %v5735, %v5734
        %v5752 = vpack.c.bf16 %v5736, %v5735
        %v5753 = vpack.c.bf16 %v5737, %v5736
        %v5754 = vpack.c.bf16 %v5738, %v5737
        %v5755 = vpack.c.bf16 %v5739, %v5738
        %v5756 = vpack.c.bf16 %v5740, %v5739
        %v5757 = vpack.c.bf16 %v5748, %v5740
        %v5758 = vpack.c.bf16 %v5741, %v4236
        %v5759 = vpack.c.bf16 %v5742, %v5741
        %v5760 = vpack.c.bf16 %v5743, %v5742
        %v5761 = vpack.c.bf16 %v5744, %v5743
        %v5762 = vpack.c.bf16 %v5745, %v5744
        %v5763 = vpack.c.bf16 %v5746, %v5745
        %v5764 = vpack.c.bf16 %v5747, %v5746
        %v5765 = vpack.c.bf16 %v5749, %v5747
        %v5767 = vlaneseq
        %v5768 = vshrl.u32 %v5767, 7
        %v5769 = vsub.s32 0, %v5768
        %v5770 = vrot.slane %v5333, %v5769
        %v5804 = vunpack.c.l.b16 %v5300
        %v5805 = vunpack.c.l.b16 %v5301
        %v5806 = vunpack.c.l.b16 %v5302
        %v5807 = vunpack.c.l.b16 %v5303
        %v5808 = vunpack.c.l.b16 %v5304
        %v5809 = vunpack.c.l.b16 %v5305
        %v5810 = vunpack.c.l.b16 %v5306
        %v5811 = vunpack.c.l.b16 %v5307
        %v5812 = vunpack.c.l.b16 %v5308
        %v5813 = vunpack.c.l.b16 %v5309
        %v5814 = vunpack.c.l.b16 %v5310
        %v5815 = vunpack.c.l.b16 %v5311
        %v5816 = vunpack.c.l.b16 %v5312
        %v5817 = vunpack.c.l.b16 %v5313
        %v5818 = vunpack.c.l.b16 %v5314
        %v5819 = vunpack.c.l.b16 %v5315
        %v5820 = vunpack.c.l.b16 %v5316
        %v5821 = vunpack.c.l.b16 %v5317
        %v5822 = vunpack.c.l.b16 %v5318
        %v5823 = vunpack.c.l.b16 %v5319
        %v5824 = vunpack.c.l.b16 %v5320
        %v5825 = vunpack.c.l.b16 %v5321
        %v5826 = vunpack.c.l.b16 %v5322
        %v5827 = vunpack.c.l.b16 %v5323
        %v5828 = vunpack.c.l.b16 %v5324
        %v5829 = vunpack.c.l.b16 %v5325
        %v5830 = vunpack.c.l.b16 %v5326
        %v5831 = vunpack.c.l.b16 %v5327
        %v5832 = vunpack.c.l.b16 %v5328
        %v5833 = vunpack.c.l.b16 %v5329
        %v5834 = vunpack.c.l.b16 %v5330
        %v5835 = vunpack.c.l.b16 %v5331
        %v5836 = vpack.c.b16 %v5805, %v5804
        %v5837 = vpack.c.b16 %v5807, %v5806
        %v5838 = vpack.c.b16 %v5809, %v5808
        %v5839 = vpack.c.b16 %v5811, %v5810
        %v5840 = vpack.c.b16 %v5813, %v5812
        %v5841 = vpack.c.b16 %v5815, %v5814
        %v5842 = vpack.c.b16 %v5817, %v5816
        %v5843 = vpack.c.b16 %v5819, %v5818
        %v5844 = vpack.c.b16 %v5821, %v5820
        %v5845 = vpack.c.b16 %v5823, %v5822
        %v5846 = vpack.c.b16 %v5825, %v5824
        %v5847 = vpack.c.b16 %v5827, %v5826
        %v5848 = vpack.c.b16 %v5829, %v5828
        %v5849 = vpack.c.b16 %v5831, %v5830
        %v5850 = vpack.c.b16 %v5833, %v5832
        %v5851 = vpack.c.b16 %v5835, %v5834
        %5868 = vmatprep.subr.bf16.mxu0 0
        %5869 = vmatpush1.bf16.msra.mxu0 %v5836
        %5870 = vmatprep.subr.bf16.mxu0 0
        %5871 = vmatpush1.bf16.msra.mxu0 %v5837
        %5872 = vmatprep.subr.bf16.mxu0 0
        %5873 = vmatpush1.bf16.msra.mxu0 %v5838
        %5874 = vmatprep.subr.bf16.mxu0 0
        %5875 = vmatpush1.bf16.msra.mxu0 %v5839
        %5876 = vmatprep.subr.bf16.mxu0 0
        %5877 = vmatpush1.bf16.msra.mxu0 %v5840
        %5878 = vmatprep.subr.bf16.mxu0 0
        %5879 = vmatpush1.bf16.msra.mxu0 %v5841
        %5880 = vmatprep.subr.bf16.mxu0 0
        %5881 = vmatpush1.bf16.msra.mxu0 %v5842
        %5882 = vmatprep.subr.bf16.mxu0 0
        %5883 = vmatpush1.bf16.msra.mxu0 %v5843
        %5884 = vmatprep.subr.bf16.mxu0 0
        %5885 = vmatpush1.bf16.msra.mxu0 %v5844
        %5886 = vmatprep.subr.bf16.mxu0 0
        %5887 = vmatpush1.bf16.msra.mxu0 %v5845
        %5888 = vmatprep.subr.bf16.mxu0 0
        %5889 = vmatpush1.bf16.msra.mxu0 %v5846
        %5890 = vmatprep.subr.bf16.mxu0 0
        %5891 = vmatpush1.bf16.msra.mxu0 %v5847
        %5892 = vmatprep.subr.bf16.mxu0 0
        %5893 = vmatpush1.bf16.msra.mxu0 %v5848
        %5894 = vmatprep.subr.bf16.mxu0 0
        %5895 = vmatpush1.bf16.msra.mxu0 %v5849
        %5896 = vmatprep.subr.bf16.mxu0 0
        %5897 = vmatpush1.bf16.msra.mxu0 %v5850
        %5898 = vmatprep.subr.bf16.mxu0 0
        %5899 = vmatpush1.bf16.msra.mxu0 %v5851
        %5900 = vmatprep.mubr.bf16.mxu0 %v5751
        %5901 = vmatmul.mubr.bf16.gmra.mrb[0].mxu0 %v5750
        %v5902 = vpop.f32.mrb[0].mxu0
        %v5903 = vadd.f32 %v5770, %v5902
        %v5904 = vpop.f32.mrb[0].mxu0
        %v5905 = vpop.f32.mrb[0].mxu0
        %v5906 = vadd.f32 %v5770, %v5905
        %v5907 = vpop.f32.mrb[0].mxu0
        %5908 = vmatprep.mubr.bf16.mxu0 %v5753
        %5909 = vmatmul.mubr.bf16.gmra.mrb[0].mxu0 %v5752
        %v5910 = vpop.f32.mrb[0].mxu0
        %v5911 = vadd.f32 %v5770, %v5910
        %v5912 = vpop.f32.mrb[0].mxu0
        %v5913 = vpop.f32.mrb[0].mxu0
        %v5914 = vadd.f32 %v5770, %v5913
        %v5915 = vpop.f32.mrb[0].mxu0
        %5916 = vmatprep.mubr.bf16.mxu0 %v5755
        %5917 = vmatmul.mubr.bf16.gmra.mrb[0].mxu0 %v5754
        %v5918 = vpop.f32.mrb[0].mxu0
        %v5919 = vadd.f32 %v5770, %v5918
        %v5920 = vpop.f32.mrb[0].mxu0
        %v5921 = vpop.f32.mrb[0].mxu0
        %v5922 = vadd.f32 %v5770, %v5921
        %v5923 = vpop.f32.mrb[0].mxu0
        %5924 = vmatprep.mubr.bf16.mxu0 %v5757
        %5925 = vmatmul.mubr.bf16.gmra.mrb[0].mxu0 %v5756
        %v5926 = vpop.f32.mrb[0].mxu0
        %v5927 = vadd.f32 %v5770, %v5926
        %v5928 = vpop.f32.mrb[0].mxu0
        %v5929 = vpop.f32.mrb[0].mxu0
        %v5930 = vadd.f32 %v5770, %v5929
        %v5931 = vpop.f32.mrb[0].mxu0
        %5932 = vmatprep.mubr.bf16.mxu0 %v5759
        %5933 = vmatmul.mubr.bf16.gmra.mrb[0].mxu0 %v5758
        %v5934 = vpop.f32.mrb[0].mxu0
        %v5935 = vadd.f32 %v5770, %v5934
        %v5936 = vpop.f32.mrb[0].mxu0
        %v5937 = vpop.f32.mrb[0].mxu0
        %v5938 = vadd.f32 %v5770, %v5937
        %v5939 = vpop.f32.mrb[0].mxu0
        %5940 = vmatprep.mubr.bf16.mxu0 %v5761
        %5941 = vmatmul.mubr.bf16.gmra.mrb[0].mxu0 %v5760
        %v5942 = vpop.f32.mrb[0].mxu0
        %v5943 = vadd.f32 %v5770, %v5942
        %v5944 = vpop.f32.mrb[0].mxu0
        %v5945 = vpop.f32.mrb[0].mxu0
        %v5946 = vadd.f32 %v5770, %v5945
        %v5947 = vpop.f32.mrb[0].mxu0
        %5948 = vmatprep.mubr.bf16.mxu0 %v5763
        %5949 = vmatmul.mubr.bf16.gmra.mrb[0].mxu0 %v5762
        %v5950 = vpop.f32.mrb[0].mxu0
        %v5951 = vadd.f32 %v5770, %v5950
        %v5952 = vpop.f32.mrb[0].mxu0
        %v5953 = vpop.f32.mrb[0].mxu0
        %v5954 = vadd.f32 %v5770, %v5953
        %v5955 = vpop.f32.mrb[0].mxu0
        %5956 = vmatprep.mubr.bf16.mxu0 %v5765
        %5957 = vmatmul.mubr.bf16.gmra.mrb[0].mxu0 %v5764
        %v5958 = vpop.f32.mrb[0].mxu0
        %v5959 = vadd.f32 %v5770, %v5958
        %v5960 = vpop.f32.mrb[0].mxu0
        %v5961 = vpop.f32.mrb[0].mxu0
        %v5962 = vadd.f32 %v5770, %v5961
        %v5963 = vpop.f32.mrb[0].mxu0
        %5964 = vdwg.mxu0
        %v5965 = vmul.f32 %v5903, 0.5
        %v5966 = vmul.f32 %v5906, 0.5
        %v5967 = vmul.f32 %v5911, 0.5
        %v5968 = vmul.f32 %v5914, 0.5
        %v5969 = vmul.f32 %v5919, 0.5
        %v5970 = vmul.f32 %v5922, 0.5
        %v5971 = vmul.f32 %v5927, 0.5
        %v5972 = vmul.f32 %v5930, 0.5
        %v5973 = vmul.f32 %v5935, 0.5
        %v5974 = vmul.f32 %v5938, 0.5
        %v5975 = vmul.f32 %v5943, 0.5
        %v5976 = vmul.f32 %v5946, 0.5
        %v5977 = vmul.f32 %v5951, 0.5
        %v5978 = vmul.f32 %v5954, 0.5
        %v5979 = vmul.f32 %v5959, 0.5
        %v5980 = vmul.f32 %v5962, 0.5
        %v5981 = vtanh.pop %v5965
        %v5982 = vtanh.pop %v5966
        %v5983 = vtanh.pop %v5967
        %v5984 = vtanh.pop %v5968
        %v5985 = vtanh.pop %v5969
        %v5986 = vtanh.pop %v5970
        %v5987 = vtanh.pop %v5971
        %v5988 = vtanh.pop %v5972
        %v5989 = vtanh.pop %v5973
        %v5990 = vtanh.pop %v5974
        %v5991 = vtanh.pop %v5975
        %v5992 = vtanh.pop %v5976
        %v5993 = vtanh.pop %v5977
        %v5994 = vtanh.pop %v5978
        %v5995 = vtanh.pop %v5979
        %v5996 = vtanh.pop %v5980
        %v5997 = vadd.f32 %v5981, 1.0
        %v5998 = vadd.f32 %v5982, 1.0
        %v5999 = vadd.f32 %v5983, 1.0
        %v6000 = vadd.f32 %v5984, 1.0
        %v6001 = vadd.f32 %v5985, 1.0
        %v6002 = vadd.f32 %v5986, 1.0
        %v6003 = vadd.f32 %v5987, 1.0
        %v6004 = vadd.f32 %v5988, 1.0
        %v6005 = vadd.f32 %v5989, 1.0
        %v6006 = vadd.f32 %v5990, 1.0
        %v6007 = vadd.f32 %v5991, 1.0
        %v6008 = vadd.f32 %v5992, 1.0
        %v6009 = vadd.f32 %v5993, 1.0
        %v6010 = vadd.f32 %v5994, 1.0
        %v6011 = vadd.f32 %v5995, 1.0
        %v6012 = vadd.f32 %v5996, 1.0
        %v6013 = vmul.f32 %v5997, 0.5
        %v6014 = vmul.f32 %v5998, 0.5
        %v6015 = vmul.f32 %v5999, 0.5
        %v6016 = vmul.f32 %v6000, 0.5
        %v6017 = vmul.f32 %v6001, 0.5
        %v6018 = vmul.f32 %v6002, 0.5
        %v6019 = vmul.f32 %v6003, 0.5
        %v6020 = vmul.f32 %v6004, 0.5
        %v6021 = vmul.f32 %v6005, 0.5
        %v6022 = vmul.f32 %v6006, 0.5
        %v6023 = vmul.f32 %v6007, 0.5
        %v6024 = vmul.f32 %v6008, 0.5
        %v6025 = vmul.f32 %v6009, 0.5
        %v6026 = vmul.f32 %v6010, 0.5
        %v6027 = vmul.f32 %v6011, 0.5
        %v6028 = vmul.f32 %v6012, 0.5
        %6045 = vrot.lane.b32.xlu0 %v6013, 96
        %v6046 = vpop.permute.xlu0 %6045
        %6047 = vrot.lane.b32.xlu0 %v6014, 96
        %v6048 = vpop.permute.xlu0 %6047
        %6049 = vrot.lane.b32.xlu0 %v6015, 96
        %v6050 = vpop.permute.xlu0 %6049
        %6051 = vrot.lane.b32.xlu0 %v6016, 96
        %v6052 = vpop.permute.xlu0 %6051
        %6053 = vrot.lane.b32.xlu0 %v6017, 96
        %v6054 = vpop.permute.xlu0 %6053
        %6055 = vrot.lane.b32.xlu0 %v6018, 96
        %v6056 = vpop.permute.xlu0 %6055
        %6057 = vrot.lane.b32.xlu0 %v6019, 96
        %v6058 = vpop.permute.xlu0 %6057
        %6059 = vrot.lane.b32.xlu0 %v6020, 96
        %v6060 = vpop.permute.xlu0 %6059
        %6061 = vrot.lane.b32.xlu0 %v6021, 96
        %v6062 = vpop.permute.xlu0 %6061
        %6063 = vrot.lane.b32.xlu0 %v6022, 96
        %v6064 = vpop.permute.xlu0 %6063
        %6065 = vrot.lane.b32.xlu0 %v6023, 96
        %v6066 = vpop.permute.xlu0 %6065
        %6067 = vrot.lane.b32.xlu0 %v6024, 96
        %v6068 = vpop.permute.xlu0 %6067
        %6069 = vrot.lane.b32.xlu0 %v6025, 96
        %v6070 = vpop.permute.xlu0 %6069
        %6071 = vrot.lane.b32.xlu0 %v6026, 96
        %v6072 = vpop.permute.xlu0 %6071
        %6073 = vrot.lane.b32.xlu0 %v6027, 96
        %v6074 = vpop.permute.xlu0 %6073
        %6075 = vrot.lane.b32.xlu0 %v6028, 96
        %v6076 = vpop.permute.xlu0 %6075
        %v6093 = vmul.f32 %v5903, %v6046
        %v6094 = vmul.f32 %v5906, %v6048
        %v6095 = vmul.f32 %v5911, %v6050
        %v6096 = vmul.f32 %v5914, %v6052
        %v6097 = vmul.f32 %v5919, %v6054
        %v6098 = vmul.f32 %v5922, %v6056
        %v6099 = vmul.f32 %v5927, %v6058
        %v6100 = vmul.f32 %v5930, %v6060
        %v6101 = vmul.f32 %v5935, %v6062
        %v6102 = vmul.f32 %v5938, %v6064
        %v6103 = vmul.f32 %v5943, %v6066
        %v6104 = vmul.f32 %v5946, %v6068
        %v6105 = vmul.f32 %v5951, %v6070
        %v6106 = vmul.f32 %v5954, %v6072
        %v6107 = vmul.f32 %v5959, %v6074
        %v6108 = vmul.f32 %v5962, %v6076
        %v6109 = vadd.f32 %v1034, %v6093
        %v6110 = vadd.f32 %v1035, %v6094
        %v6111 = vadd.f32 %v1036, %v6095
        %v6112 = vadd.f32 %v1037, %v6096
        %v6113 = vadd.f32 %v1038, %v6097
        %v6114 = vadd.f32 %v1039, %v6098
        %v6115 = vadd.f32 %v1040, %v6099
        %v6116 = vadd.f32 %v1041, %v6100
        %v6117 = vadd.f32 %v1042, %v6101
        %v6118 = vadd.f32 %v1043, %v6102
        %v6119 = vadd.f32 %v1044, %v6103
        %v6120 = vadd.f32 %v1045, %v6104
        %v6121 = vadd.f32 %v1046, %v6105
        %v6122 = vadd.f32 %v1047, %v6106
        %v6123 = vadd.f32 %v1048, %v6107
        %v6124 = vadd.f32 %v1049, %v6108
        %6125 = vst.msk [vmem:[%s932] sm:$0xff] %vm1311, %v3778
        %6126 = vst.msk [vmem:[%s932 + $0x8] sm:$0xff] %vm1311, %v3779
        %6127 = vst.msk [vmem:[%s932 + $0x10] sm:$0xff] %vm1311, %v3780
        %6128 = vst.msk [vmem:[%s932 + $0x18] sm:$0xff] %vm1311, %v3781
        %6129 = vst.msk [vmem:[%s932 + $0x20] sm:$0xff] %vm1311, %v3782
        %6130 = vst.msk [vmem:[%s932 + $0x28] sm:$0xff] %vm1311, %v3783
        %6131 = vst.msk [vmem:[%s932 + $0x30] sm:$0xff] %vm1311, %v3784
        %6132 = vst.msk [vmem:[%s932 + $0x38] sm:$0xff] %vm1311, %v3785
        %6133 = vst.msk [vmem:[%s932 + $0x40] sm:$0xff] %vm1311, %v3786
        %6134 = vst.msk [vmem:[%s932 + $0x48] sm:$0xff] %vm1311, %v3787
        %6135 = vst.msk [vmem:[%s932 + $0x50] sm:$0xff] %vm1311, %v3788
        %6136 = vst.msk [vmem:[%s932 + $0x58] sm:$0xff] %vm1311, %v3789
        %6137 = vst.msk [vmem:[%s932 + $0x60] sm:$0xff] %vm1311, %v3790
        %6138 = vst.msk [vmem:[%s932 + $0x68] sm:$0xff] %vm1311, %v3791
        %6139 = vst.msk [vmem:[%s932 + $0x70] sm:$0xff] %vm1311, %v3792
        %6140 = vst.msk [vmem:[%s932 + $0x78] sm:$0xff] %vm1311, %v3793
        %6141 = vst.msk [vmem:[%s939] sm:$0xff] %vm1311, %v6109
        %6142 = vst.msk [vmem:[%s939 + $0x8] sm:$0xff] %vm1311, %v6110
        %6143 = vst.msk [vmem:[%s939 + $0x10] sm:$0xff] %vm1311, %v6111
        %6144 = vst.msk [vmem:[%s939 + $0x18] sm:$0xff] %vm1311, %v6112
        %6145 = vst.msk [vmem:[%s939 + $0x20] sm:$0xff] %vm1311, %v6113
        %6146 = vst.msk [vmem:[%s939 + $0x28] sm:$0xff] %vm1311, %v6114
        %6147 = vst.msk [vmem:[%s939 + $0x30] sm:$0xff] %vm1311, %v6115
        %6148 = vst.msk [vmem:[%s939 + $0x38] sm:$0xff] %vm1311, %v6116
        %6149 = vst.msk [vmem:[%s939 + $0x40] sm:$0xff] %vm1311, %v6117
        %6150 = vst.msk [vmem:[%s939 + $0x48] sm:$0xff] %vm1311, %v6118
        %6151 = vst.msk [vmem:[%s939 + $0x50] sm:$0xff] %vm1311, %v6119
        %6152 = vst.msk [vmem:[%s939 + $0x58] sm:$0xff] %vm1311, %v6120
        %6153 = vst.msk [vmem:[%s939 + $0x60] sm:$0xff] %vm1311, %v6121
        %6154 = vst.msk [vmem:[%s939 + $0x68] sm:$0xff] %vm1311, %v6122
        %6155 = vst.msk [vmem:[%s939 + $0x70] sm:$0xff] %vm1311, %v6123
        %6156 = vst.msk [vmem:[%s939 + $0x78] sm:$0xff] %vm1311, %v6124
        %s6157 = sand.u32 %s456, 1
        %s6158 = scalar_lea.sflag [#allocation4], %s6157
        %s6159 = sand.u32 %s456, 1
        %s6160 = smul.addr %s6159, 128
        %s6161 = scalar_lea.vmem [#allocation29], %s6160
        %s6162 = sand.u32 %s482, 1
        %s6163 = scalar_lea.sflag [#allocation31], %s6162
        %s6164 = sand.u32 %s482, 1
        %s6165 = smul.addr %s6164, 128
        %s6166 = scalar_lea.vmem [#allocation30], %s6165
        // Predicated region
        $region161: #{tpu_custom_call.1} parent=87 // pred_check
          %p6167 = pneg %p466
        $region162: #{tpu_custom_call.1} parent=87 // pred_check_branch
          %6169 = sbr.rel (%p6167) target = $region164
        $region163: #{tpu_custom_call.1} parent=87 // pred_region
          %s6170 = smul.u32 2, %s55
          %s6172 = ssub.s32 2048, 2048
          %6173 = vsyncadd %s6158, %s6172
          %s6174 = smul.addr %s6170, 8
          %s6175 = smul.addr %s6174, 128
          %s6176 = scalar_lea.hbm %s17, %s6175
          %s6177 = sshll.u32 %s6161, 4
          %s6178 = int_to_ptr.vmem [resolvable:$true] %s6177
          %6183 = dma.vmem_to_hbm [thread:$0]  %s6178, 2048, %s6176, %s6158, 128, 128, 8
        $region164: #{tpu_custom_call.1} parent=87 // pred_fallthru
          _
        // Predicated region
        $region165: #{tpu_custom_call.1} parent=87 // pred_check
          %p6184 = pneg %p492
        $region166: #{tpu_custom_call.1} parent=87 // pred_check_branch
          %6186 = sbr.rel (%p6184) target = $region168
        $region167: #{tpu_custom_call.1} parent=87 // pred_region
          %s6187 = smul.u32 2, %s55
          %s6189 = ssub.s32 2048, 2048
          %6190 = vsyncadd %s6163, %s6189
          %s6191 = smul.addr %s6187, 8
          %s6192 = smul.addr %s6191, 128
          %s6193 = scalar_lea.hbm %s18, %s6192
          %s6194 = sshll.u32 %s6166, 4
          %s6195 = int_to_ptr.vmem [resolvable:$true] %s6194
          %6200 = dma.vmem_to_hbm [thread:$0]  %s6195, 2048, %s6193, %s6163, 128, 128, 8
        $region168: #{tpu_custom_call.1} parent=87 // pred_fallthru
          _
      $region88: #{tpu_custom_call.1} parent=5 // pred_fallthru
        _
      %p6201 = scmp.le.s32.totalorder 2, %s46
      // Predicated region
      $region169: #{tpu_custom_call.1} parent=5 // pred_check
        %p6202 = pneg %p6201
      $region170: #{tpu_custom_call.1} parent=5 // pred_check_branch
        %6204 = sbr.rel (%p6202) target = $region172
      $region171: #{tpu_custom_call.1} parent=5 // pred_region
        %s6205 = ssub.s32 %s46, 2
        // Predicated region
        $region173: #{tpu_custom_call.1} parent=171 // pred_check
          %p6206 = pneg %p472
        $region174: #{tpu_custom_call.1} parent=171 // pred_check_branch
          %6208 = sbr.rel (%p6206) target = $region176
        $region175: #{tpu_custom_call.1} parent=171 // pred_region
          %s6209 = sand.u32 %s457, 1
          %s6210 = scalar_lea.sflag [#allocation4], %s6209
          %s6211 = sand.u32 %s457, 1
          %s6212 = smul.addr %s6211, 128
          %s6213 = scalar_lea.vmem [#allocation29], %s6212
          %6214 = dma.done %s6210, 2048
        $region176: #{tpu_custom_call.1} parent=171 // pred_fallthru
          _
        // Predicated region
        $region177: #{tpu_custom_call.1} parent=171 // pred_check
          %p6215 = pneg %p498
        $region178: #{tpu_custom_call.1} parent=171 // pred_check_branch
          %6217 = sbr.rel (%p6215) target = $region180
        $region179: #{tpu_custom_call.1} parent=171 // pred_region
          %s6218 = sand.u32 %s483, 1
          %s6219 = scalar_lea.sflag [#allocation31], %s6218
          %s6220 = sand.u32 %s483, 1
          %s6221 = smul.addr %s6220, 128
          %s6222 = scalar_lea.vmem [#allocation30], %s6221
          %6223 = dma.done %s6219, 2048
        $region180: #{tpu_custom_call.1} parent=171 // pred_fallthru
          _
      $region172: #{tpu_custom_call.1} parent=5 // pred_fallthru
        _
    $region6: #{tpu_custom_call.1} parent=1 // loop_footer
      %s50 = sadd.s32 1, %s46
    $region7: #{tpu_custom_call.1} parent=1 // loop_footer_branch
      %45 = sbr.rel target = $region3
    $region8: #{tpu_custom_call.1} parent=1 // loop_exit
      _
    %6224 = vsyncpa [#allocation3], 1
    %s6225 = scalar_lea.sflag [#allocation3], 1
    %6226 = vsyncpa %s6225, 1
    %6227 = vsyncpa [#allocation6], 1
    %s6228 = scalar_lea.sflag [#allocation6], 1
    %6229 = vsyncpa %s6228, 1
    %6230 = vsyncpa [#allocation9], 1
    %s6231 = scalar_lea.sflag [#allocation9], 1
    %6232 = vsyncpa %s6231, 1
    %6233 = vsyncpa [#allocation12], 1
    %6234 = vsyncpa [#allocation15], 1
    %6235 = vsyncpa [#allocation18], 1
    %6236 = vsyncpa [#allocation21], 1
    %6237 = vsyncpa [#allocation24], 1
    %6238 = vsyncpa [#allocation27], 1
    %6239 = vsyncpa [#allocation4], 1
    %s6240 = scalar_lea.sflag [#allocation4], 1
    %6241 = vsyncpa %s6240, 1
    %6242 = vsyncpa [#allocation31], 1
    %s6243 = scalar_lea.sflag [#allocation31], 1
    %6244 = vsyncpa %s6243, 1

</llo_original>
